<compile_context>
chip_gen: v5e
topology: v5e:2x2
jax: 0.10.0
libtpu: 0.0.40
codegen_flags: <defaults>
</compile_context>

<pallas_src>
import functools

import numpy as np
import jax
import jax.numpy as jnp
from jax import lax
from jax.experimental import pallas as pl
from jax.experimental.pallas import tpu as pltpu

NEG_SLOPE = 0.01     # torch LeakyReLU default
BN_EPS = 1e-5


# ----------------------------- in-kernel helpers -----------------------------

def _leaky(y):
    return jnp.where(y > 0, y, NEG_SLOPE * y)


def _shift(x, off):
    """result[..., n] = x[..., (n + off) % N]  (static offset).

    Wrap-around only ever lands on grid positions that are masked to zero or
    discarded by the wrapper, so modular semantics are safe by construction."""
    n = x.shape[-1]
    off = int(off) % n
    if off == 0:
        return x
    return jnp.concatenate([x[..., off:], x[..., :off]], axis=-1)


def _tree_max(vals):
    """Pairwise tree reduction (short VPU dependency chain)."""
    vals = list(vals)
    while len(vals) > 1:
        nxt = [jnp.maximum(vals[i], vals[i + 1]) for i in range(0, len(vals) - 1, 2)]
        if len(vals) % 2:
            nxt.append(vals[-1])
        vals = nxt
    return vals[0]


# --------------------------------- kernels ---------------------------------

def _branch00_kernel(ph_ref, w1_ref, s1_ref, b1_ref, mask_ref, w2_ref, o_ref, *, gw):
    """branch0_0 fused: conv3x3/s2 (+BN+LReLU) then conv3x3/s1; one image per
    grid step.  Windowing = lane shifts of the per-image flattened (gh, gw)
    grid; the 4-channel intermediate stays in VMEM."""
    nf = o_ref.shape[-1]
    c1 = w1_ref.shape[2]
    phs = [[ph_ref[0, 0], ph_ref[0, 1]],
           [ph_ref[1, 0], ph_ref[1, 1]]]
    acc = jnp.zeros((c1, nf), jnp.float32)
    for ky in range(3):
        for kx in range(3):
            slab = phs[ky % 2][kx % 2]                            # (Cin, nf) bf16
            off = (ky // 2 - 1) * gw + (kx // 2 - 1)
            acc = acc + jnp.dot(w1_ref[ky, kx], _shift(slab, off),
                                preferred_element_type=jnp.float32)
    y = acc * s1_ref[...] + b1_ref[...]
    y = _leaky(y) * mask_ref[...]          # zero conv2's padding ring + lane pad
    acc2 = jnp.zeros((o_ref.shape[0], nf), jnp.float32)
    for ky in range(3):
        for kx in range(3):
            acc2 = acc2 + jnp.dot(w2_ref[ky, kx], _shift(y, ky * gw + kx),
                                  preferred_element_type=jnp.float32)
    o_ref[...] = acc2


def _dual_pool_kernel(p3_ref, p5_ref, o3_ref, o5_ref, *, pw3, pw5):
    """MaxPool 3x3/s2/p1 and 5x5/s2/p2 + branch0_2's leading LeakyReLU.
    Inputs are the 2x2 stride-phase planes (-inf padded); taps are lane shifts."""
    ph = [[p3_ref[0, 0], p3_ref[0, 1]], [p3_ref[1, 0], p3_ref[1, 1]]]
    taps = [_shift(ph[ky % 2][kx % 2], (ky // 2) * pw3 + kx // 2)
            for ky in range(3) for kx in range(3)]
    o3_ref[...] = _leaky(_tree_max(taps))
    ph = [[p5_ref[0, 0], p5_ref[0, 1]], [p5_ref[1, 0], p5_ref[1, 1]]]
    taps = [_shift(ph[ky % 2][kx % 2], (ky // 2) * pw5 + kx // 2)
            for ky in range(5) for kx in range(5)]
    o5_ref[...] = _leaky(_tree_max(taps))


def _resize_kernel(x_ref, mw_ref, mh_ref, o_ref):
    """Separable bilinear downsample (align_corners=False) as two batched matmuls."""
    t = jnp.einsum('nhw,nwk->nhk', x_ref[...], mw_ref[...],
                   preferred_element_type=jnp.float32)
    o_ref[...] = jnp.einsum('noh,nhk->nok', mh_ref[...].astype(jnp.float32), t,
                            preferred_element_type=jnp.float32)


def _head_kernel(w_ref, p_ref, s_ref, t_ref, o_ref):
    """Both branch-final convs as ONE block-diagonal matmul + folded final BN + LReLU."""
    y = jnp.dot(w_ref[...], p_ref[...], preferred_element_type=jnp.float32)
    o_ref[...] = _leaky(y * s_ref[...] + t_ref[...])


# ----------------------------- host-side helpers -----------------------------

def fold_bn(gamma, beta, mean, var):
    s = gamma / jnp.sqrt(var + BN_EPS)
    return s, beta - mean * s


def bilinear_matrix(n_in, n_out):
    """Interpolation matrix matching torch bilinear (align_corners=False)."""
    scale = n_in / n_out
    m = np.zeros((n_out, n_in), dtype=np.float32)
    for i in range(n_out):
        src = max((i + 0.5) * scale - 0.5, 0.0)
        i0 = min(int(np.floor(src)), n_in - 1)
        i1 = min(i0 + 1, n_in - 1)
        lam = src - i0
        m[i, i0] += 1.0 - lam
        m[i, i1] += lam
    return m


def im2col_nchw(x, k, s, p):
    """Patch matrix (C*k*k, B*Ho*Wo).  Only used for branch1's 7x7 conv on the
    tiny (H/6, W/6) downsampled image (~25 KB), where k^2 duplication is noise."""
    B, C, H, W = x.shape
    xp = jnp.pad(x, ((0, 0), (0, 0), (p, p), (p, p)))
    Ho = (H + 2 * p - k) // s + 1
    Wo = (W + 2 * p - k) // s + 1
    cols = [xp[:, :, ky:ky + s * (Ho - 1) + 1:s, kx:kx + s * (Wo - 1) + 1:s]
            for ky in range(k) for kx in range(k)]
    pat = jnp.stack(cols, axis=2)                    # (B, C, k*k, Ho, Wo)
    pat = pat.transpose(1, 2, 0, 3, 4)               # (C, k*k, B, Ho, Wo)
    return pat.reshape(C * k * k, B * Ho * Wo), Ho, Wo


# ------------------------------ module forward ------------------------------

def multi_branch_stem_sa12x(x, params):
    """MultiBranchStemSA12X forward (inference-mode BN).  x: NCHW float32."""
    x = x.astype(jnp.float32)
    B, Cin, H, W = x.shape
    assert H % 12 == 0 and W % 12 == 0
    c1 = params['b00_conv1'].shape[0]          # 4
    bc = params['b00_conv2'].shape[0]          # branch_channels = out_channels // 4
    ch = 2 * bc
    cout = 4 * bc

    H1, W1 = H // 2, W // 2                    # branch0_0 output spatial
    gh, gw = H1 + 2, W1 + 2                    # conv2's zero-padded grid
    nfi = gh * gw                              # per-image flat grid length
    nfp = -(-nfi // 128) * 128                 # lane-padded per-image length

    # ---- kernel A: branch0_0 fused, grid over the batch ("parallel") ----
    # 2x2 stride-phase decomposition of the padded input, embedded on conv2's
    # grid and flattened per image: a pure rearrangement, no k^2 duplication.
    xpad = jnp.pad(x, ((0, 0), (0, 0), (1, 1), (1, 1)))
    rows = []
    for ry in range(2):
        cols = []
        for rx in range(2):
            p = xpad[:, :, ry::2, rx::2]                          # (B, Cin, H1+1, W1+1)
            p = jnp.pad(p, ((0, 0), (0, 0), (0, 1), (0, 1)))      # embed in (gh, gw)
            p = p.transpose(1, 0, 2, 3).reshape(Cin, B, nfi)
            p = jnp.pad(p, ((0, 0), (0, 0), (0, nfp - nfi)))
            cols.append(p.reshape(Cin, B * nfp))
        rows.append(jnp.stack(cols, 0))
    ph = jnp.stack(rows, 0).astype(jnp.bfloat16)                  # (2, 2, Cin, B*nfp)

    msk = np.zeros((gh, gw), np.float32)
    msk[1:1 + H1, 1:1 + W1] = 1.0
    msk = np.concatenate([msk.reshape(-1), np.zeros(nfp - nfi, np.float32)])
    msk = jnp.asarray(msk[None, :])                               # (1, nfp)

    w1 = params['b00_conv1'].transpose(2, 3, 0, 1).astype(jnp.bfloat16)   # (3,3,c1,Cin)
    w2 = params['b00_conv2'].transpose(2, 3, 0, 1).astype(jnp.bfloat16)   # (3,3,bc,c1)
    s1, b1 = fold_bn(*params['b00_bn'])

    o2 = pl.pallas_call(
        functools.partial(_branch00_kernel, gw=gw),
        out_shape=jax.ShapeDtypeStruct((bc, B * nfp), jnp.float32),
        grid=(B,),
        in_specs=[
            pl.BlockSpec((2, 2, Cin, nfp), lambda b: (0, 0, 0, b)),
            pl.BlockSpec((3, 3, c1, Cin), lambda b: (0, 0, 0, 0)),
            pl.BlockSpec((c1, 1), lambda b: (0, 0)),
            pl.BlockSpec((c1, 1), lambda b: (0, 0)),
            pl.BlockSpec((1, nfp), lambda b: (0, 0)),
            pl.BlockSpec((3, 3, bc, c1), lambda b: (0, 0, 0, 0)),
        ],
        out_specs=pl.BlockSpec((bc, nfp), lambda b: (0, b)),
        compiler_params=pltpu.CompilerParams(dimension_semantics=("parallel",)),
    )(ph, w1, s1.reshape(c1, 1), b1.reshape(c1, 1), msk, w2)

    x0 = (o2.reshape(bc, B, nfp)[:, :, :nfi]
             .reshape(bc, B, gh, gw)[:, :, :H1, :W1]
             .transpose(1, 0, 2, 3))                              # (B, bc, H1, W1)

    # ---- kernel B: both max-pools + branch0_2's leading LeakyReLU ----
    H2, W2 = H1 // 2, W1 // 2

    def _pool_phases(xp):
        phh, pww = xp.shape[2] // 2, xp.shape[3] // 2
        st = jnp.stack([
            jnp.stack([xp[:, :, ry::2, rx::2].reshape(B * bc, phh * pww)
                       for rx in range(2)], 0) for ry in range(2)], 0)
        return st, phh, pww

    pp3, p3h, p3w = _pool_phases(jnp.pad(x0, ((0, 0), (0, 0), (1, 1), (1, 1)),
                                         constant_values=-jnp.inf))
    pp5, p5h, p5w = _pool_phases(jnp.pad(x0, ((0, 0), (0, 0), (2, 2), (2, 2)),
                                         constant_values=-jnp.inf))

    o3, o5 = pl.pallas_call(
        functools.partial(_dual_pool_kernel, pw3=p3w, pw5=p5w),
        out_shape=(jax.ShapeDtypeStruct((B * bc, p3h * p3w), jnp.float32),
                   jax.ShapeDtypeStruct((B * bc, p5h * p5w), jnp.float32)),
        grid=(B,),
        in_specs=[
            pl.BlockSpec((2, 2, bc, p3h * p3w), lambda b: (0, 0, b, 0)),
            pl.BlockSpec((2, 2, bc, p5h * p5w), lambda b: (0, 0, b, 0)),
        ],
        out_specs=(pl.BlockSpec((bc, p3h * p3w), lambda b: (b, 0)),
                   pl.BlockSpec((bc, p5h * p5w), lambda b: (b, 0))),
        compiler_params=pltpu.CompilerParams(dimension_semantics=("parallel",)),
    )(pp3, pp5)

    y3 = o3.reshape(B, bc, p3h, p3w)[:, :, :H2, :W2]
    y5 = o5.reshape(B, bc, p5h, p5w)[:, :, :H2, :W2]
    ycat = jnp.concatenate([y3, y5], axis=1)                      # (B, 2bc, H/4, W/4)

    # ---- kernel C: bilinear downsample (separable two-pass resize) ----
    Ho, Wo = H // 6, W // 6
    n = B * Cin
    mw = jnp.asarray(bilinear_matrix(W, Wo).T)                    # (W, Wo)
    mh = jnp.asarray(bilinear_matrix(H, Ho))                      # (Ho, H)
    ds = pl.pallas_call(
        _resize_kernel,
        out_shape=jax.ShapeDtypeStruct((n, Ho, Wo), jnp.float32),
    )(x.reshape(n, H, W).astype(jnp.bfloat16),
      jnp.broadcast_to(mw.astype(jnp.bfloat16), (n, W, Wo)),
      jnp.broadcast_to(mh.astype(jnp.bfloat16), (n, Ho, H)))
    ds = ds.reshape(B, Cin, Ho, Wo)

    # ---- kernel D: both branch-final convs + final BN + LReLU, one matmul ----
    Hf, Wf = H2 // 3, W2 // 3
    # branch0_2 is 3x3/s3/p0 -> its "im2col" is duplication-free space-to-depth.
    p02 = (ycat.reshape(B, ch, Hf, 3, Wf, 3)
               .transpose(1, 3, 5, 0, 2, 4)
               .reshape(ch * 9, B * Hf * Wf))
    p1c, hf2, wf2 = im2col_nchw(ds, 7, 2, 3)                      # (Cin*49, B*Hf*Wf)
    assert (hf2, wf2) == (Hf, Wf)

    w02 = params['b02_conv'].reshape(ch, ch * 9)
    w1c = params['b1_conv'].reshape(ch, Cin * 49)
    wbd = jnp.concatenate([
        jnp.concatenate([w02, jnp.zeros((ch, Cin * 49), w02.dtype)], axis=1),
        jnp.concatenate([jnp.zeros((ch, ch * 9), w1c.dtype), w1c], axis=1)],
        axis=0).astype(jnp.bfloat16)                              # (cout, ch*9+Cin*49)
    pcat = jnp.concatenate([p02, p1c], axis=0).astype(jnp.bfloat16)
    sn, tn = fold_bn(*params['norm_bn'])

    out = pl.pallas_call(
        _head_kernel,
        out_shape=jax.ShapeDtypeStruct((cout, B * Hf * Wf), jnp.float32),
    )(wbd, pcat, sn.reshape(cout, 1), tn.reshape(cout, 1))
    return out.reshape(cout, B, Hf, Wf).transpose(1, 0, 2, 3)     # (B, Cout, H/12, W/12)


# ----------------------------- params / reference -----------------------------

def init_params(key, cin, cout):
    bc = cout // 4
    ks = jax.random.split(key, 6)

    def conv(k, co, ci, kh, kw):
        return jax.random.normal(k, (co, ci, kh, kw), jnp.float32) * 0.1

    def bn(k, c):
        k1, k2, k3, k4 = jax.random.split(k, 4)
        return (jax.random.uniform(k1, (c,), jnp.float32, 0.5, 1.5),   # gamma
                jax.random.normal(k2, (c,), jnp.float32) * 0.1,        # beta
                jax.random.normal(k3, (c,), jnp.float32) * 0.1,        # running_mean
                jax.random.uniform(k4, (c,), jnp.float32, 0.5, 1.5))   # running_var

    return dict(
        b00_conv1=conv(ks[0], 4, cin, 3, 3),
        b00_bn=bn(ks[1], 4),
        b00_conv2=conv(ks[2], bc, 4, 3, 3),
        b02_conv=conv(ks[3], 2 * bc, 2 * bc, 3, 3),
        b1_conv=conv(ks[4], 2 * bc, cin, 7, 7),
        norm_bn=bn(ks[5], cout),
    )


def _ref_conv(x, w, stride, padding):  # NCHW reference conv
    return lax.conv_general_dilated(
        x, w, (stride, stride), [(padding, padding)] * 2,
        dimension_numbers=('NCHW', 'OIHW', 'NCHW'),
        precision=lax.Precision.HIGHEST)


def _ref_bn_act(x, bnp, act=True):
    s, b = fold_bn(*bnp)
    y = x * s[None, :, None, None] + b[None, :, None, None]
    return jnp.where(y > 0, y, NEG_SLOPE * y) if act else y


def _ref_maxpool(x, k, s, p):
    return lax.reduce_window(x, -jnp.inf, lax.max, (1, 1, k, k), (1, 1, s, s),
                             ((0, 0), (0, 0), (p, p), (p, p)))


def ref_forward(x, params):
    B, C, H, W = x.shape
    mh = jnp.asarray(bilinear_matrix(H, H // 6))
    mw = jnp.asarray(bilinear_matrix(W, W // 6))
    ds = jnp.einsum('ih,jw,bchw->bcij', mh, mw, x)
    y = _ref_bn_act(_ref_conv(x, params['b00_conv1'], 2, 1), params['b00_bn'])
    x0 = _ref_conv(y, params['b00_conv2'], 1, 1)
    y = jnp.concatenate([_ref_maxpool(x0, 3, 2, 1), _ref_maxpool(x0, 5, 2, 2)], axis=1)
    y = jnp.where(y > 0, y, NEG_SLOPE * y)              # branch0_2 leading activation
    x0 = _ref_conv(y, params['b02_conv'], 3, 0)
    x1 = _ref_conv(ds, params['b1_conv'], 2, 3)
    xc = jnp.concatenate([x0, x1], axis=1)
    return _ref_bn_act(xc, params['norm_bn'])


# ------------------------------------ main ------------------------------------

if __name__ == "__main__":
    B, Cin, H, W = 2, 4, 48, 48       # H, W divisible by 12 (12x downsample stem)
    Cout = 64
    key = jax.random.PRNGKey(0)
    kx, kp = jax.random.split(key)
    x = jax.random.normal(kx, (B, Cin, H, W), jnp.float32)
    params = init_params(kp, Cin, Cout)

    fwd = jax.jit(lambda inp: multi_branch_stem_sa12x(inp, params))
    out = fwd(x)
    jax.block_until_ready(out)
    assert out.shape == (B, Cout, H // 12, W // 12), out.shape

    ref = ref_forward(x, params)
    # Kernel matmul operands are bf16 (per review) while the reference runs f32
    # at Precision.HIGHEST, so the tolerance is deliberately loosened to cover
    # ~2^-9 per-operand rounding across the three matmul stages.
    np.testing.assert_allclose(np.asarray(out), np.asarray(ref),
                               rtol=2e-2, atol=2e-2)
    print("KERNEL_OK")
</pallas_src>

<mosaic_0001>
module attributes {stable_mosaic.version = 11 : i64} {
  func.func @_resize_kernel(%arg0: memref<8x48x48xbf16, #tpu.memory_space<vmem>>, %arg1: memref<8x48x8xbf16, #tpu.memory_space<vmem>>, %arg2: memref<8x8x48xbf16, #tpu.memory_space<vmem>>, %arg3: memref<8x8x8xf32, #tpu.memory_space<vmem>>) attributes {dimension_semantics = [], scalar_prefetch = 0 : i64, scratch_operands = 0 : i64, tpu.core_type = #tpu.core_type<tc>} {
    %c0 = arith.constant 0 : index
    %c0_0 = arith.constant 0 : index
    %c0_1 = arith.constant 0 : index
    %0 = vector.load %arg0[%c0, %c0_0, %c0_1] : memref<8x48x48xbf16, #tpu.memory_space<vmem>>, vector<8x48x48xbf16>
    %c0_2 = arith.constant 0 : index
    %c0_3 = arith.constant 0 : index
    %c0_4 = arith.constant 0 : index
    %1 = vector.load %arg1[%c0_2, %c0_3, %c0_4] : memref<8x48x8xbf16, #tpu.memory_space<vmem>>, vector<8x48x8xbf16>
    "tpu.trace_start"() <{level = 10 : i32, message = "nhw,nwk->nhk"}> : () -> ()
    %cst = arith.constant dense<0.000000e+00> : vector<8x48x8xf32>
    %2 = tpu.matmul %0, %1, %cst {dimension_numbers = #tpu.dot_dimension_numbers<[2], [1], [1], [2], [0, 0, 0, 1, 1, 2], [0], [0]>} : vector<8x48x48xbf16>, vector<8x48x8xbf16>, vector<8x48x8xf32> -> vector<8x48x8xf32>
    "tpu.trace_stop"() : () -> ()
    %c0_5 = arith.constant 0 : index
    %c0_6 = arith.constant 0 : index
    %c0_7 = arith.constant 0 : index
    %3 = vector.load %arg2[%c0_5, %c0_6, %c0_7] : memref<8x8x48xbf16, #tpu.memory_space<vmem>>, vector<8x8x48xbf16>
    %4 = arith.extf %3 : vector<8x8x48xbf16> to vector<8x8x48xf32>
    "tpu.trace_start"() <{level = 10 : i32, message = "noh,nhk->nok"}> : () -> ()
    %cst_8 = arith.constant dense<0.000000e+00> : vector<8x8x8xf32>
    %5 = tpu.matmul %4, %2, %cst_8 {dimension_numbers = #tpu.dot_dimension_numbers<[2], [1], [1], [2], [0, 0, 0, 1, 1, 2], [0], [0]>} : vector<8x8x48xf32>, vector<8x48x8xf32>, vector<8x8x8xf32> -> vector<8x8x8xf32>
    "tpu.trace_stop"() : () -> ()
    %c0_9 = arith.constant 0 : index
    %c0_10 = arith.constant 0 : index
    %c0_11 = arith.constant 0 : index
    %6 = vector.load %arg3[%c0_9, %c0_10, %c0_11] : memref<8x8x8xf32, #tpu.memory_space<vmem>>, vector<8x8x8xf32>
    tpu.vector_store %arg3[%c0_9, %c0_10, %c0_11], %5 {strides = array<i32>} : memref<8x8x8xf32, #tpu.memory_space<vmem>>, vector<8x8x8xf32>,
    return
  }
}

module attributes {stable_mosaic.version = 11 : i64} {
  func.func @_branch00_kernel(%arg0: i32, %arg1: memref<2x2x4x768xbf16, #tpu.memory_space<vmem>>, %arg2: memref<3x3x4x4xbf16, #tpu.memory_space<vmem>>, %arg3: memref<4x1xf32, #tpu.memory_space<vmem>>, %arg4: memref<4x1xf32, #tpu.memory_space<vmem>>, %arg5: memref<1x768xf32, #tpu.memory_space<vmem>>, %arg6: memref<3x3x16x4xbf16, #tpu.memory_space<vmem>>, %arg7: memref<16x768xf32, #tpu.memory_space<vmem>>) attributes {dimension_semantics = [#tpu.dimension_semantics<parallel>], iteration_bounds = array<i64: 2>, scalar_prefetch = 0 : i64, scratch_operands = 0 : i64, tpu.core_type = #tpu.core_type<tc>, window_params = [{transform_indices = @transform_0, window_bounds = array<i64: 2, 2, 4, 768>}, {pipeline_mode = #tpu.pipeline_mode<synchronous>, transform_indices = @transform_1, window_bounds = array<i64: 3, 3, 4, 4>}, {pipeline_mode = #tpu.pipeline_mode<synchronous>, transform_indices = @transform_2, window_bounds = array<i64: 4, 1>}, {pipeline_mode = #tpu.pipeline_mode<synchronous>, transform_indices = @transform_3, window_bounds = array<i64: 4, 1>}, {pipeline_mode = #tpu.pipeline_mode<synchronous>, transform_indices = @transform_4, window_bounds = array<i64: 1, 768>}, {pipeline_mode = #tpu.pipeline_mode<synchronous>, transform_indices = @transform_5, window_bounds = array<i64: 3, 3, 16, 4>}, {transform_indices = @transform_6, window_bounds = array<i64: 16, 768>}]} {
    %c0 = arith.constant 0 : index
    %c0_0 = arith.constant 0 : index
    %c0_1 = arith.constant 0 : index
    %c0_2 = arith.constant 0 : index
    %0 = vector.load %arg1[%c0, %c0_0, %c0_1, %c0_2] : memref<2x2x4x768xbf16, #tpu.memory_space<vmem>>, vector<1x1x4x768xbf16>
    %1 = vector.shape_cast %0 : vector<1x1x4x768xbf16> to vector<4x768xbf16>
    %c0_3 = arith.constant 0 : index
    %c1 = arith.constant 1 : index
    %c0_4 = arith.constant 0 : index
    %c0_5 = arith.constant 0 : index
    %2 = vector.load %arg1[%c0_3, %c1, %c0_4, %c0_5] : memref<2x2x4x768xbf16, #tpu.memory_space<vmem>>, vector<1x1x4x768xbf16>
    %3 = vector.shape_cast %2 : vector<1x1x4x768xbf16> to vector<4x768xbf16>
    %c1_6 = arith.constant 1 : index
    %c0_7 = arith.constant 0 : index
    %c0_8 = arith.constant 0 : index
    %c0_9 = arith.constant 0 : index
    %4 = vector.load %arg1[%c1_6, %c0_7, %c0_8, %c0_9] : memref<2x2x4x768xbf16, #tpu.memory_space<vmem>>, vector<1x1x4x768xbf16>
    %5 = vector.shape_cast %4 : vector<1x1x4x768xbf16> to vector<4x768xbf16>
    %c1_10 = arith.constant 1 : index
    %c1_11 = arith.constant 1 : index
    %c0_12 = arith.constant 0 : index
    %c0_13 = arith.constant 0 : index
    %6 = vector.load %arg1[%c1_10, %c1_11, %c0_12, %c0_13] : memref<2x2x4x768xbf16, #tpu.memory_space<vmem>>, vector<1x1x4x768xbf16>
    %7 = vector.shape_cast %6 : vector<1x1x4x768xbf16> to vector<4x768xbf16>
    %cst = arith.constant 0.000000e+00 : f32
    %8 = vector.broadcast %cst : f32 to vector<4x768xf32>
    %c0_14 = arith.constant 0 : index
    %c0_15 = arith.constant 0 : index
    %c0_16 = arith.constant 0 : index
    %c0_17 = arith.constant 0 : index
    %9 = vector.load %arg2[%c0_14, %c0_15, %c0_16, %c0_17] : memref<3x3x4x4xbf16, #tpu.memory_space<vmem>>, vector<1x1x4x4xbf16>
    %10 = vector.shape_cast %9 : vector<1x1x4x4xbf16> to vector<4x4xbf16>
    %11 = vector.extract_strided_slice %1 {offsets = [0, 741], sizes = [4, 27], strides = [1, 1]} : vector<4x768xbf16> to vector<4x27xbf16>
    %12 = vector.extract_strided_slice %1 {offsets = [0, 0], sizes = [4, 741], strides = [1, 1]} : vector<4x768xbf16> to vector<4x741xbf16>
    %13 = tpu.concatenate %11, %12 in 1 : vector<4x27xbf16>, vector<4x741xbf16> -> vector<4x768xbf16>
    %cst_18 = arith.constant dense<0.000000e+00> : vector<4x768xf32>
    %14 = tpu.matmul %10, %13, %cst_18 {dimension_numbers = #tpu.dot_dimension_numbers<[1], [0], [0], [1], [0, 0, 1, 1], [], []>} : vector<4x4xbf16>, vector<4x768xbf16>, vector<4x768xf32> -> vector<4x768xf32>
    %15 = arith.addf %8, %14 : vector<4x768xf32>
    %c0_19 = arith.constant 0 : index
    %c1_20 = arith.constant 1 : index
    %c0_21 = arith.constant 0 : index
    %c0_22 = arith.constant 0 : index
    %16 = vector.load %arg2[%c0_19, %c1_20, %c0_21, %c0_22] : memref<3x3x4x4xbf16, #tpu.memory_space<vmem>>, vector<1x1x4x4xbf16>
    %17 = vector.shape_cast %16 : vector<1x1x4x4xbf16> to vector<4x4xbf16>
    %18 = vector.extract_strided_slice %3 {offsets = [0, 741], sizes = [4, 27], strides = [1, 1]} : vector<4x768xbf16> to vector<4x27xbf16>
    %19 = vector.extract_strided_slice %3 {offsets = [0, 0], sizes = [4, 741], strides = [1, 1]} : vector<4x768xbf16> to vector<4x741xbf16>
    %20 = tpu.concatenate %18, %19 in 1 : vector<4x27xbf16>, vector<4x741xbf16> -> vector<4x768xbf16>
    %cst_23 = arith.constant dense<0.000000e+00> : vector<4x768xf32>
    %21 = tpu.matmul %17, %20, %cst_23 {dimension_numbers = #tpu.dot_dimension_numbers<[1], [0], [0], [1], [0, 0, 1, 1], [], []>} : vector<4x4xbf16>, vector<4x768xbf16>, vector<4x768xf32> -> vector<4x768xf32>
    %22 = arith.addf %15, %21 : vector<4x768xf32>
    %c0_24 = arith.constant 0 : index
    %c2 = arith.constant 2 : index
    %c0_25 = arith.constant 0 : index
    %c0_26 = arith.constant 0 : index
    %23 = vector.load %arg2[%c0_24, %c2, %c0_25, %c0_26] : memref<3x3x4x4xbf16, #tpu.memory_space<vmem>>, vector<1x1x4x4xbf16>
    %24 = vector.shape_cast %23 : vector<1x1x4x4xbf16> to vector<4x4xbf16>
    %25 = vector.extract_strided_slice %1 {offsets = [0, 742], sizes = [4, 26], strides = [1, 1]} : vector<4x768xbf16> to vector<4x26xbf16>
    %26 = vector.extract_strided_slice %1 {offsets = [0, 0], sizes = [4, 742], strides = [1, 1]} : vector<4x768xbf16> to vector<4x742xbf16>
    %27 = tpu.concatenate %25, %26 in 1 : vector<4x26xbf16>, vector<4x742xbf16> -> vector<4x768xbf16>
    %cst_27 = arith.constant dense<0.000000e+00> : vector<4x768xf32>
    %28 = tpu.matmul %24, %27, %cst_27 {dimension_numbers = #tpu.dot_dimension_numbers<[1], [0], [0], [1], [0, 0, 1, 1], [], []>} : vector<4x4xbf16>, vector<4x768xbf16>, vector<4x768xf32> -> vector<4x768xf32>
    %29 = arith.addf %22, %28 : vector<4x768xf32>
    %c1_28 = arith.constant 1 : index
    %c0_29 = arith.constant 0 : index
    %c0_30 = arith.constant 0 : index
    %c0_31 = arith.constant 0 : index
    %30 = vector.load %arg2[%c1_28, %c0_29, %c0_30, %c0_31] : memref<3x3x4x4xbf16, #tpu.memory_space<vmem>>, vector<1x1x4x4xbf16>
    %31 = vector.shape_cast %30 : vector<1x1x4x4xbf16> to vector<4x4xbf16>
    %32 = vector.extract_strided_slice %5 {offsets = [0, 741], sizes = [4, 27], strides = [1, 1]} : vector<4x768xbf16> to vector<4x27xbf16>
    %33 = vector.extract_strided_slice %5 {offsets = [0, 0], sizes = [4, 741], strides = [1, 1]} : vector<4x768xbf16> to vector<4x741xbf16>
    %34 = tpu.concatenate %32, %33 in 1 : vector<4x27xbf16>, vector<4x741xbf16> -> vector<4x768xbf16>
    %cst_32 = arith.constant dense<0.000000e+00> : vector<4x768xf32>
    %35 = tpu.matmul %31, %34, %cst_32 {dimension_numbers = #tpu.dot_dimension_numbers<[1], [0], [0], [1], [0, 0, 1, 1], [], []>} : vector<4x4xbf16>, vector<4x768xbf16>, vector<4x768xf32> -> vector<4x768xf32>
    %36 = arith.addf %29, %35 : vector<4x768xf32>
    %c1_33 = arith.constant 1 : index
    %c1_34 = arith.constant 1 : index
    %c0_35 = arith.constant 0 : index
    %c0_36 = arith.constant 0 : index
    %37 = vector.load %arg2[%c1_33, %c1_34, %c0_35, %c0_36] : memref<3x3x4x4xbf16, #tpu.memory_space<vmem>>, vector<1x1x4x4xbf16>
    %38 = vector.shape_cast %37 : vector<1x1x4x4xbf16> to vector<4x4xbf16>
    %39 = vector.extract_strided_slice %7 {offsets = [0, 741], sizes = [4, 27], strides = [1, 1]} : vector<4x768xbf16> to vector<4x27xbf16>
    %40 = vector.extract_strided_slice %7 {offsets = [0, 0], sizes = [4, 741], strides = [1, 1]} : vector<4x768xbf16> to vector<4x741xbf16>
    %41 = tpu.concatenate %39, %40 in 1 : vector<4x27xbf16>, vector<4x741xbf16> -> vector<4x768xbf16>
    %cst_37 = arith.constant dense<0.000000e+00> : vector<4x768xf32>
    %42 = tpu.matmul %38, %41, %cst_37 {dimension_numbers = #tpu.dot_dimension_numbers<[1], [0], [0], [1], [0, 0, 1, 1], [], []>} : vector<4x4xbf16>, vector<4x768xbf16>, vector<4x768xf32> -> vector<4x768xf32>
    %43 = arith.addf %36, %42 : vector<4x768xf32>
    %c1_38 = arith.constant 1 : index
    %c2_39 = arith.constant 2 : index
    %c0_40 = arith.constant 0 : index
    %c0_41 = arith.constant 0 : index
    %44 = vector.load %arg2[%c1_38, %c2_39, %c0_40, %c0_41] : memref<3x3x4x4xbf16, #tpu.memory_space<vmem>>, vector<1x1x4x4xbf16>
    %45 = vector.shape_cast %44 : vector<1x1x4x4xbf16> to vector<4x4xbf16>
    %46 = vector.extract_strided_slice %5 {offsets = [0, 742], sizes = [4, 26], strides = [1, 1]} : vector<4x768xbf16> to vector<4x26xbf16>
    %47 = vector.extract_strided_slice %5 {offsets = [0, 0], sizes = [4, 742], strides = [1, 1]} : vector<4x768xbf16> to vector<4x742xbf16>
    %48 = tpu.concatenate %46, %47 in 1 : vector<4x26xbf16>, vector<4x742xbf16> -> vector<4x768xbf16>
    %cst_42 = arith.constant dense<0.000000e+00> : vector<4x768xf32>
    %49 = tpu.matmul %45, %48, %cst_42 {dimension_numbers = #tpu.dot_dimension_numbers<[1], [0], [0], [1], [0, 0, 1, 1], [], []>} : vector<4x4xbf16>, vector<4x768xbf16>, vector<4x768xf32> -> vector<4x768xf32>
    %50 = arith.addf %43, %49 : vector<4x768xf32>
    %c2_43 = arith.constant 2 : index
    %c0_44 = arith.constant 0 : index
    %c0_45 = arith.constant 0 : index
    %c0_46 = arith.constant 0 : index
    %51 = vector.load %arg2[%c2_43, %c0_44, %c0_45, %c0_46] : memref<3x3x4x4xbf16, #tpu.memory_space<vmem>>, vector<1x1x4x4xbf16>
    %52 = vector.shape_cast %51 : vector<1x1x4x4xbf16> to vector<4x4xbf16>
    %53 = vector.extract_strided_slice %1 {offsets = [0, 767], sizes = [4, 1], strides = [1, 1]} : vector<4x768xbf16> to vector<4x1xbf16>
    %54 = vector.extract_strided_slice %1 {offsets = [0, 0], sizes = [4, 767], strides = [1, 1]} : vector<4x768xbf16> to vector<4x767xbf16>
    %55 = tpu.concatenate %53, %54 in 1 : vector<4x1xbf16>, vector<4x767xbf16> -> vector<4x768xbf16>
    %cst_47 = arith.constant dense<0.000000e+00> : vector<4x768xf32>
    %56 = tpu.matmul %52, %55, %cst_47 {dimension_numbers = #tpu.dot_dimension_numbers<[1], [0], [0], [1], [0, 0, 1, 1], [], []>} : vector<4x4xbf16>, vector<4x768xbf16>, vector<4x768xf32> -> vector<4x768xf32>
    %57 = arith.addf %50, %56 : vector<4x768xf32>
    %c2_48 = arith.constant 2 : index
    %c1_49 = arith.constant 1 : index
    %c0_50 = arith.constant 0 : index
    %c0_51 = arith.constant 0 : index
    %58 = vector.load %arg2[%c2_48, %c1_49, %c0_50, %c0_51] : memref<3x3x4x4xbf16, #tpu.memory_space<vmem>>, vector<1x1x4x4xbf16>
    %59 = vector.shape_cast %58 : vector<1x1x4x4xbf16> to vector<4x4xbf16>
    %60 = vector.extract_strided_slice %3 {offsets = [0, 767], sizes = [4, 1], strides = [1, 1]} : vector<4x768xbf16> to vector<4x1xbf16>
    %61 = vector.extract_strided_slice %3 {offsets = [0, 0], sizes = [4, 767], strides = [1, 1]} : vector<4x768xbf16> to vector<4x767xbf16>
    %62 = tpu.concatenate %60, %61 in 1 : vector<4x1xbf16>, vector<4x767xbf16> -> vector<4x768xbf16>
    %cst_52 = arith.constant dense<0.000000e+00> : vector<4x768xf32>
    %63 = tpu.matmul %59, %62, %cst_52 {dimension_numbers = #tpu.dot_dimension_numbers<[1], [0], [0], [1], [0, 0, 1, 1], [], []>} : vector<4x4xbf16>, vector<4x768xbf16>, vector<4x768xf32> -> vector<4x768xf32>
    %64 = arith.addf %57, %63 : vector<4x768xf32>
    %c2_53 = arith.constant 2 : index
    %c2_54 = arith.constant 2 : index
    %c0_55 = arith.constant 0 : index
    %c0_56 = arith.constant 0 : index
    %65 = vector.load %arg2[%c2_53, %c2_54, %c0_55, %c0_56] : memref<3x3x4x4xbf16, #tpu.memory_space<vmem>>, vector<1x1x4x4xbf16>
    %66 = vector.shape_cast %65 : vector<1x1x4x4xbf16> to vector<4x4xbf16>
    %cst_57 = arith.constant dense<0.000000e+00> : vector<4x768xf32>
    %67 = tpu.matmul %66, %1, %cst_57 {dimension_numbers = #tpu.dot_dimension_numbers<[1], [0], [0], [1], [0, 0, 1, 1], [], []>} : vector<4x4xbf16>, vector<4x768xbf16>, vector<4x768xf32> -> vector<4x768xf32>
    %68 = arith.addf %64, %67 : vector<4x768xf32>
    %c0_58 = arith.constant 0 : index
    %c0_59 = arith.constant 0 : index
    %69 = vector.load %arg3[%c0_58, %c0_59] : memref<4x1xf32, #tpu.memory_space<vmem>>, vector<4x1xf32>
    %70 = vector.broadcast %69 : vector<4x1xf32> to vector<4x768xf32>
    %71 = arith.mulf %68, %70 : vector<4x768xf32>
    %c0_60 = arith.constant 0 : index
    %c0_61 = arith.constant 0 : index
    %72 = vector.load %arg4[%c0_60, %c0_61] : memref<4x1xf32, #tpu.memory_space<vmem>>, vector<4x1xf32>
    %73 = vector.broadcast %72 : vector<4x1xf32> to vector<4x768xf32>
    %74 = arith.addf %71, %73 : vector<4x768xf32>
    %cst_62 = arith.constant 0.000000e+00 : f32
    %75 = vector.broadcast %cst_62 : f32 to vector<4x768xf32>
    %76 = arith.cmpf ogt, %74, %75 : vector<4x768xf32>
    %cst_63 = arith.constant 0.00999999977 : f32
    %77 = vector.broadcast %cst_63 : f32 to vector<4x768xf32>
    %78 = arith.mulf %77, %74 : vector<4x768xf32>
    %79 = arith.select %76, %74, %78 : vector<4x768xi1>, vector<4x768xf32>
    %c0_64 = arith.constant 0 : index
    %c0_65 = arith.constant 0 : index
    %80 = vector.load %arg5[%c0_64, %c0_65] : memref<1x768xf32, #tpu.memory_space<vmem>>, vector<1x768xf32>
    %81 = vector.broadcast %80 : vector<1x768xf32> to vector<4x768xf32>
    %82 = arith.mulf %79, %81 : vector<4x768xf32>
    %cst_66 = arith.constant 0.000000e+00 : f32
    %83 = vector.broadcast %cst_66 : f32 to vector<16x768xf32>
    %c0_67 = arith.constant 0 : index
    %c0_68 = arith.constant 0 : index
    %c0_69 = arith.constant 0 : index
    %c0_70 = arith.constant 0 : index
    %84 = vector.load %arg6[%c0_67, %c0_68, %c0_69, %c0_70] : memref<3x3x16x4xbf16, #tpu.memory_space<vmem>>, vector<1x1x16x4xbf16>
    %85 = vector.shape_cast %84 : vector<1x1x16x4xbf16> to vector<16x4xbf16>
    %cst_71 = arith.constant dense<0.000000e+00> : vector<16x768xf32>
    %86 = tpu.matmul %85, %82, %cst_71 {dimension_numbers = #tpu.dot_dimension_numbers<[1], [0], [0], [1], [0, 0, 1, 1], [], []>} : vector<16x4xbf16>, vector<4x768xf32>, vector<16x768xf32> -> vector<16x768xf32>
    %87 = arith.addf %83, %86 : vector<16x768xf32>
    %c0_72 = arith.constant 0 : index
    %c1_73 = arith.constant 1 : index
    %c0_74 = arith.constant 0 : index
    %c0_75 = arith.constant 0 : index
    %88 = vector.load %arg6[%c0_72, %c1_73, %c0_74, %c0_75] : memref<3x3x16x4xbf16, #tpu.memory_space<vmem>>, vector<1x1x16x4xbf16>
    %89 = vector.shape_cast %88 : vector<1x1x16x4xbf16> to vector<16x4xbf16>
    %90 = vector.extract_strided_slice %82 {offsets = [0, 1], sizes = [4, 767], strides = [1, 1]} : vector<4x768xf32> to vector<4x767xf32>
    %91 = vector.extract_strided_slice %82 {offsets = [0, 0], sizes = [4, 1], strides = [1, 1]} : vector<4x768xf32> to vector<4x1xf32>
    %92 = tpu.concatenate %90, %91 in 1 : vector<4x767xf32>, vector<4x1xf32> -> vector<4x768xf32>
    %cst_76 = arith.constant dense<0.000000e+00> : vector<16x768xf32>
    %93 = tpu.matmul %89, %92, %cst_76 {dimension_numbers = #tpu.dot_dimension_numbers<[1], [0], [0], [1], [0, 0, 1, 1], [], []>} : vector<16x4xbf16>, vector<4x768xf32>, vector<16x768xf32> -> vector<16x768xf32>
    %94 = arith.addf %87, %93 : vector<16x768xf32>
    %c0_77 = arith.constant 0 : index
    %c2_78 = arith.constant 2 : index
    %c0_79 = arith.constant 0 : index
    %c0_80 = arith.constant 0 : index
    %95 = vector.load %arg6[%c0_77, %c2_78, %c0_79, %c0_80] : memref<3x3x16x4xbf16, #tpu.memory_space<vmem>>, vector<1x1x16x4xbf16>
    %96 = vector.shape_cast %95 : vector<1x1x16x4xbf16> to vector<16x4xbf16>
    %97 = vector.extract_strided_slice %82 {offsets = [0, 2], sizes = [4, 766], strides = [1, 1]} : vector<4x768xf32> to vector<4x766xf32>
    %98 = vector.extract_strided_slice %82 {offsets = [0, 0], sizes = [4, 2], strides = [1, 1]} : vector<4x768xf32> to vector<4x2xf32>
    %99 = tpu.concatenate %97, %98 in 1 : vector<4x766xf32>, vector<4x2xf32> -> vector<4x768xf32>
    %cst_81 = arith.constant dense<0.000000e+00> : vector<16x768xf32>
    %100 = tpu.matmul %96, %99, %cst_81 {dimension_numbers = #tpu.dot_dimension_numbers<[1], [0], [0], [1], [0, 0, 1, 1], [], []>} : vector<16x4xbf16>, vector<4x768xf32>, vector<16x768xf32> -> vector<16x768xf32>
    %101 = arith.addf %94, %100 : vector<16x768xf32>
    %c1_82 = arith.constant 1 : index
    %c0_83 = arith.constant 0 : index
    %c0_84 = arith.constant 0 : index
    %c0_85 = arith.constant 0 : index
    %102 = vector.load %arg6[%c1_82, %c0_83, %c0_84, %c0_85] : memref<3x3x16x4xbf16, #tpu.memory_space<vmem>>, vector<1x1x16x4xbf16>
    %103 = vector.shape_cast %102 : vector<1x1x16x4xbf16> to vector<16x4xbf16>
    %104 = vector.extract_strided_slice %82 {offsets = [0, 26], sizes = [4, 742], strides = [1, 1]} : vector<4x768xf32> to vector<4x742xf32>
    %105 = vector.extract_strided_slice %82 {offsets = [0, 0], sizes = [4, 26], strides = [1, 1]} : vector<4x768xf32> to vector<4x26xf32>
    %106 = tpu.concatenate %104, %105 in 1 : vector<4x742xf32>, vector<4x26xf32> -> vector<4x768xf32>
    %cst_86 = arith.constant dense<0.000000e+00> : vector<16x768xf32>
    %107 = tpu.matmul %103, %106, %cst_86 {dimension_numbers = #tpu.dot_dimension_numbers<[1], [0], [0], [1], [0, 0, 1, 1], [], []>} : vector<16x4xbf16>, vector<4x768xf32>, vector<16x768xf32> -> vector<16x768xf32>
    %108 = arith.addf %101, %107 : vector<16x768xf32>
    %c1_87 = arith.constant 1 : index
    %c1_88 = arith.constant 1 : index
    %c0_89 = arith.constant 0 : index
    %c0_90 = arith.constant 0 : index
    %109 = vector.load %arg6[%c1_87, %c1_88, %c0_89, %c0_90] : memref<3x3x16x4xbf16, #tpu.memory_space<vmem>>, vector<1x1x16x4xbf16>
    %110 = vector.shape_cast %109 : vector<1x1x16x4xbf16> to vector<16x4xbf16>
    %111 = vector.extract_strided_slice %82 {offsets = [0, 27], sizes = [4, 741], strides = [1, 1]} : vector<4x768xf32> to vector<4x741xf32>
    %112 = vector.extract_strided_slice %82 {offsets = [0, 0], sizes = [4, 27], strides = [1, 1]} : vector<4x768xf32> to vector<4x27xf32>
    %113 = tpu.concatenate %111, %112 in 1 : vector<4x741xf32>, vector<4x27xf32> -> vector<4x768xf32>
    %cst_91 = arith.constant dense<0.000000e+00> : vector<16x768xf32>
    %114 = tpu.matmul %110, %113, %cst_91 {dimension_numbers = #tpu.dot_dimension_numbers<[1], [0], [0], [1], [0, 0, 1, 1], [], []>} : vector<16x4xbf16>, vector<4x768xf32>, vector<16x768xf32> -> vector<16x768xf32>
    %115 = arith.addf %108, %114 : vector<16x768xf32>
    %c1_92 = arith.constant 1 : index
    %c2_93 = arith.constant 2 : index
    %c0_94 = arith.constant 0 : index
    %c0_95 = arith.constant 0 : index
    %116 = vector.load %arg6[%c1_92, %c2_93, %c0_94, %c0_95] : memref<3x3x16x4xbf16, #tpu.memory_space<vmem>>, vector<1x1x16x4xbf16>
    %117 = vector.shape_cast %116 : vector<1x1x16x4xbf16> to vector<16x4xbf16>
    %118 = vector.extract_strided_slice %82 {offsets = [0, 28], sizes = [4, 740], strides = [1, 1]} : vector<4x768xf32> to vector<4x740xf32>
    %119 = vector.extract_strided_slice %82 {offsets = [0, 0], sizes = [4, 28], strides = [1, 1]} : vector<4x768xf32> to vector<4x28xf32>
    %120 = tpu.concatenate %118, %119 in 1 : vector<4x740xf32>, vector<4x28xf32> -> vector<4x768xf32>
    %cst_96 = arith.constant dense<0.000000e+00> : vector<16x768xf32>
    %121 = tpu.matmul %117, %120, %cst_96 {dimension_numbers = #tpu.dot_dimension_numbers<[1], [0], [0], [1], [0, 0, 1, 1], [], []>} : vector<16x4xbf16>, vector<4x768xf32>, vector<16x768xf32> -> vector<16x768xf32>
    %122 = arith.addf %115, %121 : vector<16x768xf32>
    %c2_97 = arith.constant 2 : index
    %c0_98 = arith.constant 0 : index
    %c0_99 = arith.constant 0 : index
    %c0_100 = arith.constant 0 : index
    %123 = vector.load %arg6[%c2_97, %c0_98, %c0_99, %c0_100] : memref<3x3x16x4xbf16, #tpu.memory_space<vmem>>, vector<1x1x16x4xbf16>
    %124 = vector.shape_cast %123 : vector<1x1x16x4xbf16> to vector<16x4xbf16>
    %125 = vector.extract_strided_slice %82 {offsets = [0, 52], sizes = [4, 716], strides = [1, 1]} : vector<4x768xf32> to vector<4x716xf32>
    %126 = vector.extract_strided_slice %82 {offsets = [0, 0], sizes = [4, 52], strides = [1, 1]} : vector<4x768xf32> to vector<4x52xf32>
    %127 = tpu.concatenate %125, %126 in 1 : vector<4x716xf32>, vector<4x52xf32> -> vector<4x768xf32>
    %cst_101 = arith.constant dense<0.000000e+00> : vector<16x768xf32>
    %128 = tpu.matmul %124, %127, %cst_101 {dimension_numbers = #tpu.dot_dimension_numbers<[1], [0], [0], [1], [0, 0, 1, 1], [], []>} : vector<16x4xbf16>, vector<4x768xf32>, vector<16x768xf32> -> vector<16x768xf32>
    %129 = arith.addf %122, %128 : vector<16x768xf32>
    %c2_102 = arith.constant 2 : index
    %c1_103 = arith.constant 1 : index
    %c0_104 = arith.constant 0 : index
    %c0_105 = arith.constant 0 : index
    %130 = vector.load %arg6[%c2_102, %c1_103, %c0_104, %c0_105] : memref<3x3x16x4xbf16, #tpu.memory_space<vmem>>, vector<1x1x16x4xbf16>
    %131 = vector.shape_cast %130 : vector<1x1x16x4xbf16> to vector<16x4xbf16>
    %132 = vector.extract_strided_slice %82 {offsets = [0, 53], sizes = [4, 715], strides = [1, 1]} : vector<4x768xf32> to vector<4x715xf32>
    %133 = vector.extract_strided_slice %82 {offsets = [0, 0], sizes = [4, 53], strides = [1, 1]} : vector<4x768xf32> to vector<4x53xf32>
    %134 = tpu.concatenate %132, %133 in 1 : vector<4x715xf32>, vector<4x53xf32> -> vector<4x768xf32>
    %cst_106 = arith.constant dense<0.000000e+00> : vector<16x768xf32>
    %135 = tpu.matmul %131, %134, %cst_106 {dimension_numbers = #tpu.dot_dimension_numbers<[1], [0], [0], [1], [0, 0, 1, 1], [], []>} : vector<16x4xbf16>, vector<4x768xf32>, vector<16x768xf32> -> vector<16x768xf32>
    %136 = arith.addf %129, %135 : vector<16x768xf32>
    %c2_107 = arith.constant 2 : index
    %c2_108 = arith.constant 2 : index
    %c0_109 = arith.constant 0 : index
    %c0_110 = arith.constant 0 : index
    %137 = vector.load %arg6[%c2_107, %c2_108, %c0_109, %c0_110] : memref<3x3x16x4xbf16, #tpu.memory_space<vmem>>, vector<1x1x16x4xbf16>
    %138 = vector.shape_cast %137 : vector<1x1x16x4xbf16> to vector<16x4xbf16>
    %139 = vector.extract_strided_slice %82 {offsets = [0, 54], sizes = [4, 714], strides = [1, 1]} : vector<4x768xf32> to vector<4x714xf32>
    %140 = vector.extract_strided_slice %82 {offsets = [0, 0], sizes = [4, 54], strides = [1, 1]} : vector<4x768xf32> to vector<4x54xf32>
    %141 = tpu.concatenate %139, %140 in 1 : vector<4x714xf32>, vector<4x54xf32> -> vector<4x768xf32>
    %cst_111 = arith.constant dense<0.000000e+00> : vector<16x768xf32>
    %142 = tpu.matmul %138, %141, %cst_111 {dimension_numbers = #tpu.dot_dimension_numbers<[1], [0], [0], [1], [0, 0, 1, 1], [], []>} : vector<16x4xbf16>, vector<4x768xf32>, vector<16x768xf32> -> vector<16x768xf32>
    %143 = arith.addf %136, %142 : vector<16x768xf32>
    %c0_112 = arith.constant 0 : index
    %c0_113 = arith.constant 0 : index
    %144 = vector.load %arg7[%c0_112, %c0_113] : memref<16x768xf32, #tpu.memory_space<vmem>>, vector<16x768xf32>
    tpu.vector_store %arg7[%c0_112, %c0_113], %143 {strides = array<i32>} : memref<16x768xf32, #tpu.memory_space<vmem>>, vector<16x768xf32>,
    return
  }
  func.func @transform_0(%arg0: i32) -> (i32, i32, i32, i32) {
    %c0_i32 = arith.constant 0 : i32
    %c0_i32_0 = arith.constant 0 : i32
    %c0_i32_1 = arith.constant 0 : i32
    %c0_i32_2 = arith.constant 0 : i32
    return %c0_i32, %c0_i32_0, %c0_i32_1, %arg0 : i32, i32, i32, i32
  }
  func.func @transform_1(%arg0: i32) -> (i32, i32, i32, i32) {
    %c0_i32 = arith.constant 0 : i32
    %c0_i32_0 = arith.constant 0 : i32
    %c0_i32_1 = arith.constant 0 : i32
    %c0_i32_2 = arith.constant 0 : i32
    %c0_i32_3 = arith.constant 0 : i32
    return %c0_i32, %c0_i32_0, %c0_i32_1, %c0_i32_2 : i32, i32, i32, i32
  }
  func.func @transform_2(%arg0: i32) -> (i32, i32) {
    %c0_i32 = arith.constant 0 : i32
    %c0_i32_0 = arith.constant 0 : i32
    %c0_i32_1 = arith.constant 0 : i32
    return %c0_i32, %c0_i32_0 : i32, i32
  }
  func.func @transform_3(%arg0: i32) -> (i32, i32) {
    %c0_i32 = arith.constant 0 : i32
    %c0_i32_0 = arith.constant 0 : i32
    %c0_i32_1 = arith.constant 0 : i32
    return %c0_i32, %c0_i32_0 : i32, i32
  }
  func.func @transform_4(%arg0: i32) -> (i32, i32) {
    %c0_i32 = arith.constant 0 : i32
    %c0_i32_0 = arith.constant 0 : i32
    %c0_i32_1 = arith.constant 0 : i32
    return %c0_i32, %c0_i32_0 : i32, i32
  }
  func.func @transform_5(%arg0: i32) -> (i32, i32, i32, i32) {
    %c0_i32 = arith.constant 0 : i32
    %c0_i32_0 = arith.constant 0 : i32
    %c0_i32_1 = arith.constant 0 : i32
    %c0_i32_2 = arith.constant 0 : i32
    %c0_i32_3 = arith.constant 0 : i32
    return %c0_i32, %c0_i32_0, %c0_i32_1, %c0_i32_2 : i32, i32, i32, i32
  }
  func.func @transform_6(%arg0: i32) -> (i32, i32) {
    %c0_i32 = arith.constant 0 : i32
    %c0_i32_0 = arith.constant 0 : i32
    return %c0_i32, %arg0 : i32, i32
  }
}

module attributes {stable_mosaic.version = 11 : i64} {
  func.func @_dual_pool_kernel(%arg0: i32, %arg1: memref<2x2x16x169xf32, #tpu.memory_space<vmem>>, %arg2: memref<2x2x16x196xf32, #tpu.memory_space<vmem>>, %arg3: memref<16x169xf32, #tpu.memory_space<vmem>>, %arg4: memref<16x196xf32, #tpu.memory_space<vmem>>) attributes {dimension_semantics = [#tpu.dimension_semantics<parallel>], iteration_bounds = array<i64: 2>, scalar_prefetch = 0 : i64, scratch_operands = 0 : i64, tpu.core_type = #tpu.core_type<tc>, window_params = [{transform_indices = @transform_0, window_bounds = array<i64: 2, 2, 16, 169>}, {transform_indices = @transform_1, window_bounds = array<i64: 2, 2, 16, 196>}, {transform_indices = @transform_2, window_bounds = array<i64: 16, 169>}, {transform_indices = @transform_3, window_bounds = array<i64: 16, 196>}]} {
    %c0 = arith.constant 0 : index
    %c0_0 = arith.constant 0 : index
    %c0_1 = arith.constant 0 : index
    %c0_2 = arith.constant 0 : index
    %0 = vector.load %arg1[%c0, %c0_0, %c0_1, %c0_2] : memref<2x2x16x169xf32, #tpu.memory_space<vmem>>, vector<1x1x16x169xf32>
    %1 = vector.shape_cast %0 : vector<1x1x16x169xf32> to vector<16x169xf32>
    %c0_3 = arith.constant 0 : index
    %c1 = arith.constant 1 : index
    %c0_4 = arith.constant 0 : index
    %c0_5 = arith.constant 0 : index
    %2 = vector.load %arg1[%c0_3, %c1, %c0_4, %c0_5] : memref<2x2x16x169xf32, #tpu.memory_space<vmem>>, vector<1x1x16x169xf32>
    %3 = vector.shape_cast %2 : vector<1x1x16x169xf32> to vector<16x169xf32>
    %c1_6 = arith.constant 1 : index
    %c0_7 = arith.constant 0 : index
    %c0_8 = arith.constant 0 : index
    %c0_9 = arith.constant 0 : index
    %4 = vector.load %arg1[%c1_6, %c0_7, %c0_8, %c0_9] : memref<2x2x16x169xf32, #tpu.memory_space<vmem>>, vector<1x1x16x169xf32>
    %5 = vector.shape_cast %4 : vector<1x1x16x169xf32> to vector<16x169xf32>
    %c1_10 = arith.constant 1 : index
    %c1_11 = arith.constant 1 : index
    %c0_12 = arith.constant 0 : index
    %c0_13 = arith.constant 0 : index
    %6 = vector.load %arg1[%c1_10, %c1_11, %c0_12, %c0_13] : memref<2x2x16x169xf32, #tpu.memory_space<vmem>>, vector<1x1x16x169xf32>
    %7 = vector.shape_cast %6 : vector<1x1x16x169xf32> to vector<16x169xf32>
    %8 = vector.extract_strided_slice %1 {offsets = [0, 1], sizes = [16, 168], strides = [1, 1]} : vector<16x169xf32> to vector<16x168xf32>
    %9 = vector.extract_strided_slice %1 {offsets = [0, 0], sizes = [16, 1], strides = [1, 1]} : vector<16x169xf32> to vector<16x1xf32>
    %10 = tpu.concatenate %8, %9 in 1 : vector<16x168xf32>, vector<16x1xf32> -> vector<16x169xf32>
    %11 = vector.extract_strided_slice %5 {offsets = [0, 1], sizes = [16, 168], strides = [1, 1]} : vector<16x169xf32> to vector<16x168xf32>
    %12 = vector.extract_strided_slice %5 {offsets = [0, 0], sizes = [16, 1], strides = [1, 1]} : vector<16x169xf32> to vector<16x1xf32>
    %13 = tpu.concatenate %11, %12 in 1 : vector<16x168xf32>, vector<16x1xf32> -> vector<16x169xf32>
    %14 = vector.extract_strided_slice %1 {offsets = [0, 13], sizes = [16, 156], strides = [1, 1]} : vector<16x169xf32> to vector<16x156xf32>
    %15 = vector.extract_strided_slice %1 {offsets = [0, 0], sizes = [16, 13], strides = [1, 1]} : vector<16x169xf32> to vector<16x13xf32>
    %16 = tpu.concatenate %14, %15 in 1 : vector<16x156xf32>, vector<16x13xf32> -> vector<16x169xf32>
    %17 = vector.extract_strided_slice %3 {offsets = [0, 13], sizes = [16, 156], strides = [1, 1]} : vector<16x169xf32> to vector<16x156xf32>
    %18 = vector.extract_strided_slice %3 {offsets = [0, 0], sizes = [16, 13], strides = [1, 1]} : vector<16x169xf32> to vector<16x13xf32>
    %19 = tpu.concatenate %17, %18 in 1 : vector<16x156xf32>, vector<16x13xf32> -> vector<16x169xf32>
    %20 = vector.extract_strided_slice %1 {offsets = [0, 14], sizes = [16, 155], strides = [1, 1]} : vector<16x169xf32> to vector<16x155xf32>
    %21 = vector.extract_strided_slice %1 {offsets = [0, 0], sizes = [16, 14], strides = [1, 1]} : vector<16x169xf32> to vector<16x14xf32>
    %22 = tpu.concatenate %20, %21 in 1 : vector<16x155xf32>, vector<16x14xf32> -> vector<16x169xf32>
    %23 = arith.maximumf %1, %3 : vector<16x169xf32>
    %24 = arith.maximumf %10, %5 : vector<16x169xf32>
    %25 = arith.maximumf %7, %13 : vector<16x169xf32>
    %26 = arith.maximumf %16, %19 : vector<16x169xf32>
    %27 = arith.maximumf %23, %24 : vector<16x169xf32>
    %28 = arith.maximumf %25, %26 : vector<16x169xf32>
    %29 = arith.maximumf %27, %28 : vector<16x169xf32>
    %30 = arith.maximumf %29, %22 : vector<16x169xf32>
    %cst = arith.constant 0.000000e+00 : f32
    %31 = vector.broadcast %cst : f32 to vector<16x169xf32>
    %32 = arith.cmpf ogt, %30, %31 : vector<16x169xf32>
    %cst_14 = arith.constant 0.00999999977 : f32
    %33 = vector.broadcast %cst_14 : f32 to vector<16x169xf32>
    %34 = arith.mulf %33, %30 : vector<16x169xf32>
    %35 = arith.select %32, %30, %34 : vector<16x169xi1>, vector<16x169xf32>
    %c0_15 = arith.constant 0 : index
    %c0_16 = arith.constant 0 : index
    %36 = vector.load %arg3[%c0_15, %c0_16] : memref<16x169xf32, #tpu.memory_space<vmem>>, vector<16x169xf32>
    tpu.vector_store %arg3[%c0_15, %c0_16], %35 {strides = array<i32>} : memref<16x169xf32, #tpu.memory_space<vmem>>, vector<16x169xf32>,
    %c0_17 = arith.constant 0 : index
    %c0_18 = arith.constant 0 : index
    %c0_19 = arith.constant 0 : index
    %c0_20 = arith.constant 0 : index
    %37 = vector.load %arg2[%c0_17, %c0_18, %c0_19, %c0_20] : memref<2x2x16x196xf32, #tpu.memory_space<vmem>>, vector<1x1x16x196xf32>
    %38 = vector.shape_cast %37 : vector<1x1x16x196xf32> to vector<16x196xf32>
    %c0_21 = arith.constant 0 : index
    %c1_22 = arith.constant 1 : index
    %c0_23 = arith.constant 0 : index
    %c0_24 = arith.constant 0 : index
    %39 = vector.load %arg2[%c0_21, %c1_22, %c0_23, %c0_24] : memref<2x2x16x196xf32, #tpu.memory_space<vmem>>, vector<1x1x16x196xf32>
    %40 = vector.shape_cast %39 : vector<1x1x16x196xf32> to vector<16x196xf32>
    %c1_25 = arith.constant 1 : index
    %c0_26 = arith.constant 0 : index
    %c0_27 = arith.constant 0 : index
    %c0_28 = arith.constant 0 : index
    %41 = vector.load %arg2[%c1_25, %c0_26, %c0_27, %c0_28] : memref<2x2x16x196xf32, #tpu.memory_space<vmem>>, vector<1x1x16x196xf32>
    %42 = vector.shape_cast %41 : vector<1x1x16x196xf32> to vector<16x196xf32>
    %c1_29 = arith.constant 1 : index
    %c1_30 = arith.constant 1 : index
    %c0_31 = arith.constant 0 : index
    %c0_32 = arith.constant 0 : index
    %43 = vector.load %arg2[%c1_29, %c1_30, %c0_31, %c0_32] : memref<2x2x16x196xf32, #tpu.memory_space<vmem>>, vector<1x1x16x196xf32>
    %44 = vector.shape_cast %43 : vector<1x1x16x196xf32> to vector<16x196xf32>
    %45 = vector.extract_strided_slice %38 {offsets = [0, 1], sizes = [16, 195], strides = [1, 1]} : vector<16x196xf32> to vector<16x195xf32>
    %46 = vector.extract_strided_slice %38 {offsets = [0, 0], sizes = [16, 1], strides = [1, 1]} : vector<16x196xf32> to vector<16x1xf32>
    %47 = tpu.concatenate %45, %46 in 1 : vector<16x195xf32>, vector<16x1xf32> -> vector<16x196xf32>
    %48 = vector.extract_strided_slice %40 {offsets = [0, 1], sizes = [16, 195], strides = [1, 1]} : vector<16x196xf32> to vector<16x195xf32>
    %49 = vector.extract_strided_slice %40 {offsets = [0, 0], sizes = [16, 1], strides = [1, 1]} : vector<16x196xf32> to vector<16x1xf32>
    %50 = tpu.concatenate %48, %49 in 1 : vector<16x195xf32>, vector<16x1xf32> -> vector<16x196xf32>
    %51 = vector.extract_strided_slice %38 {offsets = [0, 2], sizes = [16, 194], strides = [1, 1]} : vector<16x196xf32> to vector<16x194xf32>
    %52 = vector.extract_strided_slice %38 {offsets = [0, 0], sizes = [16, 2], strides = [1, 1]} : vector<16x196xf32> to vector<16x2xf32>
    %53 = tpu.concatenate %51, %52 in 1 : vector<16x194xf32>, vector<16x2xf32> -> vector<16x196xf32>
    %54 = vector.extract_strided_slice %42 {offsets = [0, 1], sizes = [16, 195], strides = [1, 1]} : vector<16x196xf32> to vector<16x195xf32>
    %55 = vector.extract_strided_slice %42 {offsets = [0, 0], sizes = [16, 1], strides = [1, 1]} : vector<16x196xf32> to vector<16x1xf32>
    %56 = tpu.concatenate %54, %55 in 1 : vector<16x195xf32>, vector<16x1xf32> -> vector<16x196xf32>
    %57 = vector.extract_strided_slice %44 {offsets = [0, 1], sizes = [16, 195], strides = [1, 1]} : vector<16x196xf32> to vector<16x195xf32>
    %58 = vector.extract_strided_slice %44 {offsets = [0, 0], sizes = [16, 1], strides = [1, 1]} : vector<16x196xf32> to vector<16x1xf32>
    %59 = tpu.concatenate %57, %58 in 1 : vector<16x195xf32>, vector<16x1xf32> -> vector<16x196xf32>
    %60 = vector.extract_strided_slice %42 {offsets = [0, 2], sizes = [16, 194], strides = [1, 1]} : vector<16x196xf32> to vector<16x194xf32>
    %61 = vector.extract_strided_slice %42 {offsets = [0, 0], sizes = [16, 2], strides = [1, 1]} : vector<16x196xf32> to vector<16x2xf32>
    %62 = tpu.concatenate %60, %61 in 1 : vector<16x194xf32>, vector<16x2xf32> -> vector<16x196xf32>
    %63 = vector.extract_strided_slice %38 {offsets = [0, 14], sizes = [16, 182], strides = [1, 1]} : vector<16x196xf32> to vector<16x182xf32>
    %64 = vector.extract_strided_slice %38 {offsets = [0, 0], sizes = [16, 14], strides = [1, 1]} : vector<16x196xf32> to vector<16x14xf32>
    %65 = tpu.concatenate %63, %64 in 1 : vector<16x182xf32>, vector<16x14xf32> -> vector<16x196xf32>
    %66 = vector.extract_strided_slice %40 {offsets = [0, 14], sizes = [16, 182], strides = [1, 1]} : vector<16x196xf32> to vector<16x182xf32>
    %67 = vector.extract_strided_slice %40 {offsets = [0, 0], sizes = [16, 14], strides = [1, 1]} : vector<16x196xf32> to vector<16x14xf32>
    %68 = tpu.concatenate %66, %67 in 1 : vector<16x182xf32>, vector<16x14xf32> -> vector<16x196xf32>
    %69 = vector.extract_strided_slice %38 {offsets = [0, 15], sizes = [16, 181], strides = [1, 1]} : vector<16x196xf32> to vector<16x181xf32>
    %70 = vector.extract_strided_slice %38 {offsets = [0, 0], sizes = [16, 15], strides = [1, 1]} : vector<16x196xf32> to vector<16x15xf32>
    %71 = tpu.concatenate %69, %70 in 1 : vector<16x181xf32>, vector<16x15xf32> -> vector<16x196xf32>
    %72 = vector.extract_strided_slice %40 {offsets = [0, 15], sizes = [16, 181], strides = [1, 1]} : vector<16x196xf32> to vector<16x181xf32>
    %73 = vector.extract_strided_slice %40 {offsets = [0, 0], sizes = [16, 15], strides = [1, 1]} : vector<16x196xf32> to vector<16x15xf32>
    %74 = tpu.concatenate %72, %73 in 1 : vector<16x181xf32>, vector<16x15xf32> -> vector<16x196xf32>
    %75 = vector.extract_strided_slice %38 {offsets = [0, 16], sizes = [16, 180], strides = [1, 1]} : vector<16x196xf32> to vector<16x180xf32>
    %76 = vector.extract_strided_slice %38 {offsets = [0, 0], sizes = [16, 16], strides = [1, 1]} : vector<16x196xf32> to vector<16x16xf32>
    %77 = tpu.concatenate %75, %76 in 1 : vector<16x180xf32>, vector<16x16xf32> -> vector<16x196xf32>
    %78 = vector.extract_strided_slice %42 {offsets = [0, 14], sizes = [16, 182], strides = [1, 1]} : vector<16x196xf32> to vector<16x182xf32>
    %79 = vector.extract_strided_slice %42 {offsets = [0, 0], sizes = [16, 14], strides = [1, 1]} : vector<16x196xf32> to vector<16x14xf32>
    %80 = tpu.concatenate %78, %79 in 1 : vector<16x182xf32>, vector<16x14xf32> -> vector<16x196xf32>
    %81 = vector.extract_strided_slice %44 {offsets = [0, 14], sizes = [16, 182], strides = [1, 1]} : vector<16x196xf32> to vector<16x182xf32>
    %82 = vector.extract_strided_slice %44 {offsets = [0, 0], sizes = [16, 14], strides = [1, 1]} : vector<16x196xf32> to vector<16x14xf32>
    %83 = tpu.concatenate %81, %82 in 1 : vector<16x182xf32>, vector<16x14xf32> -> vector<16x196xf32>
    %84 = vector.extract_strided_slice %42 {offsets = [0, 15], sizes = [16, 181], strides = [1, 1]} : vector<16x196xf32> to vector<16x181xf32>
    %85 = vector.extract_strided_slice %42 {offsets = [0, 0], sizes = [16, 15], strides = [1, 1]} : vector<16x196xf32> to vector<16x15xf32>
    %86 = tpu.concatenate %84, %85 in 1 : vector<16x181xf32>, vector<16x15xf32> -> vector<16x196xf32>
    %87 = vector.extract_strided_slice %44 {offsets = [0, 15], sizes = [16, 181], strides = [1, 1]} : vector<16x196xf32> to vector<16x181xf32>
    %88 = vector.extract_strided_slice %44 {offsets = [0, 0], sizes = [16, 15], strides = [1, 1]} : vector<16x196xf32> to vector<16x15xf32>
    %89 = tpu.concatenate %87, %88 in 1 : vector<16x181xf32>, vector<16x15xf32> -> vector<16x196xf32>
    %90 = vector.extract_strided_slice %42 {offsets = [0, 16], sizes = [16, 180], strides = [1, 1]} : vector<16x196xf32> to vector<16x180xf32>
    %91 = vector.extract_strided_slice %42 {offsets = [0, 0], sizes = [16, 16], strides = [1, 1]} : vector<16x196xf32> to vector<16x16xf32>
    %92 = tpu.concatenate %90, %91 in 1 : vector<16x180xf32>, vector<16x16xf32> -> vector<16x196xf32>
    %93 = vector.extract_strided_slice %38 {offsets = [0, 28], sizes = [16, 168], strides = [1, 1]} : vector<16x196xf32> to vector<16x168xf32>
    %94 = vector.extract_strided_slice %38 {offsets = [0, 0], sizes = [16, 28], strides = [1, 1]} : vector<16x196xf32> to vector<16x28xf32>
    %95 = tpu.concatenate %93, %94 in 1 : vector<16x168xf32>, vector<16x28xf32> -> vector<16x196xf32>
    %96 = vector.extract_strided_slice %40 {offsets = [0, 28], sizes = [16, 168], strides = [1, 1]} : vector<16x196xf32> to vector<16x168xf32>
    %97 = vector.extract_strided_slice %40 {offsets = [0, 0], sizes = [16, 28], strides = [1, 1]} : vector<16x196xf32> to vector<16x28xf32>
    %98 = tpu.concatenate %96, %97 in 1 : vector<16x168xf32>, vector<16x28xf32> -> vector<16x196xf32>
    %99 = vector.extract_strided_slice %38 {offsets = [0, 29], sizes = [16, 167], strides = [1, 1]} : vector<16x196xf32> to vector<16x167xf32>
    %100 = vector.extract_strided_slice %38 {offsets = [0, 0], sizes = [16, 29], strides = [1, 1]} : vector<16x196xf32> to vector<16x29xf32>
    %101 = tpu.concatenate %99, %100 in 1 : vector<16x167xf32>, vector<16x29xf32> -> vector<16x196xf32>
    %102 = vector.extract_strided_slice %40 {offsets = [0, 29], sizes = [16, 167], strides = [1, 1]} : vector<16x196xf32> to vector<16x167xf32>
    %103 = vector.extract_strided_slice %40 {offsets = [0, 0], sizes = [16, 29], strides = [1, 1]} : vector<16x196xf32> to vector<16x29xf32>
    %104 = tpu.concatenate %102, %103 in 1 : vector<16x167xf32>, vector<16x29xf32> -> vector<16x196xf32>
    %105 = vector.extract_strided_slice %38 {offsets = [0, 30], sizes = [16, 166], strides = [1, 1]} : vector<16x196xf32> to vector<16x166xf32>
    %106 = vector.extract_strided_slice %38 {offsets = [0, 0], sizes = [16, 30], strides = [1, 1]} : vector<16x196xf32> to vector<16x30xf32>
    %107 = tpu.concatenate %105, %106 in 1 : vector<16x166xf32>, vector<16x30xf32> -> vector<16x196xf32>
    %108 = arith.maximumf %38, %40 : vector<16x196xf32>
    %109 = arith.maximumf %47, %50 : vector<16x196xf32>
    %110 = arith.maximumf %53, %42 : vector<16x196xf32>
    %111 = arith.maximumf %44, %56 : vector<16x196xf32>
    %112 = arith.maximumf %59, %62 : vector<16x196xf32>
    %113 = arith.maximumf %65, %68 : vector<16x196xf32>
    %114 = arith.maximumf %71, %74 : vector<16x196xf32>
    %115 = arith.maximumf %77, %80 : vector<16x196xf32>
    %116 = arith.maximumf %83, %86 : vector<16x196xf32>
    %117 = arith.maximumf %89, %92 : vector<16x196xf32>
    %118 = arith.maximumf %95, %98 : vector<16x196xf32>
    %119 = arith.maximumf %101, %104 : vector<16x196xf32>
    %120 = arith.maximumf %108, %109 : vector<16x196xf32>
    %121 = arith.maximumf %110, %111 : vector<16x196xf32>
    %122 = arith.maximumf %112, %113 : vector<16x196xf32>
    %123 = arith.maximumf %114, %115 : vector<16x196xf32>
    %124 = arith.maximumf %116, %117 : vector<16x196xf32>
    %125 = arith.maximumf %118, %119 : vector<16x196xf32>
    %126 = arith.maximumf %120, %121 : vector<16x196xf32>
    %127 = arith.maximumf %122, %123 : vector<16x196xf32>
    %128 = arith.maximumf %124, %125 : vector<16x196xf32>
    %129 = arith.maximumf %126, %127 : vector<16x196xf32>
    %130 = arith.maximumf %128, %107 : vector<16x196xf32>
    %131 = arith.maximumf %129, %130 : vector<16x196xf32>
    %cst_33 = arith.constant 0.000000e+00 : f32
    %132 = vector.broadcast %cst_33 : f32 to vector<16x196xf32>
    %133 = arith.cmpf ogt, %131, %132 : vector<16x196xf32>
    %cst_34 = arith.constant 0.00999999977 : f32
    %134 = vector.broadcast %cst_34 : f32 to vector<16x196xf32>
    %135 = arith.mulf %134, %131 : vector<16x196xf32>
    %136 = arith.select %133, %131, %135 : vector<16x196xi1>, vector<16x196xf32>
    %c0_35 = arith.constant 0 : index
    %c0_36 = arith.constant 0 : index
    %137 = vector.load %arg4[%c0_35, %c0_36] : memref<16x196xf32, #tpu.memory_space<vmem>>, vector<16x196xf32>
    tpu.vector_store %arg4[%c0_35, %c0_36], %136 {strides = array<i32>} : memref<16x196xf32, #tpu.memory_space<vmem>>, vector<16x196xf32>,
    return
  }
  func.func @transform_0(%arg0: i32) -> (i32, i32, i32, i32) {
    %c0_i32 = arith.constant 0 : i32
    %c0_i32_0 = arith.constant 0 : i32
    %c0_i32_1 = arith.constant 0 : i32
    %c0_i32_2 = arith.constant 0 : i32
    return %c0_i32, %c0_i32_0, %arg0, %c0_i32_1 : i32, i32, i32, i32
  }
  func.func @transform_1(%arg0: i32) -> (i32, i32, i32, i32) {
    %c0_i32 = arith.constant 0 : i32
    %c0_i32_0 = arith.constant 0 : i32
    %c0_i32_1 = arith.constant 0 : i32
    %c0_i32_2 = arith.constant 0 : i32
    return %c0_i32, %c0_i32_0, %arg0, %c0_i32_1 : i32, i32, i32, i32
  }
  func.func @transform_2(%arg0: i32) -> (i32, i32) {
    %c0_i32 = arith.constant 0 : i32
    %c0_i32_0 = arith.constant 0 : i32
    return %arg0, %c0_i32 : i32, i32
  }
  func.func @transform_3(%arg0: i32) -> (i32, i32) {
    %c0_i32 = arith.constant 0 : i32
    %c0_i32_0 = arith.constant 0 : i32
    return %arg0, %c0_i32 : i32, i32
  }
}

module attributes {stable_mosaic.version = 11 : i64} {
  func.func @_head_kernel(%arg0: memref<64x484xbf16, #tpu.memory_space<vmem>>, %arg1: memref<484x32xbf16, #tpu.memory_space<vmem>>, %arg2: memref<64x1xf32, #tpu.memory_space<vmem>>, %arg3: memref<64x1xf32, #tpu.memory_space<vmem>>, %arg4: memref<64x32xf32, #tpu.memory_space<vmem>>) attributes {dimension_semantics = [], scalar_prefetch = 0 : i64, scratch_operands = 0 : i64, tpu.core_type = #tpu.core_type<tc>} {
    %c0 = arith.constant 0 : index
    %c0_0 = arith.constant 0 : index
    %0 = vector.load %arg0[%c0, %c0_0] : memref<64x484xbf16, #tpu.memory_space<vmem>>, vector<64x484xbf16>
    %c0_1 = arith.constant 0 : index
    %c0_2 = arith.constant 0 : index
    %1 = vector.load %arg1[%c0_1, %c0_2] : memref<484x32xbf16, #tpu.memory_space<vmem>>, vector<484x32xbf16>
    %cst = arith.constant dense<0.000000e+00> : vector<64x32xf32>
    %2 = tpu.matmul %0, %1, %cst {dimension_numbers = #tpu.dot_dimension_numbers<[1], [0], [0], [1], [0, 0, 1, 1], [], []>} : vector<64x484xbf16>, vector<484x32xbf16>, vector<64x32xf32> -> vector<64x32xf32>
    %c0_3 = arith.constant 0 : index
    %c0_4 = arith.constant 0 : index
    %3 = vector.load %arg2[%c0_3, %c0_4] : memref<64x1xf32, #tpu.memory_space<vmem>>, vector<64x1xf32>
    %4 = vector.broadcast %3 : vector<64x1xf32> to vector<64x32xf32>
    %5 = arith.mulf %2, %4 : vector<64x32xf32>
    %c0_5 = arith.constant 0 : index
    %c0_6 = arith.constant 0 : index
    %6 = vector.load %arg3[%c0_5, %c0_6] : memref<64x1xf32, #tpu.memory_space<vmem>>, vector<64x1xf32>
    %7 = vector.broadcast %6 : vector<64x1xf32> to vector<64x32xf32>
    %8 = arith.addf %5, %7 : vector<64x32xf32>
    %cst_7 = arith.constant 0.000000e+00 : f32
    %9 = vector.broadcast %cst_7 : f32 to vector<64x32xf32>
    %10 = arith.cmpf ogt, %8, %9 : vector<64x32xf32>
    %cst_8 = arith.constant 0.00999999977 : f32
    %11 = vector.broadcast %cst_8 : f32 to vector<64x32xf32>
    %12 = arith.mulf %11, %8 : vector<64x32xf32>
    %13 = arith.select %10, %8, %12 : vector<64x32xi1>, vector<64x32xf32>
    %c0_9 = arith.constant 0 : index
    %c0_10 = arith.constant 0 : index
    %14 = vector.load %arg4[%c0_9, %c0_10] : memref<64x32xf32, #tpu.memory_space<vmem>>, vector<64x32xf32>
    tpu.vector_store %arg4[%c0_9, %c0_10], %13 {strides = array<i32>} : memref<64x32xf32, #tpu.memory_space<vmem>>, vector<64x32xf32>,
    return
  }
}

</mosaic_0001>

<llo_original>
// kernel: _lambda_.6
$region0: #{_lambda_.6}
  #allocation0 [shape = 'u32[]', space=smem, size = 0x4, offset = 0x4, fixed_abs, tag = 'smem constant byte address 0x4 - core index']
  #allocation1 [shape = 'u32[72,128]{1,0:T(1,128)}', space=vmem, size = 0x9000, scoped, tag = 'internal scratch']
  %s0 = inlined_call_operand.vmem [shape: bf16[8,48,48], index: 0, kind: input, shape index: {}]
  %s1 = inlined_call_operand.vmem [shape: bf16[8,48,8], index: 1, kind: input, shape index: {}]
  %s2 = inlined_call_operand.vmem [shape: bf16[8,8,48], index: 2, kind: input, shape index: {}]
  %s3 = inlined_call_operand.vmem [shape: f32[8,8,8], index: 3, kind: output, shape index: {}]
  %s4 = sld [smem:[#allocation0]]
  $region22: #{_lambda_.6} parent=0
    _
  %s6 = ssub.s32 1, %s4
  %s7 = scalar_select 0, %s6, %s4
  // Predicated region
  $region2: #{_lambda_.6} parent=0 // pred_check
    _
  $region3: #{_lambda_.6} parent=0 // pred_check_branch
    %9 = sbr.rel (0) target = $region5
  $region4: #{_lambda_.6} parent=0 // pred_region
    _
  $region5: #{_lambda_.6} parent=0 // pred_fallthru
    _
  // Predicated region
  $region6: #{_lambda_.6} parent=0 // pred_check
    _
  $region7: #{_lambda_.6} parent=0 // pred_check_branch
    %11 = sbr.rel (0) target = $region9
  $region8: #{_lambda_.6} parent=0 // pred_region
    _
  $region9: #{_lambda_.6} parent=0 // pred_fallthru
    _
  // Predicated region
  $region10: #{_lambda_.6} parent=0 // pred_check
    _
  $region11: #{_lambda_.6} parent=0 // pred_check_branch
    %13 = sbr.rel (0) target = $region13
  $region12: #{_lambda_.6} parent=0 // pred_region
    _
  $region13: #{_lambda_.6} parent=0 // pred_fallthru
    _
  %v15 = vld [vmem:[%s0] sm:$0xf]
  %v16 = vld [vmem:[%s0 + $0x4] sm:$0xf]
  %v17 = vld [vmem:[%s0 + $0x8] sm:$0xf]
  %v18 = vld [vmem:[%s0 + $0xc] sm:$0xf]
  %v19 = vld [vmem:[%s0 + $0x10] sm:$0xf]
  %v20 = vld [vmem:[%s0 + $0x14] sm:$0xf]
  %v21 = vld [vmem:[%s0 + $0x18] sm:$0xf]
  %v22 = vld [vmem:[%s0 + $0x1c] sm:$0xf]
  %v23 = vld [vmem:[%s0 + $0x20] sm:$0xf]
  %v24 = vld [vmem:[%s0 + $0x24] sm:$0xf]
  %v25 = vld [vmem:[%s0 + $0x28] sm:$0xf]
  %v26 = vld [vmem:[%s0 + $0x2c] sm:$0xf]
  %v27 = vld [vmem:[%s0 + $0x30] sm:$0xf]
  %v28 = vld [vmem:[%s0 + $0x34] sm:$0xf]
  %v29 = vld [vmem:[%s0 + $0x38] sm:$0xf]
  %v30 = vld [vmem:[%s0 + $0x3c] sm:$0xf]
  %v31 = vld [vmem:[%s0 + $0x40] sm:$0xf]
  %v32 = vld [vmem:[%s0 + $0x44] sm:$0xf]
  %v33 = vld [vmem:[%s0 + $0x48] sm:$0xf]
  %v34 = vld [vmem:[%s0 + $0x4c] sm:$0xf]
  %v35 = vld [vmem:[%s0 + $0x50] sm:$0xf]
  %v36 = vld [vmem:[%s0 + $0x54] sm:$0xf]
  %v37 = vld [vmem:[%s0 + $0x58] sm:$0xf]
  %v38 = vld [vmem:[%s0 + $0x5c] sm:$0xf]
  %v39 = vld [vmem:[%s0 + $0x60] sm:$0xf]
  %v40 = vld [vmem:[%s0 + $0x64] sm:$0xf]
  %v41 = vld [vmem:[%s0 + $0x68] sm:$0xf]
  %v42 = vld [vmem:[%s0 + $0x6c] sm:$0xf]
  %v43 = vld [vmem:[%s0 + $0x70] sm:$0xf]
  %v44 = vld [vmem:[%s0 + $0x74] sm:$0xf]
  %v45 = vld [vmem:[%s0 + $0x78] sm:$0xf]
  %v46 = vld [vmem:[%s0 + $0x7c] sm:$0xf]
  %v47 = vld [vmem:[%s0 + $0x80] sm:$0xf]
  %v48 = vld [vmem:[%s0 + $0x84] sm:$0xf]
  %v49 = vld [vmem:[%s0 + $0x88] sm:$0xf]
  %v50 = vld [vmem:[%s0 + $0x8c] sm:$0xf]
  %v51 = vld [vmem:[%s0 + $0x90] sm:$0xf]
  %v52 = vld [vmem:[%s0 + $0x94] sm:$0xf]
  %v53 = vld [vmem:[%s0 + $0x98] sm:$0xf]
  %v54 = vld [vmem:[%s0 + $0x9c] sm:$0xf]
  %v55 = vld [vmem:[%s0 + $0xa0] sm:$0xf]
  %v56 = vld [vmem:[%s0 + $0xa4] sm:$0xf]
  %v57 = vld [vmem:[%s0 + $0xa8] sm:$0xf]
  %v58 = vld [vmem:[%s0 + $0xac] sm:$0xf]
  %v59 = vld [vmem:[%s0 + $0xb0] sm:$0xf]
  %v60 = vld [vmem:[%s0 + $0xb4] sm:$0xf]
  %v61 = vld [vmem:[%s0 + $0xb8] sm:$0xf]
  %v62 = vld [vmem:[%s0 + $0xbc] sm:$0xf]
  %v63 = vld [vmem:[%s1] sm:$0xf]
  %v64 = vld [vmem:[%s1 + $0x4] sm:$0xf]
  %v65 = vld [vmem:[%s1 + $0x8] sm:$0xf]
  %v66 = vld [vmem:[%s1 + $0xc] sm:$0xf]
  %v67 = vld [vmem:[%s1 + $0x10] sm:$0xf]
  %v68 = vld [vmem:[%s1 + $0x14] sm:$0xf]
  %v69 = vld [vmem:[%s1 + $0x18] sm:$0xf]
  %v70 = vld [vmem:[%s1 + $0x1c] sm:$0xf]
  %v71 = vld [vmem:[%s1 + $0x20] sm:$0xf]
  %v72 = vld [vmem:[%s1 + $0x24] sm:$0xf]
  %v73 = vld [vmem:[%s1 + $0x28] sm:$0xf]
  %v74 = vld [vmem:[%s1 + $0x2c] sm:$0xf]
  %v75 = vld [vmem:[%s1 + $0x30] sm:$0xf]
  %v76 = vld [vmem:[%s1 + $0x34] sm:$0xf]
  %v77 = vld [vmem:[%s1 + $0x38] sm:$0xf]
  %v78 = vld [vmem:[%s1 + $0x3c] sm:$0xf]
  %v79 = vld [vmem:[%s1 + $0x40] sm:$0xf]
  %v80 = vld [vmem:[%s1 + $0x44] sm:$0xf]
  %v81 = vld [vmem:[%s1 + $0x48] sm:$0xf]
  %v82 = vld [vmem:[%s1 + $0x4c] sm:$0xf]
  %v83 = vld [vmem:[%s1 + $0x50] sm:$0xf]
  %v84 = vld [vmem:[%s1 + $0x54] sm:$0xf]
  %v85 = vld [vmem:[%s1 + $0x58] sm:$0xf]
  %v86 = vld [vmem:[%s1 + $0x5c] sm:$0xf]
  %v87 = vld [vmem:[%s1 + $0x60] sm:$0xf]
  %v88 = vld [vmem:[%s1 + $0x64] sm:$0xf]
  %v89 = vld [vmem:[%s1 + $0x68] sm:$0xf]
  %v90 = vld [vmem:[%s1 + $0x6c] sm:$0xf]
  %v91 = vld [vmem:[%s1 + $0x70] sm:$0xf]
  %v92 = vld [vmem:[%s1 + $0x74] sm:$0xf]
  %v93 = vld [vmem:[%s1 + $0x78] sm:$0xf]
  %v94 = vld [vmem:[%s1 + $0x7c] sm:$0xf]
  %v95 = vld [vmem:[%s1 + $0x80] sm:$0xf]
  %v96 = vld [vmem:[%s1 + $0x84] sm:$0xf]
  %v97 = vld [vmem:[%s1 + $0x88] sm:$0xf]
  %v98 = vld [vmem:[%s1 + $0x8c] sm:$0xf]
  %v99 = vld [vmem:[%s1 + $0x90] sm:$0xf]
  %v100 = vld [vmem:[%s1 + $0x94] sm:$0xf]
  %v101 = vld [vmem:[%s1 + $0x98] sm:$0xf]
  %v102 = vld [vmem:[%s1 + $0x9c] sm:$0xf]
  %v103 = vld [vmem:[%s1 + $0xa0] sm:$0xf]
  %v104 = vld [vmem:[%s1 + $0xa4] sm:$0xf]
  %v105 = vld [vmem:[%s1 + $0xa8] sm:$0xf]
  %v106 = vld [vmem:[%s1 + $0xac] sm:$0xf]
  %v107 = vld [vmem:[%s1 + $0xb0] sm:$0xf]
  %v108 = vld [vmem:[%s1 + $0xb4] sm:$0xf]
  %v109 = vld [vmem:[%s1 + $0xb8] sm:$0xf]
  %v110 = vld [vmem:[%s1 + $0xbc] sm:$0xf]
  %v117 = vunpack.c.l.b16 %v15
  %v118 = vunpack.c.l.b16 %v16
  %v119 = vunpack.c.l.b16 %v17
  %v120 = vunpack.c.l.b16 %v18
  %v121 = vunpack.c.l.b16 %v19
  %v122 = vunpack.c.l.b16 %v20
  %v123 = vpack.c.b16 %v118, %v117
  %v124 = vpack.c.b16 %v120, %v119
  %v125 = vpack.c.b16 %v122, %v121
  %v132 = vunpack.c.l.b16 %v63
  %v133 = vunpack.c.l.b16 %v64
  %v134 = vunpack.c.l.b16 %v65
  %v135 = vunpack.c.l.b16 %v66
  %v136 = vunpack.c.l.b16 %v67
  %v137 = vunpack.c.l.b16 %v68
  %v138 = vpack.c.b16 %v133, %v132
  %v139 = vpack.c.b16 %v135, %v134
  %v140 = vpack.c.b16 %v137, %v136
  %vm144 = vcmask 392192
  %v146 = vsel %vm144, %v123, 0
  %v149 = vsel %vm144, %v124, 0
  %v152 = vsel %vm144, %v125, 0
  %154 = vmatpush.bf16.msra.mxu0 0
  %155 = vmatpush.bf16.msra.mxu0 0
  %156 = vmatpush.bf16.msra.mxu0 0
  %157 = vmatpush.bf16.msra.mxu0 0
  %158 = vmatpush.bf16.msra.mxu0 0
  %159 = vmatpush.bf16.msra.mxu0 %v140
  %160 = vmatpush.bf16.msra.mxu0 %v139
  %161 = vmatpush.bf16.msra.mxu0 %v138
  %162 = vmatmul.bf16.gmra.mxu0 %v146
  %v163 = vpop.f32.mrf.mxu0
  %v164 = vadd.f32 0.0, %v163
  %v165 = vpop.f32.mrf.mxu0
  %v166 = vadd.f32 0.0, %v165
  %167 = vmatmul.bf16.gmra.mxu0 %v149
  %v168 = vpop.f32.mrf.mxu0
  %v169 = vadd.f32 0.0, %v168
  %v170 = vpop.f32.mrf.mxu0
  %v171 = vadd.f32 0.0, %v170
  %172 = vmatmul.bf16.gmra.mxu0 %v152
  %v173 = vpop.f32.mrf.mxu0
  %v174 = vadd.f32 0.0, %v173
  %v175 = vpop.f32.mrf.mxu0
  %v176 = vadd.f32 0.0, %v175
  %177 = vdwg.mxu0
  %v184 = vunpack.c.l.b16 %v21
  %v185 = vunpack.c.l.b16 %v22
  %v186 = vunpack.c.l.b16 %v23
  %v187 = vunpack.c.l.b16 %v24
  %v188 = vunpack.c.l.b16 %v25
  %v189 = vunpack.c.l.b16 %v26
  %v190 = vpack.c.b16 %v185, %v184
  %v191 = vpack.c.b16 %v187, %v186
  %v192 = vpack.c.b16 %v189, %v188
  %v199 = vunpack.c.l.b16 %v69
  %v200 = vunpack.c.l.b16 %v70
  %v201 = vunpack.c.l.b16 %v71
  %v202 = vunpack.c.l.b16 %v72
  %v203 = vunpack.c.l.b16 %v73
  %v204 = vunpack.c.l.b16 %v74
  %v205 = vpack.c.b16 %v200, %v199
  %v206 = vpack.c.b16 %v202, %v201
  %v207 = vpack.c.b16 %v204, %v203
  %v212 = vsel %vm144, %v190, 0
  %v215 = vsel %vm144, %v191, 0
  %v218 = vsel %vm144, %v192, 0
  %220 = vmatpush.bf16.msra.mxu0 0
  %221 = vmatpush.bf16.msra.mxu0 0
  %222 = vmatpush.bf16.msra.mxu0 0
  %223 = vmatpush.bf16.msra.mxu0 0
  %224 = vmatpush.bf16.msra.mxu0 0
  %225 = vmatpush.bf16.msra.mxu0 %v207
  %226 = vmatpush.bf16.msra.mxu0 %v206
  %227 = vmatpush.bf16.msra.mxu0 %v205
  %228 = vmatmul.bf16.gmra.mxu0 %v212
  %v229 = vpop.f32.mrf.mxu0
  %v230 = vadd.f32 0.0, %v229
  %v231 = vpop.f32.mrf.mxu0
  %v232 = vadd.f32 0.0, %v231
  %233 = vmatmul.bf16.gmra.mxu0 %v215
  %v234 = vpop.f32.mrf.mxu0
  %v235 = vadd.f32 0.0, %v234
  %v236 = vpop.f32.mrf.mxu0
  %v237 = vadd.f32 0.0, %v236
  %238 = vmatmul.bf16.gmra.mxu0 %v218
  %v239 = vpop.f32.mrf.mxu0
  %v240 = vadd.f32 0.0, %v239
  %v241 = vpop.f32.mrf.mxu0
  %v242 = vadd.f32 0.0, %v241
  %243 = vdwg.mxu0
  %v250 = vunpack.c.l.b16 %v27
  %v251 = vunpack.c.l.b16 %v28
  %v252 = vunpack.c.l.b16 %v29
  %v253 = vunpack.c.l.b16 %v30
  %v254 = vunpack.c.l.b16 %v31
  %v255 = vunpack.c.l.b16 %v32
  %v256 = vpack.c.b16 %v251, %v250
  %v257 = vpack.c.b16 %v253, %v252
  %v258 = vpack.c.b16 %v255, %v254
  %v265 = vunpack.c.l.b16 %v75
  %v266 = vunpack.c.l.b16 %v76
  %v267 = vunpack.c.l.b16 %v77
  %v268 = vunpack.c.l.b16 %v78
  %v269 = vunpack.c.l.b16 %v79
  %v270 = vunpack.c.l.b16 %v80
  %v271 = vpack.c.b16 %v266, %v265
  %v272 = vpack.c.b16 %v268, %v267
  %v273 = vpack.c.b16 %v270, %v269
  %v278 = vsel %vm144, %v256, 0
  %v281 = vsel %vm144, %v257, 0
  %v284 = vsel %vm144, %v258, 0
  %286 = vmatpush.bf16.msra.mxu0 0
  %287 = vmatpush.bf16.msra.mxu0 0
  %288 = vmatpush.bf16.msra.mxu0 0
  %289 = vmatpush.bf16.msra.mxu0 0
  %290 = vmatpush.bf16.msra.mxu0 0
  %291 = vmatpush.bf16.msra.mxu0 %v273
  %292 = vmatpush.bf16.msra.mxu0 %v272
  %293 = vmatpush.bf16.msra.mxu0 %v271
  %294 = vmatmul.bf16.gmra.mxu0 %v278
  %v295 = vpop.f32.mrf.mxu0
  %v296 = vadd.f32 0.0, %v295
  %v297 = vpop.f32.mrf.mxu0
  %v298 = vadd.f32 0.0, %v297
  %299 = vmatmul.bf16.gmra.mxu0 %v281
  %v300 = vpop.f32.mrf.mxu0
  %v301 = vadd.f32 0.0, %v300
  %v302 = vpop.f32.mrf.mxu0
  %v303 = vadd.f32 0.0, %v302
  %304 = vmatmul.bf16.gmra.mxu0 %v284
  %v305 = vpop.f32.mrf.mxu0
  %v306 = vadd.f32 0.0, %v305
  %v307 = vpop.f32.mrf.mxu0
  %v308 = vadd.f32 0.0, %v307
  %309 = vdwg.mxu0
  %v316 = vunpack.c.l.b16 %v33
  %v317 = vunpack.c.l.b16 %v34
  %v318 = vunpack.c.l.b16 %v35
  %v319 = vunpack.c.l.b16 %v36
  %v320 = vunpack.c.l.b16 %v37
  %v321 = vunpack.c.l.b16 %v38
  %v322 = vpack.c.b16 %v317, %v316
  %v323 = vpack.c.b16 %v319, %v318
  %v324 = vpack.c.b16 %v321, %v320
  %v331 = vunpack.c.l.b16 %v81
  %v332 = vunpack.c.l.b16 %v82
  %v333 = vunpack.c.l.b16 %v83
  %v334 = vunpack.c.l.b16 %v84
  %v335 = vunpack.c.l.b16 %v85
  %v336 = vunpack.c.l.b16 %v86
  %v337 = vpack.c.b16 %v332, %v331
  %v338 = vpack.c.b16 %v334, %v333
  %v339 = vpack.c.b16 %v336, %v335
  %v344 = vsel %vm144, %v322, 0
  %v347 = vsel %vm144, %v323, 0
  %v350 = vsel %vm144, %v324, 0
  %352 = vmatpush.bf16.msra.mxu0 0
  %353 = vmatpush.bf16.msra.mxu0 0
  %354 = vmatpush.bf16.msra.mxu0 0
  %355 = vmatpush.bf16.msra.mxu0 0
  %356 = vmatpush.bf16.msra.mxu0 0
  %357 = vmatpush.bf16.msra.mxu0 %v339
  %358 = vmatpush.bf16.msra.mxu0 %v338
  %359 = vmatpush.bf16.msra.mxu0 %v337
  %360 = vmatmul.bf16.gmra.mxu0 %v344
  %v361 = vpop.f32.mrf.mxu0
  %v362 = vadd.f32 0.0, %v361
  %v363 = vpop.f32.mrf.mxu0
  %v364 = vadd.f32 0.0, %v363
  %365 = vmatmul.bf16.gmra.mxu0 %v347
  %v366 = vpop.f32.mrf.mxu0
  %v367 = vadd.f32 0.0, %v366
  %v368 = vpop.f32.mrf.mxu0
  %v369 = vadd.f32 0.0, %v368
  %370 = vmatmul.bf16.gmra.mxu0 %v350
  %v371 = vpop.f32.mrf.mxu0
  %v372 = vadd.f32 0.0, %v371
  %v373 = vpop.f32.mrf.mxu0
  %v374 = vadd.f32 0.0, %v373
  %375 = vdwg.mxu0
  %v382 = vunpack.c.l.b16 %v39
  %v383 = vunpack.c.l.b16 %v40
  %v384 = vunpack.c.l.b16 %v41
  %v385 = vunpack.c.l.b16 %v42
  %v386 = vunpack.c.l.b16 %v43
  %v387 = vunpack.c.l.b16 %v44
  %v388 = vpack.c.b16 %v383, %v382
  %v389 = vpack.c.b16 %v385, %v384
  %v390 = vpack.c.b16 %v387, %v386
  %v397 = vunpack.c.l.b16 %v87
  %v398 = vunpack.c.l.b16 %v88
  %v399 = vunpack.c.l.b16 %v89
  %v400 = vunpack.c.l.b16 %v90
  %v401 = vunpack.c.l.b16 %v91
  %v402 = vunpack.c.l.b16 %v92
  %v403 = vpack.c.b16 %v398, %v397
  %v404 = vpack.c.b16 %v400, %v399
  %v405 = vpack.c.b16 %v402, %v401
  %v410 = vsel %vm144, %v388, 0
  %v413 = vsel %vm144, %v389, 0
  %v416 = vsel %vm144, %v390, 0
  %418 = vmatpush.bf16.msra.mxu0 0
  %419 = vmatpush.bf16.msra.mxu0 0
  %420 = vmatpush.bf16.msra.mxu0 0
  %421 = vmatpush.bf16.msra.mxu0 0
  %422 = vmatpush.bf16.msra.mxu0 0
  %423 = vmatpush.bf16.msra.mxu0 %v405
  %424 = vmatpush.bf16.msra.mxu0 %v404
  %425 = vmatpush.bf16.msra.mxu0 %v403
  %426 = vmatmul.bf16.gmra.mxu0 %v410
  %v427 = vpop.f32.mrf.mxu0
  %v428 = vadd.f32 0.0, %v427
  %v429 = vpop.f32.mrf.mxu0
  %v430 = vadd.f32 0.0, %v429
  %431 = vmatmul.bf16.gmra.mxu0 %v413
  %v432 = vpop.f32.mrf.mxu0
  %v433 = vadd.f32 0.0, %v432
  %v434 = vpop.f32.mrf.mxu0
  %v435 = vadd.f32 0.0, %v434
  %436 = vmatmul.bf16.gmra.mxu0 %v416
  %v437 = vpop.f32.mrf.mxu0
  %v438 = vadd.f32 0.0, %v437
  %v439 = vpop.f32.mrf.mxu0
  %v440 = vadd.f32 0.0, %v439
  %441 = vdwg.mxu0
  %v448 = vunpack.c.l.b16 %v45
  %v449 = vunpack.c.l.b16 %v46
  %v450 = vunpack.c.l.b16 %v47
  %v451 = vunpack.c.l.b16 %v48
  %v452 = vunpack.c.l.b16 %v49
  %v453 = vunpack.c.l.b16 %v50
  %v454 = vpack.c.b16 %v449, %v448
  %v455 = vpack.c.b16 %v451, %v450
  %v456 = vpack.c.b16 %v453, %v452
  %v463 = vunpack.c.l.b16 %v93
  %v464 = vunpack.c.l.b16 %v94
  %v465 = vunpack.c.l.b16 %v95
  %v466 = vunpack.c.l.b16 %v96
  %v467 = vunpack.c.l.b16 %v97
  %v468 = vunpack.c.l.b16 %v98
  %v469 = vpack.c.b16 %v464, %v463
  %v470 = vpack.c.b16 %v466, %v465
  %v471 = vpack.c.b16 %v468, %v467
  %v476 = vsel %vm144, %v454, 0
  %v479 = vsel %vm144, %v455, 0
  %v482 = vsel %vm144, %v456, 0
  %484 = vmatpush.bf16.msra.mxu0 0
  %485 = vmatpush.bf16.msra.mxu0 0
  %486 = vmatpush.bf16.msra.mxu0 0
  %487 = vmatpush.bf16.msra.mxu0 0
  %488 = vmatpush.bf16.msra.mxu0 0
  %489 = vmatpush.bf16.msra.mxu0 %v471
  %490 = vmatpush.bf16.msra.mxu0 %v470
  %491 = vmatpush.bf16.msra.mxu0 %v469
  %492 = vmatmul.bf16.gmra.mxu0 %v476
  %v493 = vpop.f32.mrf.mxu0
  %v494 = vadd.f32 0.0, %v493
  %v495 = vpop.f32.mrf.mxu0
  %v496 = vadd.f32 0.0, %v495
  %497 = vmatmul.bf16.gmra.mxu0 %v479
  %v498 = vpop.f32.mrf.mxu0
  %v499 = vadd.f32 0.0, %v498
  %v500 = vpop.f32.mrf.mxu0
  %v501 = vadd.f32 0.0, %v500
  %502 = vmatmul.bf16.gmra.mxu0 %v482
  %v503 = vpop.f32.mrf.mxu0
  %v504 = vadd.f32 0.0, %v503
  %v505 = vpop.f32.mrf.mxu0
  %v506 = vadd.f32 0.0, %v505
  %507 = vdwg.mxu0
  %v514 = vunpack.c.l.b16 %v51
  %v515 = vunpack.c.l.b16 %v52
  %v516 = vunpack.c.l.b16 %v53
  %v517 = vunpack.c.l.b16 %v54
  %v518 = vunpack.c.l.b16 %v55
  %v519 = vunpack.c.l.b16 %v56
  %v520 = vpack.c.b16 %v515, %v514
  %v521 = vpack.c.b16 %v517, %v516
  %v522 = vpack.c.b16 %v519, %v518
  %v529 = vunpack.c.l.b16 %v99
  %v530 = vunpack.c.l.b16 %v100
  %v531 = vunpack.c.l.b16 %v101
  %v532 = vunpack.c.l.b16 %v102
  %v533 = vunpack.c.l.b16 %v103
  %v534 = vunpack.c.l.b16 %v104
  %v535 = vpack.c.b16 %v530, %v529
  %v536 = vpack.c.b16 %v532, %v531
  %v537 = vpack.c.b16 %v534, %v533
  %v542 = vsel %vm144, %v520, 0
  %v545 = vsel %vm144, %v521, 0
  %v548 = vsel %vm144, %v522, 0
  %550 = vmatpush.bf16.msra.mxu0 0
  %551 = vmatpush.bf16.msra.mxu0 0
  %552 = vmatpush.bf16.msra.mxu0 0
  %553 = vmatpush.bf16.msra.mxu0 0
  %554 = vmatpush.bf16.msra.mxu0 0
  %555 = vmatpush.bf16.msra.mxu0 %v537
  %556 = vmatpush.bf16.msra.mxu0 %v536
  %557 = vmatpush.bf16.msra.mxu0 %v535
  %558 = vmatmul.bf16.gmra.mxu0 %v542
  %v559 = vpop.f32.mrf.mxu0
  %v560 = vadd.f32 0.0, %v559
  %v561 = vpop.f32.mrf.mxu0
  %v562 = vadd.f32 0.0, %v561
  %563 = vmatmul.bf16.gmra.mxu0 %v545
  %v564 = vpop.f32.mrf.mxu0
  %v565 = vadd.f32 0.0, %v564
  %v566 = vpop.f32.mrf.mxu0
  %v567 = vadd.f32 0.0, %v566
  %568 = vmatmul.bf16.gmra.mxu0 %v548
  %v569 = vpop.f32.mrf.mxu0
  %v570 = vadd.f32 0.0, %v569
  %v571 = vpop.f32.mrf.mxu0
  %v572 = vadd.f32 0.0, %v571
  %573 = vdwg.mxu0
  %v580 = vunpack.c.l.b16 %v57
  %v581 = vunpack.c.l.b16 %v58
  %v582 = vunpack.c.l.b16 %v59
  %v583 = vunpack.c.l.b16 %v60
  %v584 = vunpack.c.l.b16 %v61
  %v585 = vunpack.c.l.b16 %v62
  %v586 = vpack.c.b16 %v581, %v580
  %v587 = vpack.c.b16 %v583, %v582
  %v588 = vpack.c.b16 %v585, %v584
  %v595 = vunpack.c.l.b16 %v105
  %v596 = vunpack.c.l.b16 %v106
  %v597 = vunpack.c.l.b16 %v107
  %v598 = vunpack.c.l.b16 %v108
  %v599 = vunpack.c.l.b16 %v109
  %v600 = vunpack.c.l.b16 %v110
  %v601 = vpack.c.b16 %v596, %v595
  %v602 = vpack.c.b16 %v598, %v597
  %v603 = vpack.c.b16 %v600, %v599
  %v608 = vsel %vm144, %v586, 0
  %v611 = vsel %vm144, %v587, 0
  %v614 = vsel %vm144, %v588, 0
  %616 = vmatpush.bf16.msra.mxu0 0
  %617 = vmatpush.bf16.msra.mxu0 0
  %618 = vmatpush.bf16.msra.mxu0 0
  %619 = vmatpush.bf16.msra.mxu0 0
  %620 = vmatpush.bf16.msra.mxu0 0
  %621 = vmatpush.bf16.msra.mxu0 %v603
  %622 = vmatpush.bf16.msra.mxu0 %v602
  %623 = vmatpush.bf16.msra.mxu0 %v601
  %624 = vmatmul.bf16.gmra.mxu0 %v608
  %v625 = vpop.f32.mrf.mxu0
  %v626 = vadd.f32 0.0, %v625
  %v627 = vpop.f32.mrf.mxu0
  %v628 = vadd.f32 0.0, %v627
  %629 = vmatmul.bf16.gmra.mxu0 %v611
  %v630 = vpop.f32.mrf.mxu0
  %v631 = vadd.f32 0.0, %v630
  %v632 = vpop.f32.mrf.mxu0
  %v633 = vadd.f32 0.0, %v632
  %634 = vmatmul.bf16.gmra.mxu0 %v614
  %v635 = vpop.f32.mrf.mxu0
  %v636 = vadd.f32 0.0, %v635
  %v637 = vpop.f32.mrf.mxu0
  %v638 = vadd.f32 0.0, %v637
  %639 = vdwg.mxu0
  %v640 = vld [vmem:[%s2] sm:$0xf]
  %v641 = vld [vmem:[%s2 + $0x4] sm:$0xf]
  %v642 = vld [vmem:[%s2 + $0x8] sm:$0xf]
  %v643 = vld [vmem:[%s2 + $0xc] sm:$0xf]
  %v644 = vld [vmem:[%s2 + $0x10] sm:$0xf]
  %v645 = vld [vmem:[%s2 + $0x14] sm:$0xf]
  %v646 = vld [vmem:[%s2 + $0x18] sm:$0xf]
  %v647 = vld [vmem:[%s2 + $0x1c] sm:$0xf]
  %v648 = vunpack.c.l.bf16 %v640
  %v649 = vunpack.c.l.bf16 %v641
  %v650 = vunpack.c.l.bf16 %v642
  %v651 = vunpack.c.l.bf16 %v643
  %v652 = vunpack.c.l.bf16 %v644
  %v653 = vunpack.c.l.bf16 %v645
  %v654 = vunpack.c.l.bf16 %v646
  %v655 = vunpack.c.l.bf16 %v647
  %v657 = vsel %vm144, %v648, 0
  %659 = vmatpush.msra.mxu0 0.0
  %660 = vmatpush.msra.mxu0 0.0
  %661 = vmatpush.msra.mxu0 0.0
  %662 = vmatpush.msra.mxu0 0.0
  %663 = vmatpush.msra.mxu0 0.0
  %664 = vmatpush.msra.mxu0 0.0
  %665 = vmatpush.msra.mxu0 0.0
  %666 = vmatpush.msra.mxu0 0.0
  %667 = vmatpush.msra.mxu0 0.0
  %668 = vmatpush.msra.mxu0 0.0
  %669 = vmatpush.msra.mxu0 %v176
  %670 = vmatpush.msra.mxu0 %v174
  %671 = vmatpush.msra.mxu0 %v171
  %672 = vmatpush.msra.mxu0 %v169
  %673 = vmatpush.msra.mxu0 %v166
  %674 = vmatpush.msra.mxu0 %v164
  %675 = vmatmul.f32.gmra.mxu0 %v657
  %v676 = vpop.f32.mrf.mxu0
  %v677 = vadd.f32 0.0, %v676
  %678 = vdwg.mxu0
  %v680 = vsel %vm144, %v649, 0
  %682 = vmatpush.msra.mxu0 0.0
  %683 = vmatpush.msra.mxu0 0.0
  %684 = vmatpush.msra.mxu0 0.0
  %685 = vmatpush.msra.mxu0 0.0
  %686 = vmatpush.msra.mxu0 0.0
  %687 = vmatpush.msra.mxu0 0.0
  %688 = vmatpush.msra.mxu0 0.0
  %689 = vmatpush.msra.mxu0 0.0
  %690 = vmatpush.msra.mxu0 0.0
  %691 = vmatpush.msra.mxu0 0.0
  %692 = vmatpush.msra.mxu0 %v242
  %693 = vmatpush.msra.mxu0 %v240
  %694 = vmatpush.msra.mxu0 %v237
  %695 = vmatpush.msra.mxu0 %v235
  %696 = vmatpush.msra.mxu0 %v232
  %697 = vmatpush.msra.mxu0 %v230
  %698 = vmatmul.f32.gmra.mxu0 %v680
  %v699 = vpop.f32.mrf.mxu0
  %v700 = vadd.f32 0.0, %v699
  %701 = vdwg.mxu0
  %v703 = vsel %vm144, %v650, 0
  %705 = vmatpush.msra.mxu0 0.0
  %706 = vmatpush.msra.mxu0 0.0
  %707 = vmatpush.msra.mxu0 0.0
  %708 = vmatpush.msra.mxu0 0.0
  %709 = vmatpush.msra.mxu0 0.0
  %710 = vmatpush.msra.mxu0 0.0
  %711 = vmatpush.msra.mxu0 0.0
  %712 = vmatpush.msra.mxu0 0.0
  %713 = vmatpush.msra.mxu0 0.0
  %714 = vmatpush.msra.mxu0 0.0
  %715 = vmatpush.msra.mxu0 %v308
  %716 = vmatpush.msra.mxu0 %v306
  %717 = vmatpush.msra.mxu0 %v303
  %718 = vmatpush.msra.mxu0 %v301
  %719 = vmatpush.msra.mxu0 %v298
  %720 = vmatpush.msra.mxu0 %v296
  %721 = vmatmul.f32.gmra.mxu0 %v703
  %v722 = vpop.f32.mrf.mxu0
  %v723 = vadd.f32 0.0, %v722
  %724 = vdwg.mxu0
  %v726 = vsel %vm144, %v651, 0
  %728 = vmatpush.msra.mxu0 0.0
  %729 = vmatpush.msra.mxu0 0.0
  %730 = vmatpush.msra.mxu0 0.0
  %731 = vmatpush.msra.mxu0 0.0
  %732 = vmatpush.msra.mxu0 0.0
  %733 = vmatpush.msra.mxu0 0.0
  %734 = vmatpush.msra.mxu0 0.0
  %735 = vmatpush.msra.mxu0 0.0
  %736 = vmatpush.msra.mxu0 0.0
  %737 = vmatpush.msra.mxu0 0.0
  %738 = vmatpush.msra.mxu0 %v374
  %739 = vmatpush.msra.mxu0 %v372
  %740 = vmatpush.msra.mxu0 %v369
  %741 = vmatpush.msra.mxu0 %v367
  %742 = vmatpush.msra.mxu0 %v364
  %743 = vmatpush.msra.mxu0 %v362
  %744 = vmatmul.f32.gmra.mxu0 %v726
  %v745 = vpop.f32.mrf.mxu0
  %v746 = vadd.f32 0.0, %v745
  %747 = vdwg.mxu0
  %v749 = vsel %vm144, %v652, 0
  %751 = vmatpush.msra.mxu0 0.0
  %752 = vmatpush.msra.mxu0 0.0
  %753 = vmatpush.msra.mxu0 0.0
  %754 = vmatpush.msra.mxu0 0.0
  %755 = vmatpush.msra.mxu0 0.0
  %756 = vmatpush.msra.mxu0 0.0
  %757 = vmatpush.msra.mxu0 0.0
  %758 = vmatpush.msra.mxu0 0.0
  %759 = vmatpush.msra.mxu0 0.0
  %760 = vmatpush.msra.mxu0 0.0
  %761 = vmatpush.msra.mxu0 %v440
  %762 = vmatpush.msra.mxu0 %v438
  %763 = vmatpush.msra.mxu0 %v435
  %764 = vmatpush.msra.mxu0 %v433
  %765 = vmatpush.msra.mxu0 %v430
  %766 = vmatpush.msra.mxu0 %v428
  %767 = vmatmul.f32.gmra.mxu0 %v749
  %v768 = vpop.f32.mrf.mxu0
  %v769 = vadd.f32 0.0, %v768
  %770 = vdwg.mxu0
  %v772 = vsel %vm144, %v653, 0
  %774 = vmatpush.msra.mxu0 0.0
  %775 = vmatpush.msra.mxu0 0.0
  %776 = vmatpush.msra.mxu0 0.0
  %777 = vmatpush.msra.mxu0 0.0
  %778 = vmatpush.msra.mxu0 0.0
  %779 = vmatpush.msra.mxu0 0.0
  %780 = vmatpush.msra.mxu0 0.0
  %781 = vmatpush.msra.mxu0 0.0
  %782 = vmatpush.msra.mxu0 0.0
  %783 = vmatpush.msra.mxu0 0.0
  %784 = vmatpush.msra.mxu0 %v506
  %785 = vmatpush.msra.mxu0 %v504
  %786 = vmatpush.msra.mxu0 %v501
  %787 = vmatpush.msra.mxu0 %v499
  %788 = vmatpush.msra.mxu0 %v496
  %789 = vmatpush.msra.mxu0 %v494
  %790 = vmatmul.f32.gmra.mxu0 %v772
  %v791 = vpop.f32.mrf.mxu0
  %v792 = vadd.f32 0.0, %v791
  %793 = vdwg.mxu0
  %v795 = vsel %vm144, %v654, 0
  %797 = vmatpush.msra.mxu0 0.0
  %798 = vmatpush.msra.mxu0 0.0
  %799 = vmatpush.msra.mxu0 0.0
  %800 = vmatpush.msra.mxu0 0.0
  %801 = vmatpush.msra.mxu0 0.0
  %802 = vmatpush.msra.mxu0 0.0
  %803 = vmatpush.msra.mxu0 0.0
  %804 = vmatpush.msra.mxu0 0.0
  %805 = vmatpush.msra.mxu0 0.0
  %806 = vmatpush.msra.mxu0 0.0
  %807 = vmatpush.msra.mxu0 %v572
  %808 = vmatpush.msra.mxu0 %v570
  %809 = vmatpush.msra.mxu0 %v567
  %810 = vmatpush.msra.mxu0 %v565
  %811 = vmatpush.msra.mxu0 %v562
  %812 = vmatpush.msra.mxu0 %v560
  %813 = vmatmul.f32.gmra.mxu0 %v795
  %v814 = vpop.f32.mrf.mxu0
  %v815 = vadd.f32 0.0, %v814
  %816 = vdwg.mxu0
  %v818 = vsel %vm144, %v655, 0
  %820 = vmatpush.msra.mxu0 0.0
  %821 = vmatpush.msra.mxu0 0.0
  %822 = vmatpush.msra.mxu0 0.0
  %823 = vmatpush.msra.mxu0 0.0
  %824 = vmatpush.msra.mxu0 0.0
  %825 = vmatpush.msra.mxu0 0.0
  %826 = vmatpush.msra.mxu0 0.0
  %827 = vmatpush.msra.mxu0 0.0
  %828 = vmatpush.msra.mxu0 0.0
  %829 = vmatpush.msra.mxu0 0.0
  %830 = vmatpush.msra.mxu0 %v638
  %831 = vmatpush.msra.mxu0 %v636
  %832 = vmatpush.msra.mxu0 %v633
  %833 = vmatpush.msra.mxu0 %v631
  %834 = vmatpush.msra.mxu0 %v628
  %835 = vmatpush.msra.mxu0 %v626
  %836 = vmatmul.f32.gmra.mxu0 %v818
  %v837 = vpop.f32.mrf.mxu0
  %v838 = vadd.f32 0.0, %v837
  %839 = vdwg.mxu0
  %vm840 = vcmask 64512
  %841 = vst.msk [vmem:[%s3] sm:$0xff] %vm840, %v677
  %842 = vst.msk [vmem:[%s3 + $0x8] sm:$0xff] %vm840, %v700
  %843 = vst.msk [vmem:[%s3 + $0x10] sm:$0xff] %vm840, %v723
  %844 = vst.msk [vmem:[%s3 + $0x18] sm:$0xff] %vm840, %v746
  %845 = vst.msk [vmem:[%s3 + $0x20] sm:$0xff] %vm840, %v769
  %846 = vst.msk [vmem:[%s3 + $0x28] sm:$0xff] %vm840, %v792
  %847 = vst.msk [vmem:[%s3 + $0x30] sm:$0xff] %vm840, %v815
  %848 = vst.msk [vmem:[%s3 + $0x38] sm:$0xff] %vm840, %v838
  // Predicated region
  $region14: #{_lambda_.6} parent=0 // pred_check
    _
  $region15: #{_lambda_.6} parent=0 // pred_check_branch
    %850 = sbr.rel (0) target = $region17
  $region16: #{_lambda_.6} parent=0 // pred_region
    _
  $region17: #{_lambda_.6} parent=0 // pred_fallthru
    _
  // Predicated region
  $region18: #{_lambda_.6} parent=0 // pred_check
    _
  $region19: #{_lambda_.6} parent=0 // pred_check_branch
    %852 = sbr.rel (0) target = $region21
  $region20: #{_lambda_.6} parent=0 // pred_region
    _
  $region21: #{_lambda_.6} parent=0 // pred_fallthru
    _

// kernel: _lambda_.4
$region0: #{_lambda_.4}
  #allocation0 [shape = 'u32[]', space=smem, size = 0x4, offset = 0x4, fixed_abs, tag = 'smem constant byte address 0x4 - core index']
  #allocation1 [shape = 'u32[72,128]{1,0:T(1,128)}', space=vmem, size = 0x9000, scoped, tag = 'internal scratch']
  %s0 = inlined_call_operand.vmem [shape: bf16[2,2,4,1536], index: 0, kind: input, shape index: {}]
  %s1 = inlined_call_operand.vmem [shape: bf16[3,3,4,4], index: 1, kind: input, shape index: {}]
  %s2 = inlined_call_operand.vmem [shape: f32[4,1], index: 2, kind: input, shape index: {}]
  %s3 = inlined_call_operand.vmem [shape: f32[4,1], index: 3, kind: input, shape index: {}]
  %s4 = inlined_call_operand.vmem [shape: f32[1,768], index: 4, kind: input, shape index: {}]
  %s5 = inlined_call_operand.vmem [shape: bf16[3,3,16,4], index: 5, kind: input, shape index: {}]
  %s6 = inlined_call_operand.vmem [shape: f32[16,1536], index: 6, kind: output, shape index: {}]
  %s7 = sld [smem:[#allocation0]]
  $region102: #{_lambda_.4} parent=0
    _
  %s9 = ssub.s32 1, %s7
  %s10 = scalar_select 0, %s9, %s7
  $region1: #{_lambda_.4} parent=0
    #allocation2 [shape = 'u8[49152]{0}', space=vmem, size = 0xc000, scoped, tag = 'input window, operand 0']
    #allocation3 [shape = 'u8[98304]{0}', space=vmem, size = 0x18000, scoped, tag = 'output window, operand 0']
    loop: start=0, step=1, limit=4
    $region2: #{_lambda_.4} parent=1 // loop_pre_header
      _
    $region3: #{_lambda_.4} parent=1 // loop_header
      %s12 = sphi 0, %s16
      %p13 = scmp.ge.s32.totalorder %s12, 4
      %s22 = sphi 0, %s24
      %s25 = sphi 0, %s22
      %s26 = sphi 0, %s25
      %s42 = sphi 0, %s26
      %s46 = sphi 0, %s46
      %s48 = sphi 0, %s46
      %s49 = sphi 0, %s48
      %s63 = sphi 0, %s49
      %s67 = sphi 0, %s67
      %s69 = sphi 0, %s67
      %s70 = sphi 0, %s69
      %s84 = sphi 0, %s70
      %s88 = sphi 0, %s88
      %s90 = sphi 0, %s88
      %s91 = sphi 0, %s90
      %s105 = sphi 0, %s91
      %s109 = sphi 0, %s109
      %s111 = sphi 0, %s109
      %s112 = sphi 0, %s111
      %s126 = sphi 0, %s112
      %s130 = sphi 0, %s130
      %s132 = sphi 0, %s130
      %s133 = sphi 0, %s132
      %s147 = sphi 0, %s133
      %s153 = sphi 0, %s155
      %s156 = sphi 0, %s153
      %s157 = sphi 0, %s156
      %s173 = sphi 0, %s157
    $region4: #{_lambda_.4} parent=1 // loop_header_branch
      %15 = sbr.rel (%p13) target = $region8
    $region5: #{_lambda_.4} parent=1 // loop_body
      %s17 = ssub.s32 %s12, 1
      %s18 = ssub.s32 %s12, 2
      %s19 = sadd.s32 %s12, 1
      %s20 = ssub.s32 %s12, %s19
      %p21 = scmp.eq.s32.totalorder %s20, 0
      %s23 = sadd.s32 %s22, 1
      %s24 = scalar_select %p21, %s22, %s23
      %p27 = pneg %p21
      %p28 = scmp.eq.s32.totalorder %s12, 1
      %p29 = por %p27, %p28
      %p30 = scmp.ne.s32.totalorder %s22, %s25
      %p31 = scmp.eq.s32.totalorder %s12, 0
      %p32 = por %p30, %p31
      %p33 = scmp.ne.s32.totalorder %s22, %s25
      %p34 = scmp.eq.s32.totalorder %s17, 1
      %p35 = por %p33, %p34
      %p36 = scmp.ne.s32.totalorder %s25, %s26
      %p37 = scmp.eq.s32.totalorder %s17, 0
      %p38 = por %p36, %p37
      %p39 = scmp.ne.s32.totalorder %s25, %s26
      %p40 = scmp.eq.s32.totalorder %s18, 1
      %p41 = por %p39, %p40
      %p43 = scmp.ne.s32.totalorder %s26, %s42
      %p44 = scmp.eq.s32.totalorder %s18, 0
      %p45 = por %p43, %p44
      %s47 = sadd.s32 %s46, 1
      %p50 = scmp.eq.s32.totalorder %s12, 1
      %p51 = scmp.ne.s32.totalorder %s46, %s48
      %p52 = scmp.eq.s32.totalorder %s12, 0
      %p53 = por %p51, %p52
      %p54 = scmp.ne.s32.totalorder %s46, %s48
      %p55 = scmp.eq.s32.totalorder %s17, 1
      %p56 = por %p54, %p55
      %p57 = scmp.ne.s32.totalorder %s48, %s49
      %p58 = scmp.eq.s32.totalorder %s17, 0
      %p59 = por %p57, %p58
      %p60 = scmp.ne.s32.totalorder %s48, %s49
      %p61 = scmp.eq.s32.totalorder %s18, 1
      %p62 = por %p60, %p61
      %p64 = scmp.ne.s32.totalorder %s49, %s63
      %p65 = scmp.eq.s32.totalorder %s18, 0
      %p66 = por %p64, %p65
      %s68 = sadd.s32 %s67, 1
      %p71 = scmp.eq.s32.totalorder %s12, 1
      %p72 = scmp.ne.s32.totalorder %s67, %s69
      %p73 = scmp.eq.s32.totalorder %s12, 0
      %p74 = por %p72, %p73
      %p75 = scmp.ne.s32.totalorder %s67, %s69
      %p76 = scmp.eq.s32.totalorder %s17, 1
      %p77 = por %p75, %p76
      %p78 = scmp.ne.s32.totalorder %s69, %s70
      %p79 = scmp.eq.s32.totalorder %s17, 0
      %p80 = por %p78, %p79
      %p81 = scmp.ne.s32.totalorder %s69, %s70
      %p82 = scmp.eq.s32.totalorder %s18, 1
      %p83 = por %p81, %p82
      %p85 = scmp.ne.s32.totalorder %s70, %s84
      %p86 = scmp.eq.s32.totalorder %s18, 0
      %p87 = por %p85, %p86
      %s89 = sadd.s32 %s88, 1
      %p92 = scmp.eq.s32.totalorder %s12, 1
      %p93 = scmp.ne.s32.totalorder %s88, %s90
      %p94 = scmp.eq.s32.totalorder %s12, 0
      %p95 = por %p93, %p94
      %p96 = scmp.ne.s32.totalorder %s88, %s90
      %p97 = scmp.eq.s32.totalorder %s17, 1
      %p98 = por %p96, %p97
      %p99 = scmp.ne.s32.totalorder %s90, %s91
      %p100 = scmp.eq.s32.totalorder %s17, 0
      %p101 = por %p99, %p100
      %p102 = scmp.ne.s32.totalorder %s90, %s91
      %p103 = scmp.eq.s32.totalorder %s18, 1
      %p104 = por %p102, %p103
      %p106 = scmp.ne.s32.totalorder %s91, %s105
      %p107 = scmp.eq.s32.totalorder %s18, 0
      %p108 = por %p106, %p107
      %s110 = sadd.s32 %s109, 1
      %p113 = scmp.eq.s32.totalorder %s12, 1
      %p114 = scmp.ne.s32.totalorder %s109, %s111
      %p115 = scmp.eq.s32.totalorder %s12, 0
      %p116 = por %p114, %p115
      %p117 = scmp.ne.s32.totalorder %s109, %s111
      %p118 = scmp.eq.s32.totalorder %s17, 1
      %p119 = por %p117, %p118
      %p120 = scmp.ne.s32.totalorder %s111, %s112
      %p121 = scmp.eq.s32.totalorder %s17, 0
      %p122 = por %p120, %p121
      %p123 = scmp.ne.s32.totalorder %s111, %s112
      %p124 = scmp.eq.s32.totalorder %s18, 1
      %p125 = por %p123, %p124
      %p127 = scmp.ne.s32.totalorder %s112, %s126
      %p128 = scmp.eq.s32.totalorder %s18, 0
      %p129 = por %p127, %p128
      %s131 = sadd.s32 %s130, 1
      %p134 = scmp.eq.s32.totalorder %s12, 1
      %p135 = scmp.ne.s32.totalorder %s130, %s132
      %p136 = scmp.eq.s32.totalorder %s12, 0
      %p137 = por %p135, %p136
      %p138 = scmp.ne.s32.totalorder %s130, %s132
      %p139 = scmp.eq.s32.totalorder %s17, 1
      %p140 = por %p138, %p139
      %p141 = scmp.ne.s32.totalorder %s132, %s133
      %p142 = scmp.eq.s32.totalorder %s17, 0
      %p143 = por %p141, %p142
      %p144 = scmp.ne.s32.totalorder %s132, %s133
      %p145 = scmp.eq.s32.totalorder %s18, 1
      %p146 = por %p144, %p145
      %p148 = scmp.ne.s32.totalorder %s133, %s147
      %p149 = scmp.eq.s32.totalorder %s18, 0
      %p150 = por %p148, %p149
      %s151 = ssub.s32 %s12, %s19
      %p152 = scmp.eq.s32.totalorder %s151, 0
      %s154 = sadd.s32 %s153, 1
      %s155 = scalar_select %p152, %s153, %s154
      %p158 = pneg %p152
      %p159 = scmp.eq.s32.totalorder %s12, 1
      %p160 = por %p158, %p159
      %p161 = scmp.ne.s32.totalorder %s153, %s156
      %p162 = scmp.eq.s32.totalorder %s12, 0
      %p163 = por %p161, %p162
      %p164 = scmp.ne.s32.totalorder %s153, %s156
      %p165 = scmp.eq.s32.totalorder %s17, 1
      %p166 = por %p164, %p165
      %p167 = scmp.ne.s32.totalorder %s156, %s157
      %p168 = scmp.eq.s32.totalorder %s17, 0
      %p169 = por %p167, %p168
      %p170 = scmp.ne.s32.totalorder %s156, %s157
      %p171 = scmp.eq.s32.totalorder %s18, 1
      %p172 = por %p170, %p171
      %p174 = scmp.ne.s32.totalorder %s157, %s173
      %p175 = scmp.eq.s32.totalorder %s18, 0
      %p176 = por %p174, %p175
      %p177 = scmp.le.s32.totalorder 1, %s12
      %p178 = scmp.lt.s32.totalorder %s12, 3
      %p179 = pnand %p177, %p178
      %p180 = pneg %p179
      // Predicated region
      $region9: #{_lambda_.4} parent=5 // pred_check
        _
      $region10: #{_lambda_.4} parent=5 // pred_check_branch
        %182 = sbr.rel (%p179) target = $region12
      $region11: #{_lambda_.4} parent=5 // pred_region
        %s183 = ssub.s32 %s12, 1
        // Predicated region
        $region13: #{_lambda_.4} parent=11 // pred_check
          %p184 = pneg %p59
        $region14: #{_lambda_.4} parent=11 // pred_check_branch
          %186 = sbr.rel (%p184) target = $region16
        $region15: #{_lambda_.4} parent=11 // pred_region
          _
        $region16: #{_lambda_.4} parent=11 // pred_fallthru
          _
        // Predicated region
        $region17: #{_lambda_.4} parent=11 // pred_check
          %p187 = pneg %p80
        $region18: #{_lambda_.4} parent=11 // pred_check_branch
          %189 = sbr.rel (%p187) target = $region20
        $region19: #{_lambda_.4} parent=11 // pred_region
          _
        $region20: #{_lambda_.4} parent=11 // pred_fallthru
          _
        // Predicated region
        $region21: #{_lambda_.4} parent=11 // pred_check
          %p190 = pneg %p101
        $region22: #{_lambda_.4} parent=11 // pred_check_branch
          %192 = sbr.rel (%p190) target = $region24
        $region23: #{_lambda_.4} parent=11 // pred_region
          _
        $region24: #{_lambda_.4} parent=11 // pred_fallthru
          _
        // Predicated region
        $region25: #{_lambda_.4} parent=11 // pred_check
          %p193 = pneg %p122
        $region26: #{_lambda_.4} parent=11 // pred_check_branch
          %195 = sbr.rel (%p193) target = $region28
        $region27: #{_lambda_.4} parent=11 // pred_region
          _
        $region28: #{_lambda_.4} parent=11 // pred_fallthru
          _
        // Predicated region
        $region29: #{_lambda_.4} parent=11 // pred_check
          %p196 = pneg %p143
        $region30: #{_lambda_.4} parent=11 // pred_check_branch
          %198 = sbr.rel (%p196) target = $region32
        $region31: #{_lambda_.4} parent=11 // pred_region
          _
        $region32: #{_lambda_.4} parent=11 // pred_fallthru
          _
      $region12: #{_lambda_.4} parent=5 // pred_fallthru
        _
      %p199 = scmp.lt.s32.totalorder %s12, 2
      // Predicated region
      $region33: #{_lambda_.4} parent=5 // pred_check
        %p200 = pneg %p199
      $region34: #{_lambda_.4} parent=5 // pred_check_branch
        %202 = sbr.rel (%p200) target = $region36
      $region35: #{_lambda_.4} parent=5 // pred_region
        // Predicated region
        $region37: #{_lambda_.4} parent=35 // pred_check
          %p203 = pneg %p32
        $region38: #{_lambda_.4} parent=35 // pred_check_branch
          %205 = sbr.rel (%p203) target = $region40
        $region39: #{_lambda_.4} parent=35 // pred_region
          %s206 = sand.u32 %s22, 1
          %s207 = sand.u32 %s22, 1
          %s208 = smul.addr %s207, 48
          %s209 = scalar_lea.vmem [#allocation2], %s208
          %s210 = smul.u32 6, %s12
          %s211 = smul.addr %s210, 2
          %s212 = scalar_lea.vmem %s0, %s211
          // Predicated region
          $region41: #{_lambda_.4} parent=39 // pred_check
            _
          $region42: #{_lambda_.4} parent=39 // pred_check_branch
            %214 = sbr.rel (0) target = $region44
          $region43: #{_lambda_.4} parent=39 // pred_region
            // Predicated region
            $region45: #{_lambda_.4} parent=43 // pred_check
              _
            $region46: #{_lambda_.4} parent=43 // pred_check_branch
              %216 = sbr.rel (0) target = $region48
            $region47: #{_lambda_.4} parent=43 // pred_region
              %s217 = scalar_lea.vmem %s212, 8
              %s218 = scalar_lea.vmem %s209, 8 [#allocation2]
              loop: start=0, step=1, limit=1
              $region49: #{_lambda_.4} parent=47 // loop_pre_header
                _
              $region50: #{_lambda_.4} parent=47 // loop_header
                %s220 = sphi 0, %s224
                %p221 = scmp.ge.s32.totalorder %s220, 1
                %s225 = sphi %s212, %s212
                %s226 = sphi %s209, %s209
              $region51: #{_lambda_.4} parent=47 // loop_header_branch
                %223 = sbr.rel (%p221) target = $region55
              $region52: #{_lambda_.4} parent=47 // loop_body
                %v227 = vld [vmem:[%s225] sm:$0xff]
                %228 = vst [vmem:[%s226] sm:$0xff] %v227
                %v229 = vld [vmem:[%s225 + $0x18] sm:$0xff]
                %230 = vst [vmem:[%s226 + $0xc] sm:$0xff] %v229
                %v231 = vld [vmem:[%s225 + $0x30] sm:$0xff]
                %232 = vst [vmem:[%s226 + $0x18] sm:$0xff] %v231
                %v233 = vld [vmem:[%s225 + $0x48] sm:$0xff]
                %234 = vst [vmem:[%s226 + $0x24] sm:$0xff] %v233
              $region53: #{_lambda_.4} parent=47 // loop_footer
                %s224 = sadd.s32 1, %s220
              $region54: #{_lambda_.4} parent=47 // loop_footer_branch
                %219 = sbr.rel target = $region50
              $region55: #{_lambda_.4} parent=47 // loop_exit
                _
              %s236 = ssub.s32 16, 1
              loop: start=0, step=1, limit=1
              $region56: #{_lambda_.4} parent=47 // loop_pre_header
                _
              $region57: #{_lambda_.4} parent=47 // loop_header
                %s238 = sphi 0, %s242
                %p239 = scmp.ge.s32.totalorder %s238, 1
                %s243 = sphi %s217, %s217
                %s244 = sphi %s218, %s218
              $region58: #{_lambda_.4} parent=47 // loop_header_branch
                %241 = sbr.rel (%p239) target = $region62
              $region59: #{_lambda_.4} parent=47 // loop_body
                %v245 = vld [vmem:[%s243] sm:%s236]
                %246 = vst [vmem:[%s244] sm:%s236] %v245
                %v247 = vld [vmem:[%s243 + $0x18] sm:%s236]
                %248 = vst [vmem:[%s244 + $0xc] sm:%s236] %v247
                %v249 = vld [vmem:[%s243 + $0x30] sm:%s236]
                %250 = vst [vmem:[%s244 + $0x18] sm:%s236] %v249
                %v251 = vld [vmem:[%s243 + $0x48] sm:%s236]
                %252 = vst [vmem:[%s244 + $0x24] sm:%s236] %v251
              $region60: #{_lambda_.4} parent=47 // loop_footer
                %s242 = sadd.s32 1, %s238
              $region61: #{_lambda_.4} parent=47 // loop_footer_branch
                %237 = sbr.rel target = $region57
              $region62: #{_lambda_.4} parent=47 // loop_exit
                _
            $region48: #{_lambda_.4} parent=43 // pred_fallthru
              _
          $region44: #{_lambda_.4} parent=39 // pred_fallthru
            _
          %253 = vnop
        $region40: #{_lambda_.4} parent=35 // pred_fallthru
          _
      $region36: #{_lambda_.4} parent=5 // pred_fallthru
        _
      %p254 = scmp.le.s32.totalorder 1, %s12
      %p255 = scmp.lt.s32.totalorder %s12, 3
      %p256 = pnand %p254, %p255
      %p257 = pneg %p256
      // Predicated region
      $region63: #{_lambda_.4} parent=5 // pred_check
        _
      $region64: #{_lambda_.4} parent=5 // pred_check_branch
        %259 = sbr.rel (%p256) target = $region66
      $region65: #{_lambda_.4} parent=5 // pred_region
        %s260 = ssub.s32 %s12, 1
        %s261 = sand.u32 %s25, 1
        %s262 = sand.u32 %s25, 1
        %s263 = smul.addr %s262, 48
        %s264 = scalar_lea.vmem [#allocation2], %s263
        // Predicated region
        $region67: #{_lambda_.4} parent=65 // pred_check
          %p265 = pneg %p38
        $region68: #{_lambda_.4} parent=65 // pred_check_branch
          %267 = sbr.rel (%p265) target = $region70
        $region69: #{_lambda_.4} parent=65 // pred_region
          _
        $region70: #{_lambda_.4} parent=65 // pred_fallthru
          _
        %s268 = sand.u32 %s25, 1
        %s269 = sand.u32 %s25, 1
        %s270 = smul.addr %s269, 48
        %s271 = scalar_lea.vmem [#allocation2], %s270
        %p272 = pneg %p38
        %p273 = pneg %p35
        %p274 = pneg %p59
        %p275 = pneg %p56
        %p276 = pneg %p80
        %p277 = pneg %p77
        %p278 = pneg %p101
        %p279 = pneg %p98
        %p280 = pneg %p122
        %p281 = pneg %p119
        %p282 = pneg %p143
        %p283 = pneg %p140
        %p284 = pneg %p169
        %p285 = pneg %p166
        %s286 = sand.u32 %s156, 1
        %s287 = sand.u32 %s156, 1
        %s288 = smul.addr %s287, 96
        %s289 = scalar_lea.vmem [#allocation3], %s288
        %s290 = smul.u32 6, %s17
        %s291 = smul.u32 6, %s17
        %v293 = vld [vmem:[%s264] sm:$0xff]
        %v294 = vld [vmem:[%s264 + $0x8] sm:$0xf]
        %s295 = scalar_lea.vmem %s264, 12 [#allocation2]
        %v296 = vld [vmem:[%s295] sm:$0xff]
        %v297 = vld [vmem:[%s295 + $0x8] sm:$0xf]
        %s298 = scalar_lea.vmem %s264, 24 [#allocation2]
        %v299 = vld [vmem:[%s298] sm:$0xff]
        %v300 = vld [vmem:[%s298 + $0x8] sm:$0xf]
        %s301 = scalar_lea.vmem %s264, 36 [#allocation2]
        %v302 = vld [vmem:[%s301] sm:$0xff]
        %v303 = vld [vmem:[%s301 + $0x8] sm:$0xf]
        %v304 = vld [vmem:[%s1] sm:$0x3]
        %306 = vst [vmem:[#allocation1] ss:$4 sm:$0xff] %v294
        %v307 = vld.sshfl [vmem:[#allocation1 + $0x8] sm:$0xff pattern:$0x73625140]
        %309 = vrot.lane.b32.xlu0 %v307, 27
        %v310 = vpop.permute.xlu0 %309
        %312 = vst [vmem:[#allocation1] ss:$4 sm:$0xff] %v293
        %s313 = scalar_lea.vmem [#allocation1], 32
        %314 = vst [vmem:[%s313] ss:$4 sm:$0xff] %v294
        %v315 = vld.sshfl [vmem:[#allocation1] sm:$0xff pattern:$0x73625140]
        %v317 = vld.sshfl [vmem:[#allocation1 + $0x8] sm:$0xff pattern:$0x73625140]
        %v319 = vld.sshfl [vmem:[#allocation1 + $0x10] sm:$0xff pattern:$0x73625140]
        %v321 = vld.sshfl [vmem:[#allocation1 + $0x18] sm:$0xff pattern:$0x73625140]
        %v323 = vld.sshfl [vmem:[#allocation1 + $0x20] sm:$0xff pattern:$0x73625140]
        %v325 = vld.sshfl [vmem:[#allocation1 + $0x28] sm:$0xff pattern:$0x73625140]
        %327 = vrot.lane.b32.xlu0 %v315, 27
        %v328 = vpop.permute.xlu0 %327
        %329 = vrot.lane.b32.xlu0 %v317, 27
        %v330 = vpop.permute.xlu0 %329
        %331 = vrot.lane.b32.xlu0 %v319, 27
        %v332 = vpop.permute.xlu0 %331
        %333 = vrot.lane.b32.xlu0 %v321, 27
        %v334 = vpop.permute.xlu0 %333
        %335 = vrot.lane.b32.xlu0 %v323, 27
        %v336 = vpop.permute.xlu0 %335
        %337 = vrot.lane.b32.xlu0 %v325, 27
        %v338 = vpop.permute.xlu0 %337
        %vm339 = vcmask 220160
        %v340 = vsel %vm339, %v328, %v330
        %v341 = vsel %vm339, %v330, %v332
        %v342 = vsel %vm339, %v332, %v334
        %v343 = vsel %vm339, %v334, %v336
        %v344 = vsel %vm339, %v336, %v338
        %vm345 = vcmask 220160
        %v348 = vsel %vm345, %v310, %v328
        %s349 = scalar_lea.vmem %s1, 2
        %v350 = vld [vmem:[%s349] sm:$0x3]
        %352 = vst [vmem:[#allocation1] ss:$4 sm:$0xff] %v297
        %v353 = vld.sshfl [vmem:[#allocation1 + $0x8] sm:$0xff pattern:$0x73625140]
        %355 = vrot.lane.b32.xlu0 %v353, 27
        %v356 = vpop.permute.xlu0 %355
        %358 = vst [vmem:[#allocation1] ss:$4 sm:$0xff] %v296
        %s359 = scalar_lea.vmem [#allocation1], 32
        %360 = vst [vmem:[%s359] ss:$4 sm:$0xff] %v297
        %v361 = vld.sshfl [vmem:[#allocation1] sm:$0xff pattern:$0x73625140]
        %v363 = vld.sshfl [vmem:[#allocation1 + $0x8] sm:$0xff pattern:$0x73625140]
        %v365 = vld.sshfl [vmem:[#allocation1 + $0x10] sm:$0xff pattern:$0x73625140]
        %v367 = vld.sshfl [vmem:[#allocation1 + $0x18] sm:$0xff pattern:$0x73625140]
        %v369 = vld.sshfl [vmem:[#allocation1 + $0x20] sm:$0xff pattern:$0x73625140]
        %v371 = vld.sshfl [vmem:[#allocation1 + $0x28] sm:$0xff pattern:$0x73625140]
        %373 = vrot.lane.b32.xlu0 %v361, 27
        %v374 = vpop.permute.xlu0 %373
        %375 = vrot.lane.b32.xlu0 %v363, 27
        %v376 = vpop.permute.xlu0 %375
        %377 = vrot.lane.b32.xlu0 %v365, 27
        %v378 = vpop.permute.xlu0 %377
        %379 = vrot.lane.b32.xlu0 %v367, 27
        %v380 = vpop.permute.xlu0 %379
        %381 = vrot.lane.b32.xlu0 %v369, 27
        %v382 = vpop.permute.xlu0 %381
        %383 = vrot.lane.b32.xlu0 %v371, 27
        %v384 = vpop.permute.xlu0 %383
        %v385 = vsel %vm339, %v374, %v376
        %v386 = vsel %vm339, %v376, %v378
        %v387 = vsel %vm339, %v378, %v380
        %v388 = vsel %vm339, %v380, %v382
        %v389 = vsel %vm339, %v382, %v384
        %v392 = vsel %vm345, %v356, %v374
        %vm393 = vcmask 31744
        %v395 = vsel %vm393, %v350, 0
        %vm397 = vcmask 1041408
        %v398 = vsel %vm397, %v392, 0
        %v401 = vsel %vm397, %v385, 0
        %v404 = vsel %vm397, %v386, 0
        %v407 = vsel %vm397, %v387, 0
        %v410 = vsel %vm397, %v388, 0
        %v413 = vsel %vm397, %v389, 0
        %415 = vmatpush.bf16.msra.mxu0 0
        %416 = vmatpush.bf16.msra.mxu0 0
        %417 = vmatpush.bf16.msra.mxu0 0
        %418 = vmatpush.bf16.msra.mxu0 0
        %419 = vmatpush.bf16.msra.mxu0 0
        %420 = vmatpush.bf16.msra.mxu0 0
        %421 = vmatpush.bf16.msra.mxu0 0
        %422 = vmatpush.bf16.msra.mxu0 %v398
        %423 = vmatmul.bf16.gmra.mxu0 %v395
        %v424 = vpop.f32.mrf.mxu0
        %v425 = vadd.f32 0.0, %v424
        %v426 = vpop.f32.mrf.mxu0
        %427 = vdwg.mxu0
        %428 = vmatpush.bf16.msra.mxu0 0
        %429 = vmatpush.bf16.msra.mxu0 0
        %430 = vmatpush.bf16.msra.mxu0 0
        %431 = vmatpush.bf16.msra.mxu0 0
        %432 = vmatpush.bf16.msra.mxu0 0
        %433 = vmatpush.bf16.msra.mxu0 0
        %434 = vmatpush.bf16.msra.mxu0 0
        %435 = vmatpush.bf16.msra.mxu0 %v401
        %436 = vmatmul.bf16.gmra.mxu0 %v395
        %v437 = vpop.f32.mrf.mxu0
        %v438 = vadd.f32 0.0, %v437
        %v439 = vpop.f32.mrf.mxu0
        %440 = vdwg.mxu0
        %441 = vmatpush.bf16.msra.mxu0 0
        %442 = vmatpush.bf16.msra.mxu0 0
        %443 = vmatpush.bf16.msra.mxu0 0
        %444 = vmatpush.bf16.msra.mxu0 0
        %445 = vmatpush.bf16.msra.mxu0 0
        %446 = vmatpush.bf16.msra.mxu0 0
        %447 = vmatpush.bf16.msra.mxu0 0
        %448 = vmatpush.bf16.msra.mxu0 %v404
        %449 = vmatmul.bf16.gmra.mxu0 %v395
        %v450 = vpop.f32.mrf.mxu0
        %v451 = vadd.f32 0.0, %v450
        %v452 = vpop.f32.mrf.mxu0
        %453 = vdwg.mxu0
        %454 = vmatpush.bf16.msra.mxu0 0
        %455 = vmatpush.bf16.msra.mxu0 0
        %456 = vmatpush.bf16.msra.mxu0 0
        %457 = vmatpush.bf16.msra.mxu0 0
        %458 = vmatpush.bf16.msra.mxu0 0
        %459 = vmatpush.bf16.msra.mxu0 0
        %460 = vmatpush.bf16.msra.mxu0 0
        %461 = vmatpush.bf16.msra.mxu0 %v407
        %462 = vmatmul.bf16.gmra.mxu0 %v395
        %v463 = vpop.f32.mrf.mxu0
        %v464 = vadd.f32 0.0, %v463
        %v465 = vpop.f32.mrf.mxu0
        %466 = vdwg.mxu0
        %467 = vmatpush.bf16.msra.mxu0 0
        %468 = vmatpush.bf16.msra.mxu0 0
        %469 = vmatpush.bf16.msra.mxu0 0
        %470 = vmatpush.bf16.msra.mxu0 0
        %471 = vmatpush.bf16.msra.mxu0 0
        %472 = vmatpush.bf16.msra.mxu0 0
        %473 = vmatpush.bf16.msra.mxu0 0
        %474 = vmatpush.bf16.msra.mxu0 %v410
        %475 = vmatmul.bf16.gmra.mxu0 %v395
        %v476 = vpop.f32.mrf.mxu0
        %v477 = vadd.f32 0.0, %v476
        %v478 = vpop.f32.mrf.mxu0
        %479 = vdwg.mxu0
        %480 = vmatpush.bf16.msra.mxu0 0
        %481 = vmatpush.bf16.msra.mxu0 0
        %482 = vmatpush.bf16.msra.mxu0 0
        %483 = vmatpush.bf16.msra.mxu0 0
        %484 = vmatpush.bf16.msra.mxu0 0
        %485 = vmatpush.bf16.msra.mxu0 0
        %486 = vmatpush.bf16.msra.mxu0 0
        %487 = vmatpush.bf16.msra.mxu0 %v413
        %488 = vmatmul.bf16.gmra.mxu0 %v395
        %v489 = vpop.f32.mrf.mxu0
        %v490 = vadd.f32 0.0, %v489
        %v491 = vpop.f32.mrf.mxu0
        %492 = vdwg.mxu0
        %v494 = vsel %vm393, %v304, 0
        %v496 = vsel %vm397, %v348, 0
        %v499 = vsel %vm397, %v340, 0
        %v502 = vsel %vm397, %v341, 0
        %v505 = vsel %vm397, %v342, 0
        %v508 = vsel %vm397, %v343, 0
        %v511 = vsel %vm397, %v344, 0
        %513 = vmatpush.bf16.msra.mxu0 0
        %514 = vmatpush.bf16.msra.mxu0 0
        %515 = vmatpush.bf16.msra.mxu0 0
        %516 = vmatpush.bf16.msra.mxu0 0
        %517 = vmatpush.bf16.msra.mxu0 0
        %518 = vmatpush.bf16.msra.mxu0 0
        %519 = vmatpush.bf16.msra.mxu0 0
        %520 = vmatpush.bf16.msra.mxu0 %v496
        %521 = vmatmul.bf16.gmra.mxu0 %v494
        %v522 = vpop.f32.mrf.mxu0
        %v523 = vadd.f32 %v425, %v522
        %v524 = vpop.f32.mrf.mxu0
        %525 = vdwg.mxu0
        %526 = vmatpush.bf16.msra.mxu0 0
        %527 = vmatpush.bf16.msra.mxu0 0
        %528 = vmatpush.bf16.msra.mxu0 0
        %529 = vmatpush.bf16.msra.mxu0 0
        %530 = vmatpush.bf16.msra.mxu0 0
        %531 = vmatpush.bf16.msra.mxu0 0
        %532 = vmatpush.bf16.msra.mxu0 0
        %533 = vmatpush.bf16.msra.mxu0 %v499
        %534 = vmatmul.bf16.gmra.mxu0 %v494
        %v535 = vpop.f32.mrf.mxu0
        %v536 = vadd.f32 %v438, %v535
        %v537 = vpop.f32.mrf.mxu0
        %538 = vdwg.mxu0
        %539 = vmatpush.bf16.msra.mxu0 0
        %540 = vmatpush.bf16.msra.mxu0 0
        %541 = vmatpush.bf16.msra.mxu0 0
        %542 = vmatpush.bf16.msra.mxu0 0
        %543 = vmatpush.bf16.msra.mxu0 0
        %544 = vmatpush.bf16.msra.mxu0 0
        %545 = vmatpush.bf16.msra.mxu0 0
        %546 = vmatpush.bf16.msra.mxu0 %v502
        %547 = vmatmul.bf16.gmra.mxu0 %v494
        %v548 = vpop.f32.mrf.mxu0
        %v549 = vadd.f32 %v451, %v548
        %v550 = vpop.f32.mrf.mxu0
        %551 = vdwg.mxu0
        %552 = vmatpush.bf16.msra.mxu0 0
        %553 = vmatpush.bf16.msra.mxu0 0
        %554 = vmatpush.bf16.msra.mxu0 0
        %555 = vmatpush.bf16.msra.mxu0 0
        %556 = vmatpush.bf16.msra.mxu0 0
        %557 = vmatpush.bf16.msra.mxu0 0
        %558 = vmatpush.bf16.msra.mxu0 0
        %559 = vmatpush.bf16.msra.mxu0 %v505
        %560 = vmatmul.bf16.gmra.mxu0 %v494
        %v561 = vpop.f32.mrf.mxu0
        %v562 = vadd.f32 %v464, %v561
        %v563 = vpop.f32.mrf.mxu0
        %564 = vdwg.mxu0
        %565 = vmatpush.bf16.msra.mxu0 0
        %566 = vmatpush.bf16.msra.mxu0 0
        %567 = vmatpush.bf16.msra.mxu0 0
        %568 = vmatpush.bf16.msra.mxu0 0
        %569 = vmatpush.bf16.msra.mxu0 0
        %570 = vmatpush.bf16.msra.mxu0 0
        %571 = vmatpush.bf16.msra.mxu0 0
        %572 = vmatpush.bf16.msra.mxu0 %v508
        %573 = vmatmul.bf16.gmra.mxu0 %v494
        %v574 = vpop.f32.mrf.mxu0
        %v575 = vadd.f32 %v477, %v574
        %v576 = vpop.f32.mrf.mxu0
        %577 = vdwg.mxu0
        %578 = vmatpush.bf16.msra.mxu0 0
        %579 = vmatpush.bf16.msra.mxu0 0
        %580 = vmatpush.bf16.msra.mxu0 0
        %581 = vmatpush.bf16.msra.mxu0 0
        %582 = vmatpush.bf16.msra.mxu0 0
        %583 = vmatpush.bf16.msra.mxu0 0
        %584 = vmatpush.bf16.msra.mxu0 0
        %585 = vmatpush.bf16.msra.mxu0 %v511
        %586 = vmatmul.bf16.gmra.mxu0 %v494
        %v587 = vpop.f32.mrf.mxu0
        %v588 = vadd.f32 %v490, %v587
        %v589 = vpop.f32.mrf.mxu0
        %590 = vdwg.mxu0
        %s591 = scalar_lea.vmem %s1, 4
        %v592 = vld [vmem:[%s591] sm:$0x3]
        %593 = vst [vmem:[#allocation1] ss:$4 sm:$0xff] %v294
        %v594 = vld.sshfl [vmem:[#allocation1 + $0x8] sm:$0xff pattern:$0x73625140]
        %596 = vrot.lane.b32.xlu0 %v594, 26
        %v597 = vpop.permute.xlu0 %596
        %598 = vst [vmem:[#allocation1] ss:$4 sm:$0xff] %v293
        %s599 = scalar_lea.vmem [#allocation1], 32
        %600 = vst [vmem:[%s599] ss:$4 sm:$0xff] %v294
        %v601 = vld.sshfl [vmem:[#allocation1] sm:$0xff pattern:$0x73625140]
        %v603 = vld.sshfl [vmem:[#allocation1 + $0x8] sm:$0xff pattern:$0x73625140]
        %v605 = vld.sshfl [vmem:[#allocation1 + $0x10] sm:$0xff pattern:$0x73625140]
        %v607 = vld.sshfl [vmem:[#allocation1 + $0x18] sm:$0xff pattern:$0x73625140]
        %v609 = vld.sshfl [vmem:[#allocation1 + $0x20] sm:$0xff pattern:$0x73625140]
        %v611 = vld.sshfl [vmem:[#allocation1 + $0x28] sm:$0xff pattern:$0x73625140]
        %613 = vrot.lane.b32.xlu0 %v601, 26
        %v614 = vpop.permute.xlu0 %613
        %615 = vrot.lane.b32.xlu0 %v603, 26
        %v616 = vpop.permute.xlu0 %615
        %617 = vrot.lane.b32.xlu0 %v605, 26
        %v618 = vpop.permute.xlu0 %617
        %619 = vrot.lane.b32.xlu0 %v607, 26
        %v620 = vpop.permute.xlu0 %619
        %621 = vrot.lane.b32.xlu0 %v609, 26
        %v622 = vpop.permute.xlu0 %621
        %623 = vrot.lane.b32.xlu0 %v611, 26
        %v624 = vpop.permute.xlu0 %623
        %vm625 = vcmask 211968
        %v626 = vsel %vm625, %v614, %v616
        %v627 = vsel %vm625, %v616, %v618
        %v628 = vsel %vm625, %v618, %v620
        %v629 = vsel %vm625, %v620, %v622
        %v630 = vsel %vm625, %v622, %v624
        %vm631 = vcmask 211968
        %v634 = vsel %vm631, %v597, %v614
        %v636 = vsel %vm393, %v592, 0
        %v638 = vsel %vm397, %v634, 0
        %v641 = vsel %vm397, %v626, 0
        %v644 = vsel %vm397, %v627, 0
        %v647 = vsel %vm397, %v628, 0
        %v650 = vsel %vm397, %v629, 0
        %v653 = vsel %vm397, %v630, 0
        %655 = vmatpush.bf16.msra.mxu0 0
        %656 = vmatpush.bf16.msra.mxu0 0
        %657 = vmatpush.bf16.msra.mxu0 0
        %658 = vmatpush.bf16.msra.mxu0 0
        %659 = vmatpush.bf16.msra.mxu0 0
        %660 = vmatpush.bf16.msra.mxu0 0
        %661 = vmatpush.bf16.msra.mxu0 0
        %662 = vmatpush.bf16.msra.mxu0 %v638
        %663 = vmatmul.bf16.gmra.mxu0 %v636
        %v664 = vpop.f32.mrf.mxu0
        %v665 = vadd.f32 0.0, %v664
        %v666 = vpop.f32.mrf.mxu0
        %667 = vdwg.mxu0
        %668 = vmatpush.bf16.msra.mxu0 0
        %669 = vmatpush.bf16.msra.mxu0 0
        %670 = vmatpush.bf16.msra.mxu0 0
        %671 = vmatpush.bf16.msra.mxu0 0
        %672 = vmatpush.bf16.msra.mxu0 0
        %673 = vmatpush.bf16.msra.mxu0 0
        %674 = vmatpush.bf16.msra.mxu0 0
        %675 = vmatpush.bf16.msra.mxu0 %v641
        %676 = vmatmul.bf16.gmra.mxu0 %v636
        %v677 = vpop.f32.mrf.mxu0
        %v678 = vadd.f32 0.0, %v677
        %v679 = vpop.f32.mrf.mxu0
        %680 = vdwg.mxu0
        %681 = vmatpush.bf16.msra.mxu0 0
        %682 = vmatpush.bf16.msra.mxu0 0
        %683 = vmatpush.bf16.msra.mxu0 0
        %684 = vmatpush.bf16.msra.mxu0 0
        %685 = vmatpush.bf16.msra.mxu0 0
        %686 = vmatpush.bf16.msra.mxu0 0
        %687 = vmatpush.bf16.msra.mxu0 0
        %688 = vmatpush.bf16.msra.mxu0 %v644
        %689 = vmatmul.bf16.gmra.mxu0 %v636
        %v690 = vpop.f32.mrf.mxu0
        %v691 = vadd.f32 0.0, %v690
        %v692 = vpop.f32.mrf.mxu0
        %693 = vdwg.mxu0
        %694 = vmatpush.bf16.msra.mxu0 0
        %695 = vmatpush.bf16.msra.mxu0 0
        %696 = vmatpush.bf16.msra.mxu0 0
        %697 = vmatpush.bf16.msra.mxu0 0
        %698 = vmatpush.bf16.msra.mxu0 0
        %699 = vmatpush.bf16.msra.mxu0 0
        %700 = vmatpush.bf16.msra.mxu0 0
        %701 = vmatpush.bf16.msra.mxu0 %v647
        %702 = vmatmul.bf16.gmra.mxu0 %v636
        %v703 = vpop.f32.mrf.mxu0
        %v704 = vadd.f32 0.0, %v703
        %v705 = vpop.f32.mrf.mxu0
        %706 = vdwg.mxu0
        %707 = vmatpush.bf16.msra.mxu0 0
        %708 = vmatpush.bf16.msra.mxu0 0
        %709 = vmatpush.bf16.msra.mxu0 0
        %710 = vmatpush.bf16.msra.mxu0 0
        %711 = vmatpush.bf16.msra.mxu0 0
        %712 = vmatpush.bf16.msra.mxu0 0
        %713 = vmatpush.bf16.msra.mxu0 0
        %714 = vmatpush.bf16.msra.mxu0 %v650
        %715 = vmatmul.bf16.gmra.mxu0 %v636
        %v716 = vpop.f32.mrf.mxu0
        %v717 = vadd.f32 0.0, %v716
        %v718 = vpop.f32.mrf.mxu0
        %719 = vdwg.mxu0
        %720 = vmatpush.bf16.msra.mxu0 0
        %721 = vmatpush.bf16.msra.mxu0 0
        %722 = vmatpush.bf16.msra.mxu0 0
        %723 = vmatpush.bf16.msra.mxu0 0
        %724 = vmatpush.bf16.msra.mxu0 0
        %725 = vmatpush.bf16.msra.mxu0 0
        %726 = vmatpush.bf16.msra.mxu0 0
        %727 = vmatpush.bf16.msra.mxu0 %v653
        %728 = vmatmul.bf16.gmra.mxu0 %v636
        %v729 = vpop.f32.mrf.mxu0
        %v730 = vadd.f32 0.0, %v729
        %v731 = vpop.f32.mrf.mxu0
        %732 = vdwg.mxu0
        %v733 = vadd.f32 %v523, %v665
        %v734 = vadd.f32 %v536, %v678
        %v735 = vadd.f32 %v549, %v691
        %v736 = vadd.f32 %v562, %v704
        %v737 = vadd.f32 %v575, %v717
        %v738 = vadd.f32 %v588, %v730
        %s739 = scalar_lea.vmem %s1, 6
        %v740 = vld [vmem:[%s739] sm:$0x3]
        %742 = vst [vmem:[#allocation1] ss:$4 sm:$0xff] %v300
        %v743 = vld.sshfl [vmem:[#allocation1 + $0x8] sm:$0xff pattern:$0x73625140]
        %745 = vrot.lane.b32.xlu0 %v743, 27
        %v746 = vpop.permute.xlu0 %745
        %748 = vst [vmem:[#allocation1] ss:$4 sm:$0xff] %v299
        %s749 = scalar_lea.vmem [#allocation1], 32
        %750 = vst [vmem:[%s749] ss:$4 sm:$0xff] %v300
        %v751 = vld.sshfl [vmem:[#allocation1] sm:$0xff pattern:$0x73625140]
        %v753 = vld.sshfl [vmem:[#allocation1 + $0x8] sm:$0xff pattern:$0x73625140]
        %v755 = vld.sshfl [vmem:[#allocation1 + $0x10] sm:$0xff pattern:$0x73625140]
        %v757 = vld.sshfl [vmem:[#allocation1 + $0x18] sm:$0xff pattern:$0x73625140]
        %v759 = vld.sshfl [vmem:[#allocation1 + $0x20] sm:$0xff pattern:$0x73625140]
        %v761 = vld.sshfl [vmem:[#allocation1 + $0x28] sm:$0xff pattern:$0x73625140]
        %763 = vrot.lane.b32.xlu0 %v751, 27
        %v764 = vpop.permute.xlu0 %763
        %765 = vrot.lane.b32.xlu0 %v753, 27
        %v766 = vpop.permute.xlu0 %765
        %767 = vrot.lane.b32.xlu0 %v755, 27
        %v768 = vpop.permute.xlu0 %767
        %769 = vrot.lane.b32.xlu0 %v757, 27
        %v770 = vpop.permute.xlu0 %769
        %771 = vrot.lane.b32.xlu0 %v759, 27
        %v772 = vpop.permute.xlu0 %771
        %773 = vrot.lane.b32.xlu0 %v761, 27
        %v774 = vpop.permute.xlu0 %773
        %v775 = vsel %vm339, %v764, %v766
        %v776 = vsel %vm339, %v766, %v768
        %v777 = vsel %vm339, %v768, %v770
        %v778 = vsel %vm339, %v770, %v772
        %v779 = vsel %vm339, %v772, %v774
        %v782 = vsel %vm345, %v746, %v764
        %v784 = vsel %vm393, %v740, 0
        %v786 = vsel %vm397, %v782, 0
        %v789 = vsel %vm397, %v775, 0
        %v792 = vsel %vm397, %v776, 0
        %v795 = vsel %vm397, %v777, 0
        %v798 = vsel %vm397, %v778, 0
        %v801 = vsel %vm397, %v779, 0
        %803 = vmatpush.bf16.msra.mxu0 0
        %804 = vmatpush.bf16.msra.mxu0 0
        %805 = vmatpush.bf16.msra.mxu0 0
        %806 = vmatpush.bf16.msra.mxu0 0
        %807 = vmatpush.bf16.msra.mxu0 0
        %808 = vmatpush.bf16.msra.mxu0 0
        %809 = vmatpush.bf16.msra.mxu0 0
        %810 = vmatpush.bf16.msra.mxu0 %v786
        %811 = vmatmul.bf16.gmra.mxu0 %v784
        %v812 = vpop.f32.mrf.mxu0
        %v813 = vadd.f32 0.0, %v812
        %v814 = vpop.f32.mrf.mxu0
        %815 = vdwg.mxu0
        %816 = vmatpush.bf16.msra.mxu0 0
        %817 = vmatpush.bf16.msra.mxu0 0
        %818 = vmatpush.bf16.msra.mxu0 0
        %819 = vmatpush.bf16.msra.mxu0 0
        %820 = vmatpush.bf16.msra.mxu0 0
        %821 = vmatpush.bf16.msra.mxu0 0
        %822 = vmatpush.bf16.msra.mxu0 0
        %823 = vmatpush.bf16.msra.mxu0 %v789
        %824 = vmatmul.bf16.gmra.mxu0 %v784
        %v825 = vpop.f32.mrf.mxu0
        %v826 = vadd.f32 0.0, %v825
        %v827 = vpop.f32.mrf.mxu0
        %828 = vdwg.mxu0
        %829 = vmatpush.bf16.msra.mxu0 0
        %830 = vmatpush.bf16.msra.mxu0 0
        %831 = vmatpush.bf16.msra.mxu0 0
        %832 = vmatpush.bf16.msra.mxu0 0
        %833 = vmatpush.bf16.msra.mxu0 0
        %834 = vmatpush.bf16.msra.mxu0 0
        %835 = vmatpush.bf16.msra.mxu0 0
        %836 = vmatpush.bf16.msra.mxu0 %v792
        %837 = vmatmul.bf16.gmra.mxu0 %v784
        %v838 = vpop.f32.mrf.mxu0
        %v839 = vadd.f32 0.0, %v838
        %v840 = vpop.f32.mrf.mxu0
        %841 = vdwg.mxu0
        %842 = vmatpush.bf16.msra.mxu0 0
        %843 = vmatpush.bf16.msra.mxu0 0
        %844 = vmatpush.bf16.msra.mxu0 0
        %845 = vmatpush.bf16.msra.mxu0 0
        %846 = vmatpush.bf16.msra.mxu0 0
        %847 = vmatpush.bf16.msra.mxu0 0
        %848 = vmatpush.bf16.msra.mxu0 0
        %849 = vmatpush.bf16.msra.mxu0 %v795
        %850 = vmatmul.bf16.gmra.mxu0 %v784
        %v851 = vpop.f32.mrf.mxu0
        %v852 = vadd.f32 0.0, %v851
        %v853 = vpop.f32.mrf.mxu0
        %854 = vdwg.mxu0
        %855 = vmatpush.bf16.msra.mxu0 0
        %856 = vmatpush.bf16.msra.mxu0 0
        %857 = vmatpush.bf16.msra.mxu0 0
        %858 = vmatpush.bf16.msra.mxu0 0
        %859 = vmatpush.bf16.msra.mxu0 0
        %860 = vmatpush.bf16.msra.mxu0 0
        %861 = vmatpush.bf16.msra.mxu0 0
        %862 = vmatpush.bf16.msra.mxu0 %v798
        %863 = vmatmul.bf16.gmra.mxu0 %v784
        %v864 = vpop.f32.mrf.mxu0
        %v865 = vadd.f32 0.0, %v864
        %v866 = vpop.f32.mrf.mxu0
        %867 = vdwg.mxu0
        %868 = vmatpush.bf16.msra.mxu0 0
        %869 = vmatpush.bf16.msra.mxu0 0
        %870 = vmatpush.bf16.msra.mxu0 0
        %871 = vmatpush.bf16.msra.mxu0 0
        %872 = vmatpush.bf16.msra.mxu0 0
        %873 = vmatpush.bf16.msra.mxu0 0
        %874 = vmatpush.bf16.msra.mxu0 0
        %875 = vmatpush.bf16.msra.mxu0 %v801
        %876 = vmatmul.bf16.gmra.mxu0 %v784
        %v877 = vpop.f32.mrf.mxu0
        %v878 = vadd.f32 0.0, %v877
        %v879 = vpop.f32.mrf.mxu0
        %880 = vdwg.mxu0
        %v881 = vadd.f32 %v733, %v813
        %v882 = vadd.f32 %v734, %v826
        %v883 = vadd.f32 %v735, %v839
        %v884 = vadd.f32 %v736, %v852
        %v885 = vadd.f32 %v737, %v865
        %v886 = vadd.f32 %v738, %v878
        %s887 = scalar_lea.vmem %s1, 8
        %v888 = vld [vmem:[%s887] sm:$0x3]
        %890 = vst [vmem:[#allocation1] ss:$4 sm:$0xff] %v303
        %v891 = vld.sshfl [vmem:[#allocation1 + $0x8] sm:$0xff pattern:$0x73625140]
        %893 = vrot.lane.b32.xlu0 %v891, 27
        %v894 = vpop.permute.xlu0 %893
        %896 = vst [vmem:[#allocation1] ss:$4 sm:$0xff] %v302
        %s897 = scalar_lea.vmem [#allocation1], 32
        %898 = vst [vmem:[%s897] ss:$4 sm:$0xff] %v303
        %v899 = vld.sshfl [vmem:[#allocation1] sm:$0xff pattern:$0x73625140]
        %v901 = vld.sshfl [vmem:[#allocation1 + $0x8] sm:$0xff pattern:$0x73625140]
        %v903 = vld.sshfl [vmem:[#allocation1 + $0x10] sm:$0xff pattern:$0x73625140]
        %v905 = vld.sshfl [vmem:[#allocation1 + $0x18] sm:$0xff pattern:$0x73625140]
        %v907 = vld.sshfl [vmem:[#allocation1 + $0x20] sm:$0xff pattern:$0x73625140]
        %v909 = vld.sshfl [vmem:[#allocation1 + $0x28] sm:$0xff pattern:$0x73625140]
        %911 = vrot.lane.b32.xlu0 %v899, 27
        %v912 = vpop.permute.xlu0 %911
        %913 = vrot.lane.b32.xlu0 %v901, 27
        %v914 = vpop.permute.xlu0 %913
        %915 = vrot.lane.b32.xlu0 %v903, 27
        %v916 = vpop.permute.xlu0 %915
        %917 = vrot.lane.b32.xlu0 %v905, 27
        %v918 = vpop.permute.xlu0 %917
        %919 = vrot.lane.b32.xlu0 %v907, 27
        %v920 = vpop.permute.xlu0 %919
        %921 = vrot.lane.b32.xlu0 %v909, 27
        %v922 = vpop.permute.xlu0 %921
        %v923 = vsel %vm339, %v912, %v914
        %v924 = vsel %vm339, %v914, %v916
        %v925 = vsel %vm339, %v916, %v918
        %v926 = vsel %vm339, %v918, %v920
        %v927 = vsel %vm339, %v920, %v922
        %v930 = vsel %vm345, %v894, %v912
        %v932 = vsel %vm393, %v888, 0
        %v934 = vsel %vm397, %v930, 0
        %v937 = vsel %vm397, %v923, 0
        %v940 = vsel %vm397, %v924, 0
        %v943 = vsel %vm397, %v925, 0
        %v946 = vsel %vm397, %v926, 0
        %v949 = vsel %vm397, %v927, 0
        %951 = vmatpush.bf16.msra.mxu0 0
        %952 = vmatpush.bf16.msra.mxu0 0
        %953 = vmatpush.bf16.msra.mxu0 0
        %954 = vmatpush.bf16.msra.mxu0 0
        %955 = vmatpush.bf16.msra.mxu0 0
        %956 = vmatpush.bf16.msra.mxu0 0
        %957 = vmatpush.bf16.msra.mxu0 0
        %958 = vmatpush.bf16.msra.mxu0 %v934
        %959 = vmatmul.bf16.gmra.mxu0 %v932
        %v960 = vpop.f32.mrf.mxu0
        %v961 = vadd.f32 0.0, %v960
        %v962 = vpop.f32.mrf.mxu0
        %963 = vdwg.mxu0
        %964 = vmatpush.bf16.msra.mxu0 0
        %965 = vmatpush.bf16.msra.mxu0 0
        %966 = vmatpush.bf16.msra.mxu0 0
        %967 = vmatpush.bf16.msra.mxu0 0
        %968 = vmatpush.bf16.msra.mxu0 0
        %969 = vmatpush.bf16.msra.mxu0 0
        %970 = vmatpush.bf16.msra.mxu0 0
        %971 = vmatpush.bf16.msra.mxu0 %v937
        %972 = vmatmul.bf16.gmra.mxu0 %v932
        %v973 = vpop.f32.mrf.mxu0
        %v974 = vadd.f32 0.0, %v973
        %v975 = vpop.f32.mrf.mxu0
        %976 = vdwg.mxu0
        %977 = vmatpush.bf16.msra.mxu0 0
        %978 = vmatpush.bf16.msra.mxu0 0
        %979 = vmatpush.bf16.msra.mxu0 0
        %980 = vmatpush.bf16.msra.mxu0 0
        %981 = vmatpush.bf16.msra.mxu0 0
        %982 = vmatpush.bf16.msra.mxu0 0
        %983 = vmatpush.bf16.msra.mxu0 0
        %984 = vmatpush.bf16.msra.mxu0 %v940
        %985 = vmatmul.bf16.gmra.mxu0 %v932
        %v986 = vpop.f32.mrf.mxu0
        %v987 = vadd.f32 0.0, %v986
        %v988 = vpop.f32.mrf.mxu0
        %989 = vdwg.mxu0
        %990 = vmatpush.bf16.msra.mxu0 0
        %991 = vmatpush.bf16.msra.mxu0 0
        %992 = vmatpush.bf16.msra.mxu0 0
        %993 = vmatpush.bf16.msra.mxu0 0
        %994 = vmatpush.bf16.msra.mxu0 0
        %995 = vmatpush.bf16.msra.mxu0 0
        %996 = vmatpush.bf16.msra.mxu0 0
        %997 = vmatpush.bf16.msra.mxu0 %v943
        %998 = vmatmul.bf16.gmra.mxu0 %v932
        %v999 = vpop.f32.mrf.mxu0
        %v1000 = vadd.f32 0.0, %v999
        %v1001 = vpop.f32.mrf.mxu0
        %1002 = vdwg.mxu0
        %1003 = vmatpush.bf16.msra.mxu0 0
        %1004 = vmatpush.bf16.msra.mxu0 0
        %1005 = vmatpush.bf16.msra.mxu0 0
        %1006 = vmatpush.bf16.msra.mxu0 0
        %1007 = vmatpush.bf16.msra.mxu0 0
        %1008 = vmatpush.bf16.msra.mxu0 0
        %1009 = vmatpush.bf16.msra.mxu0 0
        %1010 = vmatpush.bf16.msra.mxu0 %v946
        %1011 = vmatmul.bf16.gmra.mxu0 %v932
        %v1012 = vpop.f32.mrf.mxu0
        %v1013 = vadd.f32 0.0, %v1012
        %v1014 = vpop.f32.mrf.mxu0
        %1015 = vdwg.mxu0
        %1016 = vmatpush.bf16.msra.mxu0 0
        %1017 = vmatpush.bf16.msra.mxu0 0
        %1018 = vmatpush.bf16.msra.mxu0 0
        %1019 = vmatpush.bf16.msra.mxu0 0
        %1020 = vmatpush.bf16.msra.mxu0 0
        %1021 = vmatpush.bf16.msra.mxu0 0
        %1022 = vmatpush.bf16.msra.mxu0 0
        %1023 = vmatpush.bf16.msra.mxu0 %v949
        %1024 = vmatmul.bf16.gmra.mxu0 %v932
        %v1025 = vpop.f32.mrf.mxu0
        %v1026 = vadd.f32 0.0, %v1025
        %v1027 = vpop.f32.mrf.mxu0
        %1028 = vdwg.mxu0
        %v1029 = vadd.f32 %v881, %v961
        %v1030 = vadd.f32 %v882, %v974
        %v1031 = vadd.f32 %v883, %v987
        %v1032 = vadd.f32 %v884, %v1000
        %v1033 = vadd.f32 %v885, %v1013
        %v1034 = vadd.f32 %v886, %v1026
        %s1035 = scalar_lea.vmem %s1, 10
        %v1036 = vld [vmem:[%s1035] sm:$0x3]
        %1037 = vst [vmem:[#allocation1] ss:$4 sm:$0xff] %v300
        %v1038 = vld.sshfl [vmem:[#allocation1 + $0x8] sm:$0xff pattern:$0x73625140]
        %1040 = vrot.lane.b32.xlu0 %v1038, 26
        %v1041 = vpop.permute.xlu0 %1040
        %1042 = vst [vmem:[#allocation1] ss:$4 sm:$0xff] %v299
        %s1043 = scalar_lea.vmem [#allocation1], 32
        %1044 = vst [vmem:[%s1043] ss:$4 sm:$0xff] %v300
        %v1045 = vld.sshfl [vmem:[#allocation1] sm:$0xff pattern:$0x73625140]
        %v1047 = vld.sshfl [vmem:[#allocation1 + $0x8] sm:$0xff pattern:$0x73625140]
        %v1049 = vld.sshfl [vmem:[#allocation1 + $0x10] sm:$0xff pattern:$0x73625140]
        %v1051 = vld.sshfl [vmem:[#allocation1 + $0x18] sm:$0xff pattern:$0x73625140]
        %v1053 = vld.sshfl [vmem:[#allocation1 + $0x20] sm:$0xff pattern:$0x73625140]
        %v1055 = vld.sshfl [vmem:[#allocation1 + $0x28] sm:$0xff pattern:$0x73625140]
        %1057 = vrot.lane.b32.xlu0 %v1045, 26
        %v1058 = vpop.permute.xlu0 %1057
        %1059 = vrot.lane.b32.xlu0 %v1047, 26
        %v1060 = vpop.permute.xlu0 %1059
        %1061 = vrot.lane.b32.xlu0 %v1049, 26
        %v1062 = vpop.permute.xlu0 %1061
        %1063 = vrot.lane.b32.xlu0 %v1051, 26
        %v1064 = vpop.permute.xlu0 %1063
        %1065 = vrot.lane.b32.xlu0 %v1053, 26
        %v1066 = vpop.permute.xlu0 %1065
        %1067 = vrot.lane.b32.xlu0 %v1055, 26
        %v1068 = vpop.permute.xlu0 %1067
        %v1069 = vsel %vm625, %v1058, %v1060
        %v1070 = vsel %vm625, %v1060, %v1062
        %v1071 = vsel %vm625, %v1062, %v1064
        %v1072 = vsel %vm625, %v1064, %v1066
        %v1073 = vsel %vm625, %v1066, %v1068
        %v1076 = vsel %vm631, %v1041, %v1058
        %v1078 = vsel %vm393, %v1036, 0
        %v1080 = vsel %vm397, %v1076, 0
        %v1083 = vsel %vm397, %v1069, 0
        %v1086 = vsel %vm397, %v1070, 0
        %v1089 = vsel %vm397, %v1071, 0
        %v1092 = vsel %vm397, %v1072, 0
        %v1095 = vsel %vm397, %v1073, 0
        %1097 = vmatpush.bf16.msra.mxu0 0
        %1098 = vmatpush.bf16.msra.mxu0 0
        %1099 = vmatpush.bf16.msra.mxu0 0
        %1100 = vmatpush.bf16.msra.mxu0 0
        %1101 = vmatpush.bf16.msra.mxu0 0
        %1102 = vmatpush.bf16.msra.mxu0 0
        %1103 = vmatpush.bf16.msra.mxu0 0
        %1104 = vmatpush.bf16.msra.mxu0 %v1080
        %1105 = vmatmul.bf16.gmra.mxu0 %v1078
        %v1106 = vpop.f32.mrf.mxu0
        %v1107 = vadd.f32 0.0, %v1106
        %v1108 = vpop.f32.mrf.mxu0
        %1109 = vdwg.mxu0
        %1110 = vmatpush.bf16.msra.mxu0 0
        %1111 = vmatpush.bf16.msra.mxu0 0
        %1112 = vmatpush.bf16.msra.mxu0 0
        %1113 = vmatpush.bf16.msra.mxu0 0
        %1114 = vmatpush.bf16.msra.mxu0 0
        %1115 = vmatpush.bf16.msra.mxu0 0
        %1116 = vmatpush.bf16.msra.mxu0 0
        %1117 = vmatpush.bf16.msra.mxu0 %v1083
        %1118 = vmatmul.bf16.gmra.mxu0 %v1078
        %v1119 = vpop.f32.mrf.mxu0
        %v1120 = vadd.f32 0.0, %v1119
        %v1121 = vpop.f32.mrf.mxu0
        %1122 = vdwg.mxu0
        %1123 = vmatpush.bf16.msra.mxu0 0
        %1124 = vmatpush.bf16.msra.mxu0 0
        %1125 = vmatpush.bf16.msra.mxu0 0
        %1126 = vmatpush.bf16.msra.mxu0 0
        %1127 = vmatpush.bf16.msra.mxu0 0
        %1128 = vmatpush.bf16.msra.mxu0 0
        %1129 = vmatpush.bf16.msra.mxu0 0
        %1130 = vmatpush.bf16.msra.mxu0 %v1086
        %1131 = vmatmul.bf16.gmra.mxu0 %v1078
        %v1132 = vpop.f32.mrf.mxu0
        %v1133 = vadd.f32 0.0, %v1132
        %v1134 = vpop.f32.mrf.mxu0
        %1135 = vdwg.mxu0
        %1136 = vmatpush.bf16.msra.mxu0 0
        %1137 = vmatpush.bf16.msra.mxu0 0
        %1138 = vmatpush.bf16.msra.mxu0 0
        %1139 = vmatpush.bf16.msra.mxu0 0
        %1140 = vmatpush.bf16.msra.mxu0 0
        %1141 = vmatpush.bf16.msra.mxu0 0
        %1142 = vmatpush.bf16.msra.mxu0 0
        %1143 = vmatpush.bf16.msra.mxu0 %v1089
        %1144 = vmatmul.bf16.gmra.mxu0 %v1078
        %v1145 = vpop.f32.mrf.mxu0
        %v1146 = vadd.f32 0.0, %v1145
        %v1147 = vpop.f32.mrf.mxu0
        %1148 = vdwg.mxu0
        %1149 = vmatpush.bf16.msra.mxu0 0
        %1150 = vmatpush.bf16.msra.mxu0 0
        %1151 = vmatpush.bf16.msra.mxu0 0
        %1152 = vmatpush.bf16.msra.mxu0 0
        %1153 = vmatpush.bf16.msra.mxu0 0
        %1154 = vmatpush.bf16.msra.mxu0 0
        %1155 = vmatpush.bf16.msra.mxu0 0
        %1156 = vmatpush.bf16.msra.mxu0 %v1092
        %1157 = vmatmul.bf16.gmra.mxu0 %v1078
        %v1158 = vpop.f32.mrf.mxu0
        %v1159 = vadd.f32 0.0, %v1158
        %v1160 = vpop.f32.mrf.mxu0
        %1161 = vdwg.mxu0
        %1162 = vmatpush.bf16.msra.mxu0 0
        %1163 = vmatpush.bf16.msra.mxu0 0
        %1164 = vmatpush.bf16.msra.mxu0 0
        %1165 = vmatpush.bf16.msra.mxu0 0
        %1166 = vmatpush.bf16.msra.mxu0 0
        %1167 = vmatpush.bf16.msra.mxu0 0
        %1168 = vmatpush.bf16.msra.mxu0 0
        %1169 = vmatpush.bf16.msra.mxu0 %v1095
        %1170 = vmatmul.bf16.gmra.mxu0 %v1078
        %v1171 = vpop.f32.mrf.mxu0
        %v1172 = vadd.f32 0.0, %v1171
        %v1173 = vpop.f32.mrf.mxu0
        %1174 = vdwg.mxu0
        %v1175 = vadd.f32 %v1029, %v1107
        %v1176 = vadd.f32 %v1030, %v1120
        %v1177 = vadd.f32 %v1031, %v1133
        %v1178 = vadd.f32 %v1032, %v1146
        %v1179 = vadd.f32 %v1033, %v1159
        %v1180 = vadd.f32 %v1034, %v1172
        %s1181 = scalar_lea.vmem %s1, 12
        %v1182 = vld [vmem:[%s1181] sm:$0x3]
        %1183 = vst [vmem:[#allocation1] ss:$4 sm:$0xff] %v294
        %v1184 = vld.sshfl [vmem:[#allocation1 + $0x8] sm:$0xff pattern:$0x73625140]
        %1186 = vrot.lane.b32.xlu0 %v1184, 1
        %v1187 = vpop.permute.xlu0 %1186
        %1188 = vst [vmem:[#allocation1] ss:$4 sm:$0xff] %v293
        %s1189 = scalar_lea.vmem [#allocation1], 32
        %1190 = vst [vmem:[%s1189] ss:$4 sm:$0xff] %v294
        %v1191 = vld.sshfl [vmem:[#allocation1] sm:$0xff pattern:$0x73625140]
        %v1193 = vld.sshfl [vmem:[#allocation1 + $0x8] sm:$0xff pattern:$0x73625140]
        %v1195 = vld.sshfl [vmem:[#allocation1 + $0x10] sm:$0xff pattern:$0x73625140]
        %v1197 = vld.sshfl [vmem:[#allocation1 + $0x18] sm:$0xff pattern:$0x73625140]
        %v1199 = vld.sshfl [vmem:[#allocation1 + $0x20] sm:$0xff pattern:$0x73625140]
        %v1201 = vld.sshfl [vmem:[#allocation1 + $0x28] sm:$0xff pattern:$0x73625140]
        %1203 = vrot.lane.b32.xlu0 %v1191, 1
        %v1204 = vpop.permute.xlu0 %1203
        %1205 = vrot.lane.b32.xlu0 %v1193, 1
        %v1206 = vpop.permute.xlu0 %1205
        %1207 = vrot.lane.b32.xlu0 %v1195, 1
        %v1208 = vpop.permute.xlu0 %1207
        %1209 = vrot.lane.b32.xlu0 %v1197, 1
        %v1210 = vpop.permute.xlu0 %1209
        %1211 = vrot.lane.b32.xlu0 %v1199, 1
        %v1212 = vpop.permute.xlu0 %1211
        %1213 = vrot.lane.b32.xlu0 %v1201, 1
        %v1214 = vpop.permute.xlu0 %1213
        %vm1215 = vcmask 7168
        %v1216 = vsel %vm1215, %v1204, %v1206
        %v1217 = vsel %vm1215, %v1206, %v1208
        %v1218 = vsel %vm1215, %v1208, %v1210
        %v1219 = vsel %vm1215, %v1210, %v1212
        %v1220 = vsel %vm1215, %v1212, %v1214
        %vm1221 = vcmask 7168
        %v1224 = vsel %vm1221, %v1187, %v1204
        %v1226 = vsel %vm393, %v1182, 0
        %v1228 = vsel %vm397, %v1224, 0
        %v1231 = vsel %vm397, %v1216, 0
        %v1234 = vsel %vm397, %v1217, 0
        %v1237 = vsel %vm397, %v1218, 0
        %v1240 = vsel %vm397, %v1219, 0
        %v1243 = vsel %vm397, %v1220, 0
        %1245 = vmatpush.bf16.msra.mxu0 0
        %1246 = vmatpush.bf16.msra.mxu0 0
        %1247 = vmatpush.bf16.msra.mxu0 0
        %1248 = vmatpush.bf16.msra.mxu0 0
        %1249 = vmatpush.bf16.msra.mxu0 0
        %1250 = vmatpush.bf16.msra.mxu0 0
        %1251 = vmatpush.bf16.msra.mxu0 0
        %1252 = vmatpush.bf16.msra.mxu0 %v1228
        %1253 = vmatmul.bf16.gmra.mxu0 %v1226
        %v1254 = vpop.f32.mrf.mxu0
        %v1255 = vadd.f32 0.0, %v1254
        %v1256 = vpop.f32.mrf.mxu0
        %1257 = vdwg.mxu0
        %1258 = vmatpush.bf16.msra.mxu0 0
        %1259 = vmatpush.bf16.msra.mxu0 0
        %1260 = vmatpush.bf16.msra.mxu0 0
        %1261 = vmatpush.bf16.msra.mxu0 0
        %1262 = vmatpush.bf16.msra.mxu0 0
        %1263 = vmatpush.bf16.msra.mxu0 0
        %1264 = vmatpush.bf16.msra.mxu0 0
        %1265 = vmatpush.bf16.msra.mxu0 %v1231
        %1266 = vmatmul.bf16.gmra.mxu0 %v1226
        %v1267 = vpop.f32.mrf.mxu0
        %v1268 = vadd.f32 0.0, %v1267
        %v1269 = vpop.f32.mrf.mxu0
        %1270 = vdwg.mxu0
        %1271 = vmatpush.bf16.msra.mxu0 0
        %1272 = vmatpush.bf16.msra.mxu0 0
        %1273 = vmatpush.bf16.msra.mxu0 0
        %1274 = vmatpush.bf16.msra.mxu0 0
        %1275 = vmatpush.bf16.msra.mxu0 0
        %1276 = vmatpush.bf16.msra.mxu0 0
        %1277 = vmatpush.bf16.msra.mxu0 0
        %1278 = vmatpush.bf16.msra.mxu0 %v1234
        %1279 = vmatmul.bf16.gmra.mxu0 %v1226
        %v1280 = vpop.f32.mrf.mxu0
        %v1281 = vadd.f32 0.0, %v1280
        %v1282 = vpop.f32.mrf.mxu0
        %1283 = vdwg.mxu0
        %1284 = vmatpush.bf16.msra.mxu0 0
        %1285 = vmatpush.bf16.msra.mxu0 0
        %1286 = vmatpush.bf16.msra.mxu0 0
        %1287 = vmatpush.bf16.msra.mxu0 0
        %1288 = vmatpush.bf16.msra.mxu0 0
        %1289 = vmatpush.bf16.msra.mxu0 0
        %1290 = vmatpush.bf16.msra.mxu0 0
        %1291 = vmatpush.bf16.msra.mxu0 %v1237
        %1292 = vmatmul.bf16.gmra.mxu0 %v1226
        %v1293 = vpop.f32.mrf.mxu0
        %v1294 = vadd.f32 0.0, %v1293
        %v1295 = vpop.f32.mrf.mxu0
        %1296 = vdwg.mxu0
        %1297 = vmatpush.bf16.msra.mxu0 0
        %1298 = vmatpush.bf16.msra.mxu0 0
        %1299 = vmatpush.bf16.msra.mxu0 0
        %1300 = vmatpush.bf16.msra.mxu0 0
        %1301 = vmatpush.bf16.msra.mxu0 0
        %1302 = vmatpush.bf16.msra.mxu0 0
        %1303 = vmatpush.bf16.msra.mxu0 0
        %1304 = vmatpush.bf16.msra.mxu0 %v1240
        %1305 = vmatmul.bf16.gmra.mxu0 %v1226
        %v1306 = vpop.f32.mrf.mxu0
        %v1307 = vadd.f32 0.0, %v1306
        %v1308 = vpop.f32.mrf.mxu0
        %1309 = vdwg.mxu0
        %1310 = vmatpush.bf16.msra.mxu0 0
        %1311 = vmatpush.bf16.msra.mxu0 0
        %1312 = vmatpush.bf16.msra.mxu0 0
        %1313 = vmatpush.bf16.msra.mxu0 0
        %1314 = vmatpush.bf16.msra.mxu0 0
        %1315 = vmatpush.bf16.msra.mxu0 0
        %1316 = vmatpush.bf16.msra.mxu0 0
        %1317 = vmatpush.bf16.msra.mxu0 %v1243
        %1318 = vmatmul.bf16.gmra.mxu0 %v1226
        %v1319 = vpop.f32.mrf.mxu0
        %v1320 = vadd.f32 0.0, %v1319
        %v1321 = vpop.f32.mrf.mxu0
        %1322 = vdwg.mxu0
        %v1323 = vadd.f32 %v1175, %v1255
        %v1324 = vadd.f32 %v1176, %v1268
        %v1325 = vadd.f32 %v1177, %v1281
        %v1326 = vadd.f32 %v1178, %v1294
        %v1327 = vadd.f32 %v1179, %v1307
        %v1328 = vadd.f32 %v1180, %v1320
        %s1329 = scalar_lea.vmem %s1, 14
        %v1330 = vld [vmem:[%s1329] sm:$0x3]
        %1331 = vst [vmem:[#allocation1] ss:$4 sm:$0xff] %v297
        %v1332 = vld.sshfl [vmem:[#allocation1 + $0x8] sm:$0xff pattern:$0x73625140]
        %1334 = vrot.lane.b32.xlu0 %v1332, 1
        %v1335 = vpop.permute.xlu0 %1334
        %1336 = vst [vmem:[#allocation1] ss:$4 sm:$0xff] %v296
        %s1337 = scalar_lea.vmem [#allocation1], 32
        %1338 = vst [vmem:[%s1337] ss:$4 sm:$0xff] %v297
        %v1339 = vld.sshfl [vmem:[#allocation1] sm:$0xff pattern:$0x73625140]
        %v1341 = vld.sshfl [vmem:[#allocation1 + $0x8] sm:$0xff pattern:$0x73625140]
        %v1343 = vld.sshfl [vmem:[#allocation1 + $0x10] sm:$0xff pattern:$0x73625140]
        %v1345 = vld.sshfl [vmem:[#allocation1 + $0x18] sm:$0xff pattern:$0x73625140]
        %v1347 = vld.sshfl [vmem:[#allocation1 + $0x20] sm:$0xff pattern:$0x73625140]
        %v1349 = vld.sshfl [vmem:[#allocation1 + $0x28] sm:$0xff pattern:$0x73625140]
        %1351 = vrot.lane.b32.xlu0 %v1339, 1
        %v1352 = vpop.permute.xlu0 %1351
        %1353 = vrot.lane.b32.xlu0 %v1341, 1
        %v1354 = vpop.permute.xlu0 %1353
        %1355 = vrot.lane.b32.xlu0 %v1343, 1
        %v1356 = vpop.permute.xlu0 %1355
        %1357 = vrot.lane.b32.xlu0 %v1345, 1
        %v1358 = vpop.permute.xlu0 %1357
        %1359 = vrot.lane.b32.xlu0 %v1347, 1
        %v1360 = vpop.permute.xlu0 %1359
        %1361 = vrot.lane.b32.xlu0 %v1349, 1
        %v1362 = vpop.permute.xlu0 %1361
        %v1363 = vsel %vm1215, %v1352, %v1354
        %v1364 = vsel %vm1215, %v1354, %v1356
        %v1365 = vsel %vm1215, %v1356, %v1358
        %v1366 = vsel %vm1215, %v1358, %v1360
        %v1367 = vsel %vm1215, %v1360, %v1362
        %v1370 = vsel %vm1221, %v1335, %v1352
        %v1372 = vsel %vm393, %v1330, 0
        %v1374 = vsel %vm397, %v1370, 0
        %v1377 = vsel %vm397, %v1363, 0
        %v1380 = vsel %vm397, %v1364, 0
        %v1383 = vsel %vm397, %v1365, 0
        %v1386 = vsel %vm397, %v1366, 0
        %v1389 = vsel %vm397, %v1367, 0
        %1391 = vmatpush.bf16.msra.mxu0 0
        %1392 = vmatpush.bf16.msra.mxu0 0
        %1393 = vmatpush.bf16.msra.mxu0 0
        %1394 = vmatpush.bf16.msra.mxu0 0
        %1395 = vmatpush.bf16.msra.mxu0 0
        %1396 = vmatpush.bf16.msra.mxu0 0
        %1397 = vmatpush.bf16.msra.mxu0 0
        %1398 = vmatpush.bf16.msra.mxu0 %v1374
        %1399 = vmatmul.bf16.gmra.mxu0 %v1372
        %v1400 = vpop.f32.mrf.mxu0
        %v1401 = vadd.f32 0.0, %v1400
        %v1402 = vpop.f32.mrf.mxu0
        %1403 = vdwg.mxu0
        %1404 = vmatpush.bf16.msra.mxu0 0
        %1405 = vmatpush.bf16.msra.mxu0 0
        %1406 = vmatpush.bf16.msra.mxu0 0
        %1407 = vmatpush.bf16.msra.mxu0 0
        %1408 = vmatpush.bf16.msra.mxu0 0
        %1409 = vmatpush.bf16.msra.mxu0 0
        %1410 = vmatpush.bf16.msra.mxu0 0
        %1411 = vmatpush.bf16.msra.mxu0 %v1377
        %1412 = vmatmul.bf16.gmra.mxu0 %v1372
        %v1413 = vpop.f32.mrf.mxu0
        %v1414 = vadd.f32 0.0, %v1413
        %v1415 = vpop.f32.mrf.mxu0
        %1416 = vdwg.mxu0
        %1417 = vmatpush.bf16.msra.mxu0 0
        %1418 = vmatpush.bf16.msra.mxu0 0
        %1419 = vmatpush.bf16.msra.mxu0 0
        %1420 = vmatpush.bf16.msra.mxu0 0
        %1421 = vmatpush.bf16.msra.mxu0 0
        %1422 = vmatpush.bf16.msra.mxu0 0
        %1423 = vmatpush.bf16.msra.mxu0 0
        %1424 = vmatpush.bf16.msra.mxu0 %v1380
        %1425 = vmatmul.bf16.gmra.mxu0 %v1372
        %v1426 = vpop.f32.mrf.mxu0
        %v1427 = vadd.f32 0.0, %v1426
        %v1428 = vpop.f32.mrf.mxu0
        %1429 = vdwg.mxu0
        %1430 = vmatpush.bf16.msra.mxu0 0
        %1431 = vmatpush.bf16.msra.mxu0 0
        %1432 = vmatpush.bf16.msra.mxu0 0
        %1433 = vmatpush.bf16.msra.mxu0 0
        %1434 = vmatpush.bf16.msra.mxu0 0
        %1435 = vmatpush.bf16.msra.mxu0 0
        %1436 = vmatpush.bf16.msra.mxu0 0
        %1437 = vmatpush.bf16.msra.mxu0 %v1383
        %1438 = vmatmul.bf16.gmra.mxu0 %v1372
        %v1439 = vpop.f32.mrf.mxu0
        %v1440 = vadd.f32 0.0, %v1439
        %v1441 = vpop.f32.mrf.mxu0
        %1442 = vdwg.mxu0
        %1443 = vmatpush.bf16.msra.mxu0 0
        %1444 = vmatpush.bf16.msra.mxu0 0
        %1445 = vmatpush.bf16.msra.mxu0 0
        %1446 = vmatpush.bf16.msra.mxu0 0
        %1447 = vmatpush.bf16.msra.mxu0 0
        %1448 = vmatpush.bf16.msra.mxu0 0
        %1449 = vmatpush.bf16.msra.mxu0 0
        %1450 = vmatpush.bf16.msra.mxu0 %v1386
        %1451 = vmatmul.bf16.gmra.mxu0 %v1372
        %v1452 = vpop.f32.mrf.mxu0
        %v1453 = vadd.f32 0.0, %v1452
        %v1454 = vpop.f32.mrf.mxu0
        %1455 = vdwg.mxu0
        %1456 = vmatpush.bf16.msra.mxu0 0
        %1457 = vmatpush.bf16.msra.mxu0 0
        %1458 = vmatpush.bf16.msra.mxu0 0
        %1459 = vmatpush.bf16.msra.mxu0 0
        %1460 = vmatpush.bf16.msra.mxu0 0
        %1461 = vmatpush.bf16.msra.mxu0 0
        %1462 = vmatpush.bf16.msra.mxu0 0
        %1463 = vmatpush.bf16.msra.mxu0 %v1389
        %1464 = vmatmul.bf16.gmra.mxu0 %v1372
        %v1465 = vpop.f32.mrf.mxu0
        %v1466 = vadd.f32 0.0, %v1465
        %v1467 = vpop.f32.mrf.mxu0
        %1468 = vdwg.mxu0
        %v1469 = vadd.f32 %v1323, %v1401
        %v1470 = vadd.f32 %v1324, %v1414
        %v1471 = vadd.f32 %v1325, %v1427
        %v1472 = vadd.f32 %v1326, %v1440
        %v1473 = vadd.f32 %v1327, %v1453
        %v1474 = vadd.f32 %v1328, %v1466
        %s1475 = scalar_lea.vmem %s1, 16
        %v1476 = vld [vmem:[%s1475] sm:$0x3]
        %1477 = vst [vmem:[#allocation1] ss:$4 sm:$0xff] %v293
        %s1478 = scalar_lea.vmem [#allocation1], 32
        %1479 = vst [vmem:[%s1478] ss:$4 sm:$0xff] %v294
        %v1480 = vld.sshfl [vmem:[#allocation1] sm:$0xff pattern:$0x73625140]
        %v1481 = vld.sshfl [vmem:[#allocation1 + $0x8] sm:$0xff pattern:$0x73625140]
        %v1482 = vld.sshfl [vmem:[#allocation1 + $0x10] sm:$0xff pattern:$0x73625140]
        %v1483 = vld.sshfl [vmem:[#allocation1 + $0x18] sm:$0xff pattern:$0x73625140]
        %v1484 = vld.sshfl [vmem:[#allocation1 + $0x20] sm:$0xff pattern:$0x73625140]
        %v1485 = vld.sshfl [vmem:[#allocation1 + $0x28] sm:$0xff pattern:$0x73625140]
        %v1487 = vsel %vm393, %v1476, 0
        %v1489 = vsel %vm397, %v1480, 0
        %v1491 = vsel %vm397, %v1481, 0
        %v1493 = vsel %vm397, %v1482, 0
        %v1495 = vsel %vm397, %v1483, 0
        %v1497 = vsel %vm397, %v1484, 0
        %v1499 = vsel %vm397, %v1485, 0
        %1501 = vmatpush.bf16.msra.mxu0 0
        %1502 = vmatpush.bf16.msra.mxu0 0
        %1503 = vmatpush.bf16.msra.mxu0 0
        %1504 = vmatpush.bf16.msra.mxu0 0
        %1505 = vmatpush.bf16.msra.mxu0 0
        %1506 = vmatpush.bf16.msra.mxu0 0
        %1507 = vmatpush.bf16.msra.mxu0 0
        %1508 = vmatpush.bf16.msra.mxu0 %v1489
        %1509 = vmatmul.bf16.gmra.mxu0 %v1487
        %v1510 = vpop.f32.mrf.mxu0
        %v1511 = vadd.f32 0.0, %v1510
        %v1512 = vpop.f32.mrf.mxu0
        %1513 = vdwg.mxu0
        %1514 = vmatpush.bf16.msra.mxu0 0
        %1515 = vmatpush.bf16.msra.mxu0 0
        %1516 = vmatpush.bf16.msra.mxu0 0
        %1517 = vmatpush.bf16.msra.mxu0 0
        %1518 = vmatpush.bf16.msra.mxu0 0
        %1519 = vmatpush.bf16.msra.mxu0 0
        %1520 = vmatpush.bf16.msra.mxu0 0
        %1521 = vmatpush.bf16.msra.mxu0 %v1491
        %1522 = vmatmul.bf16.gmra.mxu0 %v1487
        %v1523 = vpop.f32.mrf.mxu0
        %v1524 = vadd.f32 0.0, %v1523
        %v1525 = vpop.f32.mrf.mxu0
        %1526 = vdwg.mxu0
        %1527 = vmatpush.bf16.msra.mxu0 0
        %1528 = vmatpush.bf16.msra.mxu0 0
        %1529 = vmatpush.bf16.msra.mxu0 0
        %1530 = vmatpush.bf16.msra.mxu0 0
        %1531 = vmatpush.bf16.msra.mxu0 0
        %1532 = vmatpush.bf16.msra.mxu0 0
        %1533 = vmatpush.bf16.msra.mxu0 0
        %1534 = vmatpush.bf16.msra.mxu0 %v1493
        %1535 = vmatmul.bf16.gmra.mxu0 %v1487
        %v1536 = vpop.f32.mrf.mxu0
        %v1537 = vadd.f32 0.0, %v1536
        %v1538 = vpop.f32.mrf.mxu0
        %1539 = vdwg.mxu0
        %1540 = vmatpush.bf16.msra.mxu0 0
        %1541 = vmatpush.bf16.msra.mxu0 0
        %1542 = vmatpush.bf16.msra.mxu0 0
        %1543 = vmatpush.bf16.msra.mxu0 0
        %1544 = vmatpush.bf16.msra.mxu0 0
        %1545 = vmatpush.bf16.msra.mxu0 0
        %1546 = vmatpush.bf16.msra.mxu0 0
        %1547 = vmatpush.bf16.msra.mxu0 %v1495
        %1548 = vmatmul.bf16.gmra.mxu0 %v1487
        %v1549 = vpop.f32.mrf.mxu0
        %v1550 = vadd.f32 0.0, %v1549
        %v1551 = vpop.f32.mrf.mxu0
        %1552 = vdwg.mxu0
        %1553 = vmatpush.bf16.msra.mxu0 0
        %1554 = vmatpush.bf16.msra.mxu0 0
        %1555 = vmatpush.bf16.msra.mxu0 0
        %1556 = vmatpush.bf16.msra.mxu0 0
        %1557 = vmatpush.bf16.msra.mxu0 0
        %1558 = vmatpush.bf16.msra.mxu0 0
        %1559 = vmatpush.bf16.msra.mxu0 0
        %1560 = vmatpush.bf16.msra.mxu0 %v1497
        %1561 = vmatmul.bf16.gmra.mxu0 %v1487
        %v1562 = vpop.f32.mrf.mxu0
        %v1563 = vadd.f32 0.0, %v1562
        %v1564 = vpop.f32.mrf.mxu0
        %1565 = vdwg.mxu0
        %1566 = vmatpush.bf16.msra.mxu0 0
        %1567 = vmatpush.bf16.msra.mxu0 0
        %1568 = vmatpush.bf16.msra.mxu0 0
        %1569 = vmatpush.bf16.msra.mxu0 0
        %1570 = vmatpush.bf16.msra.mxu0 0
        %1571 = vmatpush.bf16.msra.mxu0 0
        %1572 = vmatpush.bf16.msra.mxu0 0
        %1573 = vmatpush.bf16.msra.mxu0 %v1499
        %1574 = vmatmul.bf16.gmra.mxu0 %v1487
        %v1575 = vpop.f32.mrf.mxu0
        %v1576 = vadd.f32 0.0, %v1575
        %v1577 = vpop.f32.mrf.mxu0
        %1578 = vdwg.mxu0
        %v1579 = vadd.f32 %v1469, %v1511
        %v1580 = vadd.f32 %v1470, %v1524
        %v1581 = vadd.f32 %v1471, %v1537
        %v1582 = vadd.f32 %v1472, %v1550
        %v1583 = vadd.f32 %v1473, %v1563
        %v1584 = vadd.f32 %v1474, %v1576
        %v1585 = vld [vmem:[%s2] sm:$0xf]
        %1587 = vset.pattern.permute.xlu0 0
        %1588 = vperm.xlu0 %1587, %v1585
        %v1589 = vpop.permute.xlu0 %1588
        %v1591 = vmul.f32 %v1579, %v1589
        %v1592 = vmul.f32 %v1580, %v1589
        %v1593 = vmul.f32 %v1581, %v1589
        %v1594 = vmul.f32 %v1582, %v1589
        %v1595 = vmul.f32 %v1583, %v1589
        %v1596 = vmul.f32 %v1584, %v1589
        %v1597 = vld [vmem:[%s3] sm:$0xf]
        %1599 = vset.pattern.permute.xlu0 0
        %1600 = vperm.xlu0 %1599, %v1597
        %v1601 = vpop.permute.xlu0 %1600
        %v1603 = vadd.f32 %v1591, %v1601
        %v1604 = vadd.f32 %v1592, %v1601
        %v1605 = vadd.f32 %v1593, %v1601
        %v1606 = vadd.f32 %v1594, %v1601
        %v1607 = vadd.f32 %v1595, %v1601
        %v1608 = vadd.f32 %v1596, %v1601
        %vm1609 = vcmp.gt.f32.partialorder %v1603, 0.0
        %vm1610 = vcmp.gt.f32.partialorder %v1604, 0.0
        %vm1611 = vcmp.gt.f32.partialorder %v1605, 0.0
        %vm1612 = vcmp.gt.f32.partialorder %v1606, 0.0
        %vm1613 = vcmp.gt.f32.partialorder %v1607, 0.0
        %vm1614 = vcmp.gt.f32.partialorder %v1608, 0.0
        %v1615 = vmul.f32 %v1603, 0.01
        %v1616 = vmul.f32 %v1604, 0.01
        %v1617 = vmul.f32 %v1605, 0.01
        %v1618 = vmul.f32 %v1606, 0.01
        %v1619 = vmul.f32 %v1607, 0.01
        %v1620 = vmul.f32 %v1608, 0.01
        %v1621 = vsel %vm1609, %v1603, %v1615
        %v1622 = vsel %vm1610, %v1604, %v1616
        %v1623 = vsel %vm1611, %v1605, %v1617
        %v1624 = vsel %vm1612, %v1606, %v1618
        %v1625 = vsel %vm1613, %v1607, %v1619
        %v1626 = vsel %vm1614, %v1608, %v1620
        %v1627 = vld [vmem:[%s4] sm:$0x3f]
        %v1629 = vperm.slane %v1627, 0
        %v1630 = vperm.slane %v1627, 1
        %v1631 = vperm.slane %v1627, 2
        %v1632 = vperm.slane %v1627, 3
        %v1633 = vperm.slane %v1627, 4
        %v1634 = vperm.slane %v1627, 5
        %v1641 = vmul.f32 %v1621, %v1629
        %v1642 = vmul.f32 %v1622, %v1630
        %v1643 = vmul.f32 %v1623, %v1631
        %v1644 = vmul.f32 %v1624, %v1632
        %v1645 = vmul.f32 %v1625, %v1633
        %v1646 = vmul.f32 %v1626, %v1634
        %v1647 = vld [vmem:[%s5] sm:$0xf]
        %v1648 = vld [vmem:[%s5 + $0x4] sm:$0xf]
        %s1649 = scalar_lea.vmem %s5, 8
        %v1650 = vld [vmem:[%s1649] sm:$0xf]
        %v1651 = vld [vmem:[%s1649 + $0x4] sm:$0xf]
        %1658 = vrot.lane.b32.xlu0 %v1641, 127
        %v1659 = vpop.permute.xlu0 %1658
        %1660 = vrot.lane.b32.xlu0 %v1642, 127
        %v1661 = vpop.permute.xlu0 %1660
        %1662 = vrot.lane.b32.xlu0 %v1643, 127
        %v1663 = vpop.permute.xlu0 %1662
        %1664 = vrot.lane.b32.xlu0 %v1644, 127
        %v1665 = vpop.permute.xlu0 %1664
        %1666 = vrot.lane.b32.xlu0 %v1645, 127
        %v1667 = vpop.permute.xlu0 %1666
        %1668 = vrot.lane.b32.xlu0 %v1646, 127
        %v1669 = vpop.permute.xlu0 %1668
        %vm1670 = vcmask 1039360
        %v1671 = vsel %vm1670, %v1659, %v1661
        %v1672 = vsel %vm1670, %v1661, %v1663
        %v1673 = vsel %vm1670, %v1663, %v1665
        %v1674 = vsel %vm1670, %v1665, %v1667
        %v1675 = vsel %vm1670, %v1667, %v1669
        %v1678 = vsel %vm1670, %v1669, %v1659
        %v1681 = vunpack.c.l.b16 %v1650
        %v1682 = vunpack.c.l.b16 %v1651
        %v1683 = vpack.c.b16 %v1682, %v1681
        %v1685 = vsel %vm393, %v1683, 0
        %vm1687 = vcmask 1043456
        %v1688 = vsel %vm1687, %v1671, 0
        %v1690 = vsel %vm1687, %v1672, 0
        %v1692 = vsel %vm1687, %v1673, 0
        %v1694 = vsel %vm1687, %v1674, 0
        %v1696 = vsel %vm1687, %v1675, 0
        %v1699 = vsel %vm1687, %v1678, 0
        %1701 = vmatpush.msra.mxu0 0.0
        %1702 = vmatpush.msra.mxu0 0.0
        %1703 = vmatpush.msra.mxu0 0.0
        %1704 = vmatpush.msra.mxu0 0.0
        %1705 = vmatpush.msra.mxu0 0.0
        %1706 = vmatpush.msra.mxu0 0.0
        %1707 = vmatpush.msra.mxu0 0.0
        %1708 = vmatpush.msra.mxu0 0.0
        %1709 = vmatpush.msra.mxu0 0.0
        %1710 = vmatpush.msra.mxu0 0.0
        %1711 = vmatpush.msra.mxu0 0.0
        %1712 = vmatpush.msra.mxu0 0.0
        %1713 = vmatpush.msra.mxu0 0.0
        %1714 = vmatpush.msra.mxu0 0.0
        %1715 = vmatpush.msra.mxu0 0.0
        %1716 = vmatpush.msra.mxu0 %v1688
        %1717 = vmatmul.bf16.gmra.mxu0 %v1685
        %v1718 = vpop.f32.mrf.mxu0
        %v1719 = vadd.f32 0.0, %v1718
        %v1720 = vpop.f32.mrf.mxu0
        %v1721 = vadd.f32 0.0, %v1720
        %1722 = vdwg.mxu0
        %1723 = vmatpush.msra.mxu0 0.0
        %1724 = vmatpush.msra.mxu0 0.0
        %1725 = vmatpush.msra.mxu0 0.0
        %1726 = vmatpush.msra.mxu0 0.0
        %1727 = vmatpush.msra.mxu0 0.0
        %1728 = vmatpush.msra.mxu0 0.0
        %1729 = vmatpush.msra.mxu0 0.0
        %1730 = vmatpush.msra.mxu0 0.0
        %1731 = vmatpush.msra.mxu0 0.0
        %1732 = vmatpush.msra.mxu0 0.0
        %1733 = vmatpush.msra.mxu0 0.0
        %1734 = vmatpush.msra.mxu0 0.0
        %1735 = vmatpush.msra.mxu0 0.0
        %1736 = vmatpush.msra.mxu0 0.0
        %1737 = vmatpush.msra.mxu0 0.0
        %1738 = vmatpush.msra.mxu0 %v1690
        %1739 = vmatmul.bf16.gmra.mxu0 %v1685
        %v1740 = vpop.f32.mrf.mxu0
        %v1741 = vadd.f32 0.0, %v1740
        %v1742 = vpop.f32.mrf.mxu0
        %v1743 = vadd.f32 0.0, %v1742
        %1744 = vdwg.mxu0
        %1745 = vmatpush.msra.mxu0 0.0
        %1746 = vmatpush.msra.mxu0 0.0
        %1747 = vmatpush.msra.mxu0 0.0
        %1748 = vmatpush.msra.mxu0 0.0
        %1749 = vmatpush.msra.mxu0 0.0
        %1750 = vmatpush.msra.mxu0 0.0
        %1751 = vmatpush.msra.mxu0 0.0
        %1752 = vmatpush.msra.mxu0 0.0
        %1753 = vmatpush.msra.mxu0 0.0
        %1754 = vmatpush.msra.mxu0 0.0
        %1755 = vmatpush.msra.mxu0 0.0
        %1756 = vmatpush.msra.mxu0 0.0
        %1757 = vmatpush.msra.mxu0 0.0
        %1758 = vmatpush.msra.mxu0 0.0
        %1759 = vmatpush.msra.mxu0 0.0
        %1760 = vmatpush.msra.mxu0 %v1692
        %1761 = vmatmul.bf16.gmra.mxu0 %v1685
        %v1762 = vpop.f32.mrf.mxu0
        %v1763 = vadd.f32 0.0, %v1762
        %v1764 = vpop.f32.mrf.mxu0
        %v1765 = vadd.f32 0.0, %v1764
        %1766 = vdwg.mxu0
        %1767 = vmatpush.msra.mxu0 0.0
        %1768 = vmatpush.msra.mxu0 0.0
        %1769 = vmatpush.msra.mxu0 0.0
        %1770 = vmatpush.msra.mxu0 0.0
        %1771 = vmatpush.msra.mxu0 0.0
        %1772 = vmatpush.msra.mxu0 0.0
        %1773 = vmatpush.msra.mxu0 0.0
        %1774 = vmatpush.msra.mxu0 0.0
        %1775 = vmatpush.msra.mxu0 0.0
        %1776 = vmatpush.msra.mxu0 0.0
        %1777 = vmatpush.msra.mxu0 0.0
        %1778 = vmatpush.msra.mxu0 0.0
        %1779 = vmatpush.msra.mxu0 0.0
        %1780 = vmatpush.msra.mxu0 0.0
        %1781 = vmatpush.msra.mxu0 0.0
        %1782 = vmatpush.msra.mxu0 %v1694
        %1783 = vmatmul.bf16.gmra.mxu0 %v1685
        %v1784 = vpop.f32.mrf.mxu0
        %v1785 = vadd.f32 0.0, %v1784
        %v1786 = vpop.f32.mrf.mxu0
        %v1787 = vadd.f32 0.0, %v1786
        %1788 = vdwg.mxu0
        %1789 = vmatpush.msra.mxu0 0.0
        %1790 = vmatpush.msra.mxu0 0.0
        %1791 = vmatpush.msra.mxu0 0.0
        %1792 = vmatpush.msra.mxu0 0.0
        %1793 = vmatpush.msra.mxu0 0.0
        %1794 = vmatpush.msra.mxu0 0.0
        %1795 = vmatpush.msra.mxu0 0.0
        %1796 = vmatpush.msra.mxu0 0.0
        %1797 = vmatpush.msra.mxu0 0.0
        %1798 = vmatpush.msra.mxu0 0.0
        %1799 = vmatpush.msra.mxu0 0.0
        %1800 = vmatpush.msra.mxu0 0.0
        %1801 = vmatpush.msra.mxu0 0.0
        %1802 = vmatpush.msra.mxu0 0.0
        %1803 = vmatpush.msra.mxu0 0.0
        %1804 = vmatpush.msra.mxu0 %v1696
        %1805 = vmatmul.bf16.gmra.mxu0 %v1685
        %v1806 = vpop.f32.mrf.mxu0
        %v1807 = vadd.f32 0.0, %v1806
        %v1808 = vpop.f32.mrf.mxu0
        %v1809 = vadd.f32 0.0, %v1808
        %1810 = vdwg.mxu0
        %1811 = vmatpush.msra.mxu0 0.0
        %1812 = vmatpush.msra.mxu0 0.0
        %1813 = vmatpush.msra.mxu0 0.0
        %1814 = vmatpush.msra.mxu0 0.0
        %1815 = vmatpush.msra.mxu0 0.0
        %1816 = vmatpush.msra.mxu0 0.0
        %1817 = vmatpush.msra.mxu0 0.0
        %1818 = vmatpush.msra.mxu0 0.0
        %1819 = vmatpush.msra.mxu0 0.0
        %1820 = vmatpush.msra.mxu0 0.0
        %1821 = vmatpush.msra.mxu0 0.0
        %1822 = vmatpush.msra.mxu0 0.0
        %1823 = vmatpush.msra.mxu0 0.0
        %1824 = vmatpush.msra.mxu0 0.0
        %1825 = vmatpush.msra.mxu0 0.0
        %1826 = vmatpush.msra.mxu0 %v1699
        %1827 = vmatmul.bf16.gmra.mxu0 %v1685
        %v1828 = vpop.f32.mrf.mxu0
        %v1829 = vadd.f32 0.0, %v1828
        %v1830 = vpop.f32.mrf.mxu0
        %v1831 = vadd.f32 0.0, %v1830
        %1832 = vdwg.mxu0
        %v1835 = vunpack.c.l.b16 %v1647
        %v1836 = vunpack.c.l.b16 %v1648
        %v1837 = vpack.c.b16 %v1836, %v1835
        %v1839 = vsel %vm393, %v1837, 0
        %v1841 = vsel %vm1687, %v1641, 0
        %v1843 = vsel %vm1687, %v1642, 0
        %v1845 = vsel %vm1687, %v1643, 0
        %v1847 = vsel %vm1687, %v1644, 0
        %v1849 = vsel %vm1687, %v1645, 0
        %v1851 = vsel %vm1687, %v1646, 0
        %1853 = vmatpush.msra.mxu0 0.0
        %1854 = vmatpush.msra.mxu0 0.0
        %1855 = vmatpush.msra.mxu0 0.0
        %1856 = vmatpush.msra.mxu0 0.0
        %1857 = vmatpush.msra.mxu0 0.0
        %1858 = vmatpush.msra.mxu0 0.0
        %1859 = vmatpush.msra.mxu0 0.0
        %1860 = vmatpush.msra.mxu0 0.0
        %1861 = vmatpush.msra.mxu0 0.0
        %1862 = vmatpush.msra.mxu0 0.0
        %1863 = vmatpush.msra.mxu0 0.0
        %1864 = vmatpush.msra.mxu0 0.0
        %1865 = vmatpush.msra.mxu0 0.0
        %1866 = vmatpush.msra.mxu0 0.0
        %1867 = vmatpush.msra.mxu0 0.0
        %1868 = vmatpush.msra.mxu0 %v1841
        %1869 = vmatmul.bf16.gmra.mxu0 %v1839
        %v1870 = vpop.f32.mrf.mxu0
        %v1871 = vadd.f32 %v1719, %v1870
        %v1872 = vpop.f32.mrf.mxu0
        %v1873 = vadd.f32 %v1721, %v1872
        %1874 = vdwg.mxu0
        %1875 = vmatpush.msra.mxu0 0.0
        %1876 = vmatpush.msra.mxu0 0.0
        %1877 = vmatpush.msra.mxu0 0.0
        %1878 = vmatpush.msra.mxu0 0.0
        %1879 = vmatpush.msra.mxu0 0.0
        %1880 = vmatpush.msra.mxu0 0.0
        %1881 = vmatpush.msra.mxu0 0.0
        %1882 = vmatpush.msra.mxu0 0.0
        %1883 = vmatpush.msra.mxu0 0.0
        %1884 = vmatpush.msra.mxu0 0.0
        %1885 = vmatpush.msra.mxu0 0.0
        %1886 = vmatpush.msra.mxu0 0.0
        %1887 = vmatpush.msra.mxu0 0.0
        %1888 = vmatpush.msra.mxu0 0.0
        %1889 = vmatpush.msra.mxu0 0.0
        %1890 = vmatpush.msra.mxu0 %v1843
        %1891 = vmatmul.bf16.gmra.mxu0 %v1839
        %v1892 = vpop.f32.mrf.mxu0
        %v1893 = vadd.f32 %v1741, %v1892
        %v1894 = vpop.f32.mrf.mxu0
        %v1895 = vadd.f32 %v1743, %v1894
        %1896 = vdwg.mxu0
        %1897 = vmatpush.msra.mxu0 0.0
        %1898 = vmatpush.msra.mxu0 0.0
        %1899 = vmatpush.msra.mxu0 0.0
        %1900 = vmatpush.msra.mxu0 0.0
        %1901 = vmatpush.msra.mxu0 0.0
        %1902 = vmatpush.msra.mxu0 0.0
        %1903 = vmatpush.msra.mxu0 0.0
        %1904 = vmatpush.msra.mxu0 0.0
        %1905 = vmatpush.msra.mxu0 0.0
        %1906 = vmatpush.msra.mxu0 0.0
        %1907 = vmatpush.msra.mxu0 0.0
        %1908 = vmatpush.msra.mxu0 0.0
        %1909 = vmatpush.msra.mxu0 0.0
        %1910 = vmatpush.msra.mxu0 0.0
        %1911 = vmatpush.msra.mxu0 0.0
        %1912 = vmatpush.msra.mxu0 %v1845
        %1913 = vmatmul.bf16.gmra.mxu0 %v1839
        %v1914 = vpop.f32.mrf.mxu0
        %v1915 = vadd.f32 %v1763, %v1914
        %v1916 = vpop.f32.mrf.mxu0
        %v1917 = vadd.f32 %v1765, %v1916
        %1918 = vdwg.mxu0
        %1919 = vmatpush.msra.mxu0 0.0
        %1920 = vmatpush.msra.mxu0 0.0
        %1921 = vmatpush.msra.mxu0 0.0
        %1922 = vmatpush.msra.mxu0 0.0
        %1923 = vmatpush.msra.mxu0 0.0
        %1924 = vmatpush.msra.mxu0 0.0
        %1925 = vmatpush.msra.mxu0 0.0
        %1926 = vmatpush.msra.mxu0 0.0
        %1927 = vmatpush.msra.mxu0 0.0
        %1928 = vmatpush.msra.mxu0 0.0
        %1929 = vmatpush.msra.mxu0 0.0
        %1930 = vmatpush.msra.mxu0 0.0
        %1931 = vmatpush.msra.mxu0 0.0
        %1932 = vmatpush.msra.mxu0 0.0
        %1933 = vmatpush.msra.mxu0 0.0
        %1934 = vmatpush.msra.mxu0 %v1847
        %1935 = vmatmul.bf16.gmra.mxu0 %v1839
        %v1936 = vpop.f32.mrf.mxu0
        %v1937 = vadd.f32 %v1785, %v1936
        %v1938 = vpop.f32.mrf.mxu0
        %v1939 = vadd.f32 %v1787, %v1938
        %1940 = vdwg.mxu0
        %1941 = vmatpush.msra.mxu0 0.0
        %1942 = vmatpush.msra.mxu0 0.0
        %1943 = vmatpush.msra.mxu0 0.0
        %1944 = vmatpush.msra.mxu0 0.0
        %1945 = vmatpush.msra.mxu0 0.0
        %1946 = vmatpush.msra.mxu0 0.0
        %1947 = vmatpush.msra.mxu0 0.0
        %1948 = vmatpush.msra.mxu0 0.0
        %1949 = vmatpush.msra.mxu0 0.0
        %1950 = vmatpush.msra.mxu0 0.0
        %1951 = vmatpush.msra.mxu0 0.0
        %1952 = vmatpush.msra.mxu0 0.0
        %1953 = vmatpush.msra.mxu0 0.0
        %1954 = vmatpush.msra.mxu0 0.0
        %1955 = vmatpush.msra.mxu0 0.0
        %1956 = vmatpush.msra.mxu0 %v1849
        %1957 = vmatmul.bf16.gmra.mxu0 %v1839
        %v1958 = vpop.f32.mrf.mxu0
        %v1959 = vadd.f32 %v1807, %v1958
        %v1960 = vpop.f32.mrf.mxu0
        %v1961 = vadd.f32 %v1809, %v1960
        %1962 = vdwg.mxu0
        %1963 = vmatpush.msra.mxu0 0.0
        %1964 = vmatpush.msra.mxu0 0.0
        %1965 = vmatpush.msra.mxu0 0.0
        %1966 = vmatpush.msra.mxu0 0.0
        %1967 = vmatpush.msra.mxu0 0.0
        %1968 = vmatpush.msra.mxu0 0.0
        %1969 = vmatpush.msra.mxu0 0.0
        %1970 = vmatpush.msra.mxu0 0.0
        %1971 = vmatpush.msra.mxu0 0.0
        %1972 = vmatpush.msra.mxu0 0.0
        %1973 = vmatpush.msra.mxu0 0.0
        %1974 = vmatpush.msra.mxu0 0.0
        %1975 = vmatpush.msra.mxu0 0.0
        %1976 = vmatpush.msra.mxu0 0.0
        %1977 = vmatpush.msra.mxu0 0.0
        %1978 = vmatpush.msra.mxu0 %v1851
        %1979 = vmatmul.bf16.gmra.mxu0 %v1839
        %v1980 = vpop.f32.mrf.mxu0
        %v1981 = vadd.f32 %v1829, %v1980
        %v1982 = vpop.f32.mrf.mxu0
        %v1983 = vadd.f32 %v1831, %v1982
        %1984 = vdwg.mxu0
        %s1985 = scalar_lea.vmem %s5, 16
        %v1986 = vld [vmem:[%s1985] sm:$0xf]
        %v1987 = vld [vmem:[%s1985 + $0x4] sm:$0xf]
        %1988 = vrot.lane.b32.xlu0 %v1641, 126
        %v1989 = vpop.permute.xlu0 %1988
        %1990 = vrot.lane.b32.xlu0 %v1642, 126
        %v1991 = vpop.permute.xlu0 %1990
        %1992 = vrot.lane.b32.xlu0 %v1643, 126
        %v1993 = vpop.permute.xlu0 %1992
        %1994 = vrot.lane.b32.xlu0 %v1644, 126
        %v1995 = vpop.permute.xlu0 %1994
        %1996 = vrot.lane.b32.xlu0 %v1645, 126
        %v1997 = vpop.permute.xlu0 %1996
        %1998 = vrot.lane.b32.xlu0 %v1646, 126
        %v1999 = vpop.permute.xlu0 %1998
        %vm2000 = vcmask 1031168
        %v2001 = vsel %vm2000, %v1989, %v1991
        %v2002 = vsel %vm2000, %v1991, %v1993
        %v2003 = vsel %vm2000, %v1993, %v1995
        %v2004 = vsel %vm2000, %v1995, %v1997
        %v2005 = vsel %vm2000, %v1997, %v1999
        %v2008 = vsel %vm2000, %v1999, %v1989
        %v2011 = vunpack.c.l.b16 %v1986
        %v2012 = vunpack.c.l.b16 %v1987
        %v2013 = vpack.c.b16 %v2012, %v2011
        %v2015 = vsel %vm393, %v2013, 0
        %v2017 = vsel %vm1687, %v2001, 0
        %v2019 = vsel %vm1687, %v2002, 0
        %v2021 = vsel %vm1687, %v2003, 0
        %v2023 = vsel %vm1687, %v2004, 0
        %v2025 = vsel %vm1687, %v2005, 0
        %v2028 = vsel %vm1687, %v2008, 0
        %2030 = vmatpush.msra.mxu0 0.0
        %2031 = vmatpush.msra.mxu0 0.0
        %2032 = vmatpush.msra.mxu0 0.0
        %2033 = vmatpush.msra.mxu0 0.0
        %2034 = vmatpush.msra.mxu0 0.0
        %2035 = vmatpush.msra.mxu0 0.0
        %2036 = vmatpush.msra.mxu0 0.0
        %2037 = vmatpush.msra.mxu0 0.0
        %2038 = vmatpush.msra.mxu0 0.0
        %2039 = vmatpush.msra.mxu0 0.0
        %2040 = vmatpush.msra.mxu0 0.0
        %2041 = vmatpush.msra.mxu0 0.0
        %2042 = vmatpush.msra.mxu0 0.0
        %2043 = vmatpush.msra.mxu0 0.0
        %2044 = vmatpush.msra.mxu0 0.0
        %2045 = vmatpush.msra.mxu0 %v2017
        %2046 = vmatmul.bf16.gmra.mxu0 %v2015
        %v2047 = vpop.f32.mrf.mxu0
        %v2048 = vadd.f32 0.0, %v2047
        %v2049 = vpop.f32.mrf.mxu0
        %v2050 = vadd.f32 0.0, %v2049
        %2051 = vdwg.mxu0
        %2052 = vmatpush.msra.mxu0 0.0
        %2053 = vmatpush.msra.mxu0 0.0
        %2054 = vmatpush.msra.mxu0 0.0
        %2055 = vmatpush.msra.mxu0 0.0
        %2056 = vmatpush.msra.mxu0 0.0
        %2057 = vmatpush.msra.mxu0 0.0
        %2058 = vmatpush.msra.mxu0 0.0
        %2059 = vmatpush.msra.mxu0 0.0
        %2060 = vmatpush.msra.mxu0 0.0
        %2061 = vmatpush.msra.mxu0 0.0
        %2062 = vmatpush.msra.mxu0 0.0
        %2063 = vmatpush.msra.mxu0 0.0
        %2064 = vmatpush.msra.mxu0 0.0
        %2065 = vmatpush.msra.mxu0 0.0
        %2066 = vmatpush.msra.mxu0 0.0
        %2067 = vmatpush.msra.mxu0 %v2019
        %2068 = vmatmul.bf16.gmra.mxu0 %v2015
        %v2069 = vpop.f32.mrf.mxu0
        %v2070 = vadd.f32 0.0, %v2069
        %v2071 = vpop.f32.mrf.mxu0
        %v2072 = vadd.f32 0.0, %v2071
        %2073 = vdwg.mxu0
        %2074 = vmatpush.msra.mxu0 0.0
        %2075 = vmatpush.msra.mxu0 0.0
        %2076 = vmatpush.msra.mxu0 0.0
        %2077 = vmatpush.msra.mxu0 0.0
        %2078 = vmatpush.msra.mxu0 0.0
        %2079 = vmatpush.msra.mxu0 0.0
        %2080 = vmatpush.msra.mxu0 0.0
        %2081 = vmatpush.msra.mxu0 0.0
        %2082 = vmatpush.msra.mxu0 0.0
        %2083 = vmatpush.msra.mxu0 0.0
        %2084 = vmatpush.msra.mxu0 0.0
        %2085 = vmatpush.msra.mxu0 0.0
        %2086 = vmatpush.msra.mxu0 0.0
        %2087 = vmatpush.msra.mxu0 0.0
        %2088 = vmatpush.msra.mxu0 0.0
        %2089 = vmatpush.msra.mxu0 %v2021
        %2090 = vmatmul.bf16.gmra.mxu0 %v2015
        %v2091 = vpop.f32.mrf.mxu0
        %v2092 = vadd.f32 0.0, %v2091
        %v2093 = vpop.f32.mrf.mxu0
        %v2094 = vadd.f32 0.0, %v2093
        %2095 = vdwg.mxu0
        %2096 = vmatpush.msra.mxu0 0.0
        %2097 = vmatpush.msra.mxu0 0.0
        %2098 = vmatpush.msra.mxu0 0.0
        %2099 = vmatpush.msra.mxu0 0.0
        %2100 = vmatpush.msra.mxu0 0.0
        %2101 = vmatpush.msra.mxu0 0.0
        %2102 = vmatpush.msra.mxu0 0.0
        %2103 = vmatpush.msra.mxu0 0.0
        %2104 = vmatpush.msra.mxu0 0.0
        %2105 = vmatpush.msra.mxu0 0.0
        %2106 = vmatpush.msra.mxu0 0.0
        %2107 = vmatpush.msra.mxu0 0.0
        %2108 = vmatpush.msra.mxu0 0.0
        %2109 = vmatpush.msra.mxu0 0.0
        %2110 = vmatpush.msra.mxu0 0.0
        %2111 = vmatpush.msra.mxu0 %v2023
        %2112 = vmatmul.bf16.gmra.mxu0 %v2015
        %v2113 = vpop.f32.mrf.mxu0
        %v2114 = vadd.f32 0.0, %v2113
        %v2115 = vpop.f32.mrf.mxu0
        %v2116 = vadd.f32 0.0, %v2115
        %2117 = vdwg.mxu0
        %2118 = vmatpush.msra.mxu0 0.0
        %2119 = vmatpush.msra.mxu0 0.0
        %2120 = vmatpush.msra.mxu0 0.0
        %2121 = vmatpush.msra.mxu0 0.0
        %2122 = vmatpush.msra.mxu0 0.0
        %2123 = vmatpush.msra.mxu0 0.0
        %2124 = vmatpush.msra.mxu0 0.0
        %2125 = vmatpush.msra.mxu0 0.0
        %2126 = vmatpush.msra.mxu0 0.0
        %2127 = vmatpush.msra.mxu0 0.0
        %2128 = vmatpush.msra.mxu0 0.0
        %2129 = vmatpush.msra.mxu0 0.0
        %2130 = vmatpush.msra.mxu0 0.0
        %2131 = vmatpush.msra.mxu0 0.0
        %2132 = vmatpush.msra.mxu0 0.0
        %2133 = vmatpush.msra.mxu0 %v2025
        %2134 = vmatmul.bf16.gmra.mxu0 %v2015
        %v2135 = vpop.f32.mrf.mxu0
        %v2136 = vadd.f32 0.0, %v2135
        %v2137 = vpop.f32.mrf.mxu0
        %v2138 = vadd.f32 0.0, %v2137
        %2139 = vdwg.mxu0
        %2140 = vmatpush.msra.mxu0 0.0
        %2141 = vmatpush.msra.mxu0 0.0
        %2142 = vmatpush.msra.mxu0 0.0
        %2143 = vmatpush.msra.mxu0 0.0
        %2144 = vmatpush.msra.mxu0 0.0
        %2145 = vmatpush.msra.mxu0 0.0
        %2146 = vmatpush.msra.mxu0 0.0
        %2147 = vmatpush.msra.mxu0 0.0
        %2148 = vmatpush.msra.mxu0 0.0
        %2149 = vmatpush.msra.mxu0 0.0
        %2150 = vmatpush.msra.mxu0 0.0
        %2151 = vmatpush.msra.mxu0 0.0
        %2152 = vmatpush.msra.mxu0 0.0
        %2153 = vmatpush.msra.mxu0 0.0
        %2154 = vmatpush.msra.mxu0 0.0
        %2155 = vmatpush.msra.mxu0 %v2028
        %2156 = vmatmul.bf16.gmra.mxu0 %v2015
        %v2157 = vpop.f32.mrf.mxu0
        %v2158 = vadd.f32 0.0, %v2157
        %v2159 = vpop.f32.mrf.mxu0
        %v2160 = vadd.f32 0.0, %v2159
        %2161 = vdwg.mxu0
        %v2162 = vadd.f32 %v1871, %v2048
        %v2163 = vadd.f32 %v1893, %v2070
        %v2164 = vadd.f32 %v1915, %v2092
        %v2165 = vadd.f32 %v1937, %v2114
        %v2166 = vadd.f32 %v1959, %v2136
        %v2167 = vadd.f32 %v1981, %v2158
        %v2168 = vadd.f32 %v1873, %v2050
        %v2169 = vadd.f32 %v1895, %v2072
        %v2170 = vadd.f32 %v1917, %v2094
        %v2171 = vadd.f32 %v1939, %v2116
        %v2172 = vadd.f32 %v1961, %v2138
        %v2173 = vadd.f32 %v1983, %v2160
        %s2174 = scalar_lea.vmem %s5, 24
        %v2175 = vld [vmem:[%s2174] sm:$0xf]
        %v2176 = vld [vmem:[%s2174 + $0x4] sm:$0xf]
        %2177 = vrot.lane.b32.xlu0 %v1641, 102
        %v2178 = vpop.permute.xlu0 %2177
        %2179 = vrot.lane.b32.xlu0 %v1642, 102
        %v2180 = vpop.permute.xlu0 %2179
        %2181 = vrot.lane.b32.xlu0 %v1643, 102
        %v2182 = vpop.permute.xlu0 %2181
        %2183 = vrot.lane.b32.xlu0 %v1644, 102
        %v2184 = vpop.permute.xlu0 %2183
        %2185 = vrot.lane.b32.xlu0 %v1645, 102
        %v2186 = vpop.permute.xlu0 %2185
        %2187 = vrot.lane.b32.xlu0 %v1646, 102
        %v2188 = vpop.permute.xlu0 %2187
        %vm2189 = vcmask 834560
        %v2190 = vsel %vm2189, %v2178, %v2180
        %v2191 = vsel %vm2189, %v2180, %v2182
        %v2192 = vsel %vm2189, %v2182, %v2184
        %v2193 = vsel %vm2189, %v2184, %v2186
        %v2194 = vsel %vm2189, %v2186, %v2188
        %v2197 = vsel %vm2189, %v2188, %v2178
        %v2200 = vunpack.c.l.b16 %v2175
        %v2201 = vunpack.c.l.b16 %v2176
        %v2202 = vpack.c.b16 %v2201, %v2200
        %v2204 = vsel %vm393, %v2202, 0
        %v2206 = vsel %vm1687, %v2190, 0
        %v2208 = vsel %vm1687, %v2191, 0
        %v2210 = vsel %vm1687, %v2192, 0
        %v2212 = vsel %vm1687, %v2193, 0
        %v2214 = vsel %vm1687, %v2194, 0
        %v2217 = vsel %vm1687, %v2197, 0
        %2219 = vmatpush.msra.mxu0 0.0
        %2220 = vmatpush.msra.mxu0 0.0
        %2221 = vmatpush.msra.mxu0 0.0
        %2222 = vmatpush.msra.mxu0 0.0
        %2223 = vmatpush.msra.mxu0 0.0
        %2224 = vmatpush.msra.mxu0 0.0
        %2225 = vmatpush.msra.mxu0 0.0
        %2226 = vmatpush.msra.mxu0 0.0
        %2227 = vmatpush.msra.mxu0 0.0
        %2228 = vmatpush.msra.mxu0 0.0
        %2229 = vmatpush.msra.mxu0 0.0
        %2230 = vmatpush.msra.mxu0 0.0
        %2231 = vmatpush.msra.mxu0 0.0
        %2232 = vmatpush.msra.mxu0 0.0
        %2233 = vmatpush.msra.mxu0 0.0
        %2234 = vmatpush.msra.mxu0 %v2206
        %2235 = vmatmul.bf16.gmra.mxu0 %v2204
        %v2236 = vpop.f32.mrf.mxu0
        %v2237 = vadd.f32 0.0, %v2236
        %v2238 = vpop.f32.mrf.mxu0
        %v2239 = vadd.f32 0.0, %v2238
        %2240 = vdwg.mxu0
        %2241 = vmatpush.msra.mxu0 0.0
        %2242 = vmatpush.msra.mxu0 0.0
        %2243 = vmatpush.msra.mxu0 0.0
        %2244 = vmatpush.msra.mxu0 0.0
        %2245 = vmatpush.msra.mxu0 0.0
        %2246 = vmatpush.msra.mxu0 0.0
        %2247 = vmatpush.msra.mxu0 0.0
        %2248 = vmatpush.msra.mxu0 0.0
        %2249 = vmatpush.msra.mxu0 0.0
        %2250 = vmatpush.msra.mxu0 0.0
        %2251 = vmatpush.msra.mxu0 0.0
        %2252 = vmatpush.msra.mxu0 0.0
        %2253 = vmatpush.msra.mxu0 0.0
        %2254 = vmatpush.msra.mxu0 0.0
        %2255 = vmatpush.msra.mxu0 0.0
        %2256 = vmatpush.msra.mxu0 %v2208
        %2257 = vmatmul.bf16.gmra.mxu0 %v2204
        %v2258 = vpop.f32.mrf.mxu0
        %v2259 = vadd.f32 0.0, %v2258
        %v2260 = vpop.f32.mrf.mxu0
        %v2261 = vadd.f32 0.0, %v2260
        %2262 = vdwg.mxu0
        %2263 = vmatpush.msra.mxu0 0.0
        %2264 = vmatpush.msra.mxu0 0.0
        %2265 = vmatpush.msra.mxu0 0.0
        %2266 = vmatpush.msra.mxu0 0.0
        %2267 = vmatpush.msra.mxu0 0.0
        %2268 = vmatpush.msra.mxu0 0.0
        %2269 = vmatpush.msra.mxu0 0.0
        %2270 = vmatpush.msra.mxu0 0.0
        %2271 = vmatpush.msra.mxu0 0.0
        %2272 = vmatpush.msra.mxu0 0.0
        %2273 = vmatpush.msra.mxu0 0.0
        %2274 = vmatpush.msra.mxu0 0.0
        %2275 = vmatpush.msra.mxu0 0.0
        %2276 = vmatpush.msra.mxu0 0.0
        %2277 = vmatpush.msra.mxu0 0.0
        %2278 = vmatpush.msra.mxu0 %v2210
        %2279 = vmatmul.bf16.gmra.mxu0 %v2204
        %v2280 = vpop.f32.mrf.mxu0
        %v2281 = vadd.f32 0.0, %v2280
        %v2282 = vpop.f32.mrf.mxu0
        %v2283 = vadd.f32 0.0, %v2282
        %2284 = vdwg.mxu0
        %2285 = vmatpush.msra.mxu0 0.0
        %2286 = vmatpush.msra.mxu0 0.0
        %2287 = vmatpush.msra.mxu0 0.0
        %2288 = vmatpush.msra.mxu0 0.0
        %2289 = vmatpush.msra.mxu0 0.0
        %2290 = vmatpush.msra.mxu0 0.0
        %2291 = vmatpush.msra.mxu0 0.0
        %2292 = vmatpush.msra.mxu0 0.0
        %2293 = vmatpush.msra.mxu0 0.0
        %2294 = vmatpush.msra.mxu0 0.0
        %2295 = vmatpush.msra.mxu0 0.0
        %2296 = vmatpush.msra.mxu0 0.0
        %2297 = vmatpush.msra.mxu0 0.0
        %2298 = vmatpush.msra.mxu0 0.0
        %2299 = vmatpush.msra.mxu0 0.0
        %2300 = vmatpush.msra.mxu0 %v2212
        %2301 = vmatmul.bf16.gmra.mxu0 %v2204
        %v2302 = vpop.f32.mrf.mxu0
        %v2303 = vadd.f32 0.0, %v2302
        %v2304 = vpop.f32.mrf.mxu0
        %v2305 = vadd.f32 0.0, %v2304
        %2306 = vdwg.mxu0
        %2307 = vmatpush.msra.mxu0 0.0
        %2308 = vmatpush.msra.mxu0 0.0
        %2309 = vmatpush.msra.mxu0 0.0
        %2310 = vmatpush.msra.mxu0 0.0
        %2311 = vmatpush.msra.mxu0 0.0
        %2312 = vmatpush.msra.mxu0 0.0
        %2313 = vmatpush.msra.mxu0 0.0
        %2314 = vmatpush.msra.mxu0 0.0
        %2315 = vmatpush.msra.mxu0 0.0
        %2316 = vmatpush.msra.mxu0 0.0
        %2317 = vmatpush.msra.mxu0 0.0
        %2318 = vmatpush.msra.mxu0 0.0
        %2319 = vmatpush.msra.mxu0 0.0
        %2320 = vmatpush.msra.mxu0 0.0
        %2321 = vmatpush.msra.mxu0 0.0
        %2322 = vmatpush.msra.mxu0 %v2214
        %2323 = vmatmul.bf16.gmra.mxu0 %v2204
        %v2324 = vpop.f32.mrf.mxu0
        %v2325 = vadd.f32 0.0, %v2324
        %v2326 = vpop.f32.mrf.mxu0
        %v2327 = vadd.f32 0.0, %v2326
        %2328 = vdwg.mxu0
        %2329 = vmatpush.msra.mxu0 0.0
        %2330 = vmatpush.msra.mxu0 0.0
        %2331 = vmatpush.msra.mxu0 0.0
        %2332 = vmatpush.msra.mxu0 0.0
        %2333 = vmatpush.msra.mxu0 0.0
        %2334 = vmatpush.msra.mxu0 0.0
        %2335 = vmatpush.msra.mxu0 0.0
        %2336 = vmatpush.msra.mxu0 0.0
        %2337 = vmatpush.msra.mxu0 0.0
        %2338 = vmatpush.msra.mxu0 0.0
        %2339 = vmatpush.msra.mxu0 0.0
        %2340 = vmatpush.msra.mxu0 0.0
        %2341 = vmatpush.msra.mxu0 0.0
        %2342 = vmatpush.msra.mxu0 0.0
        %2343 = vmatpush.msra.mxu0 0.0
        %2344 = vmatpush.msra.mxu0 %v2217
        %2345 = vmatmul.bf16.gmra.mxu0 %v2204
        %v2346 = vpop.f32.mrf.mxu0
        %v2347 = vadd.f32 0.0, %v2346
        %v2348 = vpop.f32.mrf.mxu0
        %v2349 = vadd.f32 0.0, %v2348
        %2350 = vdwg.mxu0
        %v2351 = vadd.f32 %v2162, %v2237
        %v2352 = vadd.f32 %v2163, %v2259
        %v2353 = vadd.f32 %v2164, %v2281
        %v2354 = vadd.f32 %v2165, %v2303
        %v2355 = vadd.f32 %v2166, %v2325
        %v2356 = vadd.f32 %v2167, %v2347
        %v2357 = vadd.f32 %v2168, %v2239
        %v2358 = vadd.f32 %v2169, %v2261
        %v2359 = vadd.f32 %v2170, %v2283
        %v2360 = vadd.f32 %v2171, %v2305
        %v2361 = vadd.f32 %v2172, %v2327
        %v2362 = vadd.f32 %v2173, %v2349
        %s2363 = scalar_lea.vmem %s5, 32
        %v2364 = vld [vmem:[%s2363] sm:$0xf]
        %v2365 = vld [vmem:[%s2363 + $0x4] sm:$0xf]
        %2366 = vrot.lane.b32.xlu0 %v1641, 101
        %v2367 = vpop.permute.xlu0 %2366
        %2368 = vrot.lane.b32.xlu0 %v1642, 101
        %v2369 = vpop.permute.xlu0 %2368
        %2370 = vrot.lane.b32.xlu0 %v1643, 101
        %v2371 = vpop.permute.xlu0 %2370
        %2372 = vrot.lane.b32.xlu0 %v1644, 101
        %v2373 = vpop.permute.xlu0 %2372
        %2374 = vrot.lane.b32.xlu0 %v1645, 101
        %v2375 = vpop.permute.xlu0 %2374
        %2376 = vrot.lane.b32.xlu0 %v1646, 101
        %v2377 = vpop.permute.xlu0 %2376
        %vm2378 = vcmask 826368
        %v2379 = vsel %vm2378, %v2367, %v2369
        %v2380 = vsel %vm2378, %v2369, %v2371
        %v2381 = vsel %vm2378, %v2371, %v2373
        %v2382 = vsel %vm2378, %v2373, %v2375
        %v2383 = vsel %vm2378, %v2375, %v2377
        %v2386 = vsel %vm2378, %v2377, %v2367
        %v2389 = vunpack.c.l.b16 %v2364
        %v2390 = vunpack.c.l.b16 %v2365
        %v2391 = vpack.c.b16 %v2390, %v2389
        %v2393 = vsel %vm393, %v2391, 0
        %v2395 = vsel %vm1687, %v2379, 0
        %v2397 = vsel %vm1687, %v2380, 0
        %v2399 = vsel %vm1687, %v2381, 0
        %v2401 = vsel %vm1687, %v2382, 0
        %v2403 = vsel %vm1687, %v2383, 0
        %v2406 = vsel %vm1687, %v2386, 0
        %2408 = vmatpush.msra.mxu0 0.0
        %2409 = vmatpush.msra.mxu0 0.0
        %2410 = vmatpush.msra.mxu0 0.0
        %2411 = vmatpush.msra.mxu0 0.0
        %2412 = vmatpush.msra.mxu0 0.0
        %2413 = vmatpush.msra.mxu0 0.0
        %2414 = vmatpush.msra.mxu0 0.0
        %2415 = vmatpush.msra.mxu0 0.0
        %2416 = vmatpush.msra.mxu0 0.0
        %2417 = vmatpush.msra.mxu0 0.0
        %2418 = vmatpush.msra.mxu0 0.0
        %2419 = vmatpush.msra.mxu0 0.0
        %2420 = vmatpush.msra.mxu0 0.0
        %2421 = vmatpush.msra.mxu0 0.0
        %2422 = vmatpush.msra.mxu0 0.0
        %2423 = vmatpush.msra.mxu0 %v2395
        %2424 = vmatmul.bf16.gmra.mxu0 %v2393
        %v2425 = vpop.f32.mrf.mxu0
        %v2426 = vadd.f32 0.0, %v2425
        %v2427 = vpop.f32.mrf.mxu0
        %v2428 = vadd.f32 0.0, %v2427
        %2429 = vdwg.mxu0
        %2430 = vmatpush.msra.mxu0 0.0
        %2431 = vmatpush.msra.mxu0 0.0
        %2432 = vmatpush.msra.mxu0 0.0
        %2433 = vmatpush.msra.mxu0 0.0
        %2434 = vmatpush.msra.mxu0 0.0
        %2435 = vmatpush.msra.mxu0 0.0
        %2436 = vmatpush.msra.mxu0 0.0
        %2437 = vmatpush.msra.mxu0 0.0
        %2438 = vmatpush.msra.mxu0 0.0
        %2439 = vmatpush.msra.mxu0 0.0
        %2440 = vmatpush.msra.mxu0 0.0
        %2441 = vmatpush.msra.mxu0 0.0
        %2442 = vmatpush.msra.mxu0 0.0
        %2443 = vmatpush.msra.mxu0 0.0
        %2444 = vmatpush.msra.mxu0 0.0
        %2445 = vmatpush.msra.mxu0 %v2397
        %2446 = vmatmul.bf16.gmra.mxu0 %v2393
        %v2447 = vpop.f32.mrf.mxu0
        %v2448 = vadd.f32 0.0, %v2447
        %v2449 = vpop.f32.mrf.mxu0
        %v2450 = vadd.f32 0.0, %v2449
        %2451 = vdwg.mxu0
        %2452 = vmatpush.msra.mxu0 0.0
        %2453 = vmatpush.msra.mxu0 0.0
        %2454 = vmatpush.msra.mxu0 0.0
        %2455 = vmatpush.msra.mxu0 0.0
        %2456 = vmatpush.msra.mxu0 0.0
        %2457 = vmatpush.msra.mxu0 0.0
        %2458 = vmatpush.msra.mxu0 0.0
        %2459 = vmatpush.msra.mxu0 0.0
        %2460 = vmatpush.msra.mxu0 0.0
        %2461 = vmatpush.msra.mxu0 0.0
        %2462 = vmatpush.msra.mxu0 0.0
        %2463 = vmatpush.msra.mxu0 0.0
        %2464 = vmatpush.msra.mxu0 0.0
        %2465 = vmatpush.msra.mxu0 0.0
        %2466 = vmatpush.msra.mxu0 0.0
        %2467 = vmatpush.msra.mxu0 %v2399
        %2468 = vmatmul.bf16.gmra.mxu0 %v2393
        %v2469 = vpop.f32.mrf.mxu0
        %v2470 = vadd.f32 0.0, %v2469
        %v2471 = vpop.f32.mrf.mxu0
        %v2472 = vadd.f32 0.0, %v2471
        %2473 = vdwg.mxu0
        %2474 = vmatpush.msra.mxu0 0.0
        %2475 = vmatpush.msra.mxu0 0.0
        %2476 = vmatpush.msra.mxu0 0.0
        %2477 = vmatpush.msra.mxu0 0.0
        %2478 = vmatpush.msra.mxu0 0.0
        %2479 = vmatpush.msra.mxu0 0.0
        %2480 = vmatpush.msra.mxu0 0.0
        %2481 = vmatpush.msra.mxu0 0.0
        %2482 = vmatpush.msra.mxu0 0.0
        %2483 = vmatpush.msra.mxu0 0.0
        %2484 = vmatpush.msra.mxu0 0.0
        %2485 = vmatpush.msra.mxu0 0.0
        %2486 = vmatpush.msra.mxu0 0.0
        %2487 = vmatpush.msra.mxu0 0.0
        %2488 = vmatpush.msra.mxu0 0.0
        %2489 = vmatpush.msra.mxu0 %v2401
        %2490 = vmatmul.bf16.gmra.mxu0 %v2393
        %v2491 = vpop.f32.mrf.mxu0
        %v2492 = vadd.f32 0.0, %v2491
        %v2493 = vpop.f32.mrf.mxu0
        %v2494 = vadd.f32 0.0, %v2493
        %2495 = vdwg.mxu0
        %2496 = vmatpush.msra.mxu0 0.0
        %2497 = vmatpush.msra.mxu0 0.0
        %2498 = vmatpush.msra.mxu0 0.0
        %2499 = vmatpush.msra.mxu0 0.0
        %2500 = vmatpush.msra.mxu0 0.0
        %2501 = vmatpush.msra.mxu0 0.0
        %2502 = vmatpush.msra.mxu0 0.0
        %2503 = vmatpush.msra.mxu0 0.0
        %2504 = vmatpush.msra.mxu0 0.0
        %2505 = vmatpush.msra.mxu0 0.0
        %2506 = vmatpush.msra.mxu0 0.0
        %2507 = vmatpush.msra.mxu0 0.0
        %2508 = vmatpush.msra.mxu0 0.0
        %2509 = vmatpush.msra.mxu0 0.0
        %2510 = vmatpush.msra.mxu0 0.0
        %2511 = vmatpush.msra.mxu0 %v2403
        %2512 = vmatmul.bf16.gmra.mxu0 %v2393
        %v2513 = vpop.f32.mrf.mxu0
        %v2514 = vadd.f32 0.0, %v2513
        %v2515 = vpop.f32.mrf.mxu0
        %v2516 = vadd.f32 0.0, %v2515
        %2517 = vdwg.mxu0
        %2518 = vmatpush.msra.mxu0 0.0
        %2519 = vmatpush.msra.mxu0 0.0
        %2520 = vmatpush.msra.mxu0 0.0
        %2521 = vmatpush.msra.mxu0 0.0
        %2522 = vmatpush.msra.mxu0 0.0
        %2523 = vmatpush.msra.mxu0 0.0
        %2524 = vmatpush.msra.mxu0 0.0
        %2525 = vmatpush.msra.mxu0 0.0
        %2526 = vmatpush.msra.mxu0 0.0
        %2527 = vmatpush.msra.mxu0 0.0
        %2528 = vmatpush.msra.mxu0 0.0
        %2529 = vmatpush.msra.mxu0 0.0
        %2530 = vmatpush.msra.mxu0 0.0
        %2531 = vmatpush.msra.mxu0 0.0
        %2532 = vmatpush.msra.mxu0 0.0
        %2533 = vmatpush.msra.mxu0 %v2406
        %2534 = vmatmul.bf16.gmra.mxu0 %v2393
        %v2535 = vpop.f32.mrf.mxu0
        %v2536 = vadd.f32 0.0, %v2535
        %v2537 = vpop.f32.mrf.mxu0
        %v2538 = vadd.f32 0.0, %v2537
        %2539 = vdwg.mxu0
        %v2540 = vadd.f32 %v2351, %v2426
        %v2541 = vadd.f32 %v2352, %v2448
        %v2542 = vadd.f32 %v2353, %v2470
        %v2543 = vadd.f32 %v2354, %v2492
        %v2544 = vadd.f32 %v2355, %v2514
        %v2545 = vadd.f32 %v2356, %v2536
        %v2546 = vadd.f32 %v2357, %v2428
        %v2547 = vadd.f32 %v2358, %v2450
        %v2548 = vadd.f32 %v2359, %v2472
        %v2549 = vadd.f32 %v2360, %v2494
        %v2550 = vadd.f32 %v2361, %v2516
        %v2551 = vadd.f32 %v2362, %v2538
        %s2552 = scalar_lea.vmem %s5, 40
        %v2553 = vld [vmem:[%s2552] sm:$0xf]
        %v2554 = vld [vmem:[%s2552 + $0x4] sm:$0xf]
        %2555 = vrot.lane.b32.xlu0 %v1641, 100
        %v2556 = vpop.permute.xlu0 %2555
        %2557 = vrot.lane.b32.xlu0 %v1642, 100
        %v2558 = vpop.permute.xlu0 %2557
        %2559 = vrot.lane.b32.xlu0 %v1643, 100
        %v2560 = vpop.permute.xlu0 %2559
        %2561 = vrot.lane.b32.xlu0 %v1644, 100
        %v2562 = vpop.permute.xlu0 %2561
        %2563 = vrot.lane.b32.xlu0 %v1645, 100
        %v2564 = vpop.permute.xlu0 %2563
        %2565 = vrot.lane.b32.xlu0 %v1646, 100
        %v2566 = vpop.permute.xlu0 %2565
        %vm2567 = vcmask 818176
        %v2568 = vsel %vm2567, %v2556, %v2558
        %v2569 = vsel %vm2567, %v2558, %v2560
        %v2570 = vsel %vm2567, %v2560, %v2562
        %v2571 = vsel %vm2567, %v2562, %v2564
        %v2572 = vsel %vm2567, %v2564, %v2566
        %v2575 = vsel %vm2567, %v2566, %v2556
        %v2578 = vunpack.c.l.b16 %v2553
        %v2579 = vunpack.c.l.b16 %v2554
        %v2580 = vpack.c.b16 %v2579, %v2578
        %v2582 = vsel %vm393, %v2580, 0
        %v2584 = vsel %vm1687, %v2568, 0
        %v2586 = vsel %vm1687, %v2569, 0
        %v2588 = vsel %vm1687, %v2570, 0
        %v2590 = vsel %vm1687, %v2571, 0
        %v2592 = vsel %vm1687, %v2572, 0
        %v2595 = vsel %vm1687, %v2575, 0
        %2597 = vmatpush.msra.mxu0 0.0
        %2598 = vmatpush.msra.mxu0 0.0
        %2599 = vmatpush.msra.mxu0 0.0
        %2600 = vmatpush.msra.mxu0 0.0
        %2601 = vmatpush.msra.mxu0 0.0
        %2602 = vmatpush.msra.mxu0 0.0
        %2603 = vmatpush.msra.mxu0 0.0
        %2604 = vmatpush.msra.mxu0 0.0
        %2605 = vmatpush.msra.mxu0 0.0
        %2606 = vmatpush.msra.mxu0 0.0
        %2607 = vmatpush.msra.mxu0 0.0
        %2608 = vmatpush.msra.mxu0 0.0
        %2609 = vmatpush.msra.mxu0 0.0
        %2610 = vmatpush.msra.mxu0 0.0
        %2611 = vmatpush.msra.mxu0 0.0
        %2612 = vmatpush.msra.mxu0 %v2584
        %2613 = vmatmul.bf16.gmra.mxu0 %v2582
        %v2614 = vpop.f32.mrf.mxu0
        %v2615 = vadd.f32 0.0, %v2614
        %v2616 = vpop.f32.mrf.mxu0
        %v2617 = vadd.f32 0.0, %v2616
        %2618 = vdwg.mxu0
        %2619 = vmatpush.msra.mxu0 0.0
        %2620 = vmatpush.msra.mxu0 0.0
        %2621 = vmatpush.msra.mxu0 0.0
        %2622 = vmatpush.msra.mxu0 0.0
        %2623 = vmatpush.msra.mxu0 0.0
        %2624 = vmatpush.msra.mxu0 0.0
        %2625 = vmatpush.msra.mxu0 0.0
        %2626 = vmatpush.msra.mxu0 0.0
        %2627 = vmatpush.msra.mxu0 0.0
        %2628 = vmatpush.msra.mxu0 0.0
        %2629 = vmatpush.msra.mxu0 0.0
        %2630 = vmatpush.msra.mxu0 0.0
        %2631 = vmatpush.msra.mxu0 0.0
        %2632 = vmatpush.msra.mxu0 0.0
        %2633 = vmatpush.msra.mxu0 0.0
        %2634 = vmatpush.msra.mxu0 %v2586
        %2635 = vmatmul.bf16.gmra.mxu0 %v2582
        %v2636 = vpop.f32.mrf.mxu0
        %v2637 = vadd.f32 0.0, %v2636
        %v2638 = vpop.f32.mrf.mxu0
        %v2639 = vadd.f32 0.0, %v2638
        %2640 = vdwg.mxu0
        %2641 = vmatpush.msra.mxu0 0.0
        %2642 = vmatpush.msra.mxu0 0.0
        %2643 = vmatpush.msra.mxu0 0.0
        %2644 = vmatpush.msra.mxu0 0.0
        %2645 = vmatpush.msra.mxu0 0.0
        %2646 = vmatpush.msra.mxu0 0.0
        %2647 = vmatpush.msra.mxu0 0.0
        %2648 = vmatpush.msra.mxu0 0.0
        %2649 = vmatpush.msra.mxu0 0.0
        %2650 = vmatpush.msra.mxu0 0.0
        %2651 = vmatpush.msra.mxu0 0.0
        %2652 = vmatpush.msra.mxu0 0.0
        %2653 = vmatpush.msra.mxu0 0.0
        %2654 = vmatpush.msra.mxu0 0.0
        %2655 = vmatpush.msra.mxu0 0.0
        %2656 = vmatpush.msra.mxu0 %v2588
        %2657 = vmatmul.bf16.gmra.mxu0 %v2582
        %v2658 = vpop.f32.mrf.mxu0
        %v2659 = vadd.f32 0.0, %v2658
        %v2660 = vpop.f32.mrf.mxu0
        %v2661 = vadd.f32 0.0, %v2660
        %2662 = vdwg.mxu0
        %2663 = vmatpush.msra.mxu0 0.0
        %2664 = vmatpush.msra.mxu0 0.0
        %2665 = vmatpush.msra.mxu0 0.0
        %2666 = vmatpush.msra.mxu0 0.0
        %2667 = vmatpush.msra.mxu0 0.0
        %2668 = vmatpush.msra.mxu0 0.0
        %2669 = vmatpush.msra.mxu0 0.0
        %2670 = vmatpush.msra.mxu0 0.0
        %2671 = vmatpush.msra.mxu0 0.0
        %2672 = vmatpush.msra.mxu0 0.0
        %2673 = vmatpush.msra.mxu0 0.0
        %2674 = vmatpush.msra.mxu0 0.0
        %2675 = vmatpush.msra.mxu0 0.0
        %2676 = vmatpush.msra.mxu0 0.0
        %2677 = vmatpush.msra.mxu0 0.0
        %2678 = vmatpush.msra.mxu0 %v2590
        %2679 = vmatmul.bf16.gmra.mxu0 %v2582
        %v2680 = vpop.f32.mrf.mxu0
        %v2681 = vadd.f32 0.0, %v2680
        %v2682 = vpop.f32.mrf.mxu0
        %v2683 = vadd.f32 0.0, %v2682
        %2684 = vdwg.mxu0
        %2685 = vmatpush.msra.mxu0 0.0
        %2686 = vmatpush.msra.mxu0 0.0
        %2687 = vmatpush.msra.mxu0 0.0
        %2688 = vmatpush.msra.mxu0 0.0
        %2689 = vmatpush.msra.mxu0 0.0
        %2690 = vmatpush.msra.mxu0 0.0
        %2691 = vmatpush.msra.mxu0 0.0
        %2692 = vmatpush.msra.mxu0 0.0
        %2693 = vmatpush.msra.mxu0 0.0
        %2694 = vmatpush.msra.mxu0 0.0
        %2695 = vmatpush.msra.mxu0 0.0
        %2696 = vmatpush.msra.mxu0 0.0
        %2697 = vmatpush.msra.mxu0 0.0
        %2698 = vmatpush.msra.mxu0 0.0
        %2699 = vmatpush.msra.mxu0 0.0
        %2700 = vmatpush.msra.mxu0 %v2592
        %2701 = vmatmul.bf16.gmra.mxu0 %v2582
        %v2702 = vpop.f32.mrf.mxu0
        %v2703 = vadd.f32 0.0, %v2702
        %v2704 = vpop.f32.mrf.mxu0
        %v2705 = vadd.f32 0.0, %v2704
        %2706 = vdwg.mxu0
        %2707 = vmatpush.msra.mxu0 0.0
        %2708 = vmatpush.msra.mxu0 0.0
        %2709 = vmatpush.msra.mxu0 0.0
        %2710 = vmatpush.msra.mxu0 0.0
        %2711 = vmatpush.msra.mxu0 0.0
        %2712 = vmatpush.msra.mxu0 0.0
        %2713 = vmatpush.msra.mxu0 0.0
        %2714 = vmatpush.msra.mxu0 0.0
        %2715 = vmatpush.msra.mxu0 0.0
        %2716 = vmatpush.msra.mxu0 0.0
        %2717 = vmatpush.msra.mxu0 0.0
        %2718 = vmatpush.msra.mxu0 0.0
        %2719 = vmatpush.msra.mxu0 0.0
        %2720 = vmatpush.msra.mxu0 0.0
        %2721 = vmatpush.msra.mxu0 0.0
        %2722 = vmatpush.msra.mxu0 %v2595
        %2723 = vmatmul.bf16.gmra.mxu0 %v2582
        %v2724 = vpop.f32.mrf.mxu0
        %v2725 = vadd.f32 0.0, %v2724
        %v2726 = vpop.f32.mrf.mxu0
        %v2727 = vadd.f32 0.0, %v2726
        %2728 = vdwg.mxu0
        %v2729 = vadd.f32 %v2540, %v2615
        %v2730 = vadd.f32 %v2541, %v2637
        %v2731 = vadd.f32 %v2542, %v2659
        %v2732 = vadd.f32 %v2543, %v2681
        %v2733 = vadd.f32 %v2544, %v2703
        %v2734 = vadd.f32 %v2545, %v2725
        %v2735 = vadd.f32 %v2546, %v2617
        %v2736 = vadd.f32 %v2547, %v2639
        %v2737 = vadd.f32 %v2548, %v2661
        %v2738 = vadd.f32 %v2549, %v2683
        %v2739 = vadd.f32 %v2550, %v2705
        %v2740 = vadd.f32 %v2551, %v2727
        %s2741 = scalar_lea.vmem %s5, 48
        %v2742 = vld [vmem:[%s2741] sm:$0xf]
        %v2743 = vld [vmem:[%s2741 + $0x4] sm:$0xf]
        %2744 = vrot.lane.b32.xlu0 %v1641, 76
        %v2745 = vpop.permute.xlu0 %2744
        %2746 = vrot.lane.b32.xlu0 %v1642, 76
        %v2747 = vpop.permute.xlu0 %2746
        %2748 = vrot.lane.b32.xlu0 %v1643, 76
        %v2749 = vpop.permute.xlu0 %2748
        %2750 = vrot.lane.b32.xlu0 %v1644, 76
        %v2751 = vpop.permute.xlu0 %2750
        %2752 = vrot.lane.b32.xlu0 %v1645, 76
        %v2753 = vpop.permute.xlu0 %2752
        %2754 = vrot.lane.b32.xlu0 %v1646, 76
        %v2755 = vpop.permute.xlu0 %2754
        %vm2756 = vcmask 621568
        %v2757 = vsel %vm2756, %v2745, %v2747
        %v2758 = vsel %vm2756, %v2747, %v2749
        %v2759 = vsel %vm2756, %v2749, %v2751
        %v2760 = vsel %vm2756, %v2751, %v2753
        %v2761 = vsel %vm2756, %v2753, %v2755
        %v2764 = vsel %vm2756, %v2755, %v2745
        %v2767 = vunpack.c.l.b16 %v2742
        %v2768 = vunpack.c.l.b16 %v2743
        %v2769 = vpack.c.b16 %v2768, %v2767
        %v2771 = vsel %vm393, %v2769, 0
        %v2773 = vsel %vm1687, %v2757, 0
        %v2775 = vsel %vm1687, %v2758, 0
        %v2777 = vsel %vm1687, %v2759, 0
        %v2779 = vsel %vm1687, %v2760, 0
        %v2781 = vsel %vm1687, %v2761, 0
        %v2784 = vsel %vm1687, %v2764, 0
        %2786 = vmatpush.msra.mxu0 0.0
        %2787 = vmatpush.msra.mxu0 0.0
        %2788 = vmatpush.msra.mxu0 0.0
        %2789 = vmatpush.msra.mxu0 0.0
        %2790 = vmatpush.msra.mxu0 0.0
        %2791 = vmatpush.msra.mxu0 0.0
        %2792 = vmatpush.msra.mxu0 0.0
        %2793 = vmatpush.msra.mxu0 0.0
        %2794 = vmatpush.msra.mxu0 0.0
        %2795 = vmatpush.msra.mxu0 0.0
        %2796 = vmatpush.msra.mxu0 0.0
        %2797 = vmatpush.msra.mxu0 0.0
        %2798 = vmatpush.msra.mxu0 0.0
        %2799 = vmatpush.msra.mxu0 0.0
        %2800 = vmatpush.msra.mxu0 0.0
        %2801 = vmatpush.msra.mxu0 %v2773
        %2802 = vmatmul.bf16.gmra.mxu0 %v2771
        %v2803 = vpop.f32.mrf.mxu0
        %v2804 = vadd.f32 0.0, %v2803
        %v2805 = vpop.f32.mrf.mxu0
        %v2806 = vadd.f32 0.0, %v2805
        %2807 = vdwg.mxu0
        %2808 = vmatpush.msra.mxu0 0.0
        %2809 = vmatpush.msra.mxu0 0.0
        %2810 = vmatpush.msra.mxu0 0.0
        %2811 = vmatpush.msra.mxu0 0.0
        %2812 = vmatpush.msra.mxu0 0.0
        %2813 = vmatpush.msra.mxu0 0.0
        %2814 = vmatpush.msra.mxu0 0.0
        %2815 = vmatpush.msra.mxu0 0.0
        %2816 = vmatpush.msra.mxu0 0.0
        %2817 = vmatpush.msra.mxu0 0.0
        %2818 = vmatpush.msra.mxu0 0.0
        %2819 = vmatpush.msra.mxu0 0.0
        %2820 = vmatpush.msra.mxu0 0.0
        %2821 = vmatpush.msra.mxu0 0.0
        %2822 = vmatpush.msra.mxu0 0.0
        %2823 = vmatpush.msra.mxu0 %v2775
        %2824 = vmatmul.bf16.gmra.mxu0 %v2771
        %v2825 = vpop.f32.mrf.mxu0
        %v2826 = vadd.f32 0.0, %v2825
        %v2827 = vpop.f32.mrf.mxu0
        %v2828 = vadd.f32 0.0, %v2827
        %2829 = vdwg.mxu0
        %2830 = vmatpush.msra.mxu0 0.0
        %2831 = vmatpush.msra.mxu0 0.0
        %2832 = vmatpush.msra.mxu0 0.0
        %2833 = vmatpush.msra.mxu0 0.0
        %2834 = vmatpush.msra.mxu0 0.0
        %2835 = vmatpush.msra.mxu0 0.0
        %2836 = vmatpush.msra.mxu0 0.0
        %2837 = vmatpush.msra.mxu0 0.0
        %2838 = vmatpush.msra.mxu0 0.0
        %2839 = vmatpush.msra.mxu0 0.0
        %2840 = vmatpush.msra.mxu0 0.0
        %2841 = vmatpush.msra.mxu0 0.0
        %2842 = vmatpush.msra.mxu0 0.0
        %2843 = vmatpush.msra.mxu0 0.0
        %2844 = vmatpush.msra.mxu0 0.0
        %2845 = vmatpush.msra.mxu0 %v2777
        %2846 = vmatmul.bf16.gmra.mxu0 %v2771
        %v2847 = vpop.f32.mrf.mxu0
        %v2848 = vadd.f32 0.0, %v2847
        %v2849 = vpop.f32.mrf.mxu0
        %v2850 = vadd.f32 0.0, %v2849
        %2851 = vdwg.mxu0
        %2852 = vmatpush.msra.mxu0 0.0
        %2853 = vmatpush.msra.mxu0 0.0
        %2854 = vmatpush.msra.mxu0 0.0
        %2855 = vmatpush.msra.mxu0 0.0
        %2856 = vmatpush.msra.mxu0 0.0
        %2857 = vmatpush.msra.mxu0 0.0
        %2858 = vmatpush.msra.mxu0 0.0
        %2859 = vmatpush.msra.mxu0 0.0
        %2860 = vmatpush.msra.mxu0 0.0
        %2861 = vmatpush.msra.mxu0 0.0
        %2862 = vmatpush.msra.mxu0 0.0
        %2863 = vmatpush.msra.mxu0 0.0
        %2864 = vmatpush.msra.mxu0 0.0
        %2865 = vmatpush.msra.mxu0 0.0
        %2866 = vmatpush.msra.mxu0 0.0
        %2867 = vmatpush.msra.mxu0 %v2779
        %2868 = vmatmul.bf16.gmra.mxu0 %v2771
        %v2869 = vpop.f32.mrf.mxu0
        %v2870 = vadd.f32 0.0, %v2869
        %v2871 = vpop.f32.mrf.mxu0
        %v2872 = vadd.f32 0.0, %v2871
        %2873 = vdwg.mxu0
        %2874 = vmatpush.msra.mxu0 0.0
        %2875 = vmatpush.msra.mxu0 0.0
        %2876 = vmatpush.msra.mxu0 0.0
        %2877 = vmatpush.msra.mxu0 0.0
        %2878 = vmatpush.msra.mxu0 0.0
        %2879 = vmatpush.msra.mxu0 0.0
        %2880 = vmatpush.msra.mxu0 0.0
        %2881 = vmatpush.msra.mxu0 0.0
        %2882 = vmatpush.msra.mxu0 0.0
        %2883 = vmatpush.msra.mxu0 0.0
        %2884 = vmatpush.msra.mxu0 0.0
        %2885 = vmatpush.msra.mxu0 0.0
        %2886 = vmatpush.msra.mxu0 0.0
        %2887 = vmatpush.msra.mxu0 0.0
        %2888 = vmatpush.msra.mxu0 0.0
        %2889 = vmatpush.msra.mxu0 %v2781
        %2890 = vmatmul.bf16.gmra.mxu0 %v2771
        %v2891 = vpop.f32.mrf.mxu0
        %v2892 = vadd.f32 0.0, %v2891
        %v2893 = vpop.f32.mrf.mxu0
        %v2894 = vadd.f32 0.0, %v2893
        %2895 = vdwg.mxu0
        %2896 = vmatpush.msra.mxu0 0.0
        %2897 = vmatpush.msra.mxu0 0.0
        %2898 = vmatpush.msra.mxu0 0.0
        %2899 = vmatpush.msra.mxu0 0.0
        %2900 = vmatpush.msra.mxu0 0.0
        %2901 = vmatpush.msra.mxu0 0.0
        %2902 = vmatpush.msra.mxu0 0.0
        %2903 = vmatpush.msra.mxu0 0.0
        %2904 = vmatpush.msra.mxu0 0.0
        %2905 = vmatpush.msra.mxu0 0.0
        %2906 = vmatpush.msra.mxu0 0.0
        %2907 = vmatpush.msra.mxu0 0.0
        %2908 = vmatpush.msra.mxu0 0.0
        %2909 = vmatpush.msra.mxu0 0.0
        %2910 = vmatpush.msra.mxu0 0.0
        %2911 = vmatpush.msra.mxu0 %v2784
        %2912 = vmatmul.bf16.gmra.mxu0 %v2771
        %v2913 = vpop.f32.mrf.mxu0
        %v2914 = vadd.f32 0.0, %v2913
        %v2915 = vpop.f32.mrf.mxu0
        %v2916 = vadd.f32 0.0, %v2915
        %2917 = vdwg.mxu0
        %v2918 = vadd.f32 %v2729, %v2804
        %v2919 = vadd.f32 %v2730, %v2826
        %v2920 = vadd.f32 %v2731, %v2848
        %v2921 = vadd.f32 %v2732, %v2870
        %v2922 = vadd.f32 %v2733, %v2892
        %v2923 = vadd.f32 %v2734, %v2914
        %v2924 = vadd.f32 %v2735, %v2806
        %v2925 = vadd.f32 %v2736, %v2828
        %v2926 = vadd.f32 %v2737, %v2850
        %v2927 = vadd.f32 %v2738, %v2872
        %v2928 = vadd.f32 %v2739, %v2894
        %v2929 = vadd.f32 %v2740, %v2916
        %s2930 = scalar_lea.vmem %s5, 56
        %v2931 = vld [vmem:[%s2930] sm:$0xf]
        %v2932 = vld [vmem:[%s2930 + $0x4] sm:$0xf]
        %2933 = vrot.lane.b32.xlu0 %v1641, 75
        %v2934 = vpop.permute.xlu0 %2933
        %2935 = vrot.lane.b32.xlu0 %v1642, 75
        %v2936 = vpop.permute.xlu0 %2935
        %2937 = vrot.lane.b32.xlu0 %v1643, 75
        %v2938 = vpop.permute.xlu0 %2937
        %2939 = vrot.lane.b32.xlu0 %v1644, 75
        %v2940 = vpop.permute.xlu0 %2939
        %2941 = vrot.lane.b32.xlu0 %v1645, 75
        %v2942 = vpop.permute.xlu0 %2941
        %2943 = vrot.lane.b32.xlu0 %v1646, 75
        %v2944 = vpop.permute.xlu0 %2943
        %vm2945 = vcmask 613376
        %v2946 = vsel %vm2945, %v2934, %v2936
        %v2947 = vsel %vm2945, %v2936, %v2938
        %v2948 = vsel %vm2945, %v2938, %v2940
        %v2949 = vsel %vm2945, %v2940, %v2942
        %v2950 = vsel %vm2945, %v2942, %v2944
        %v2953 = vsel %vm2945, %v2944, %v2934
        %v2956 = vunpack.c.l.b16 %v2931
        %v2957 = vunpack.c.l.b16 %v2932
        %v2958 = vpack.c.b16 %v2957, %v2956
        %v2960 = vsel %vm393, %v2958, 0
        %v2962 = vsel %vm1687, %v2946, 0
        %v2964 = vsel %vm1687, %v2947, 0
        %v2966 = vsel %vm1687, %v2948, 0
        %v2968 = vsel %vm1687, %v2949, 0
        %v2970 = vsel %vm1687, %v2950, 0
        %v2973 = vsel %vm1687, %v2953, 0
        %2975 = vmatpush.msra.mxu0 0.0
        %2976 = vmatpush.msra.mxu0 0.0
        %2977 = vmatpush.msra.mxu0 0.0
        %2978 = vmatpush.msra.mxu0 0.0
        %2979 = vmatpush.msra.mxu0 0.0
        %2980 = vmatpush.msra.mxu0 0.0
        %2981 = vmatpush.msra.mxu0 0.0
        %2982 = vmatpush.msra.mxu0 0.0
        %2983 = vmatpush.msra.mxu0 0.0
        %2984 = vmatpush.msra.mxu0 0.0
        %2985 = vmatpush.msra.mxu0 0.0
        %2986 = vmatpush.msra.mxu0 0.0
        %2987 = vmatpush.msra.mxu0 0.0
        %2988 = vmatpush.msra.mxu0 0.0
        %2989 = vmatpush.msra.mxu0 0.0
        %2990 = vmatpush.msra.mxu0 %v2962
        %2991 = vmatmul.bf16.gmra.mxu0 %v2960
        %v2992 = vpop.f32.mrf.mxu0
        %v2993 = vadd.f32 0.0, %v2992
        %v2994 = vpop.f32.mrf.mxu0
        %v2995 = vadd.f32 0.0, %v2994
        %2996 = vdwg.mxu0
        %2997 = vmatpush.msra.mxu0 0.0
        %2998 = vmatpush.msra.mxu0 0.0
        %2999 = vmatpush.msra.mxu0 0.0
        %3000 = vmatpush.msra.mxu0 0.0
        %3001 = vmatpush.msra.mxu0 0.0
        %3002 = vmatpush.msra.mxu0 0.0
        %3003 = vmatpush.msra.mxu0 0.0
        %3004 = vmatpush.msra.mxu0 0.0
        %3005 = vmatpush.msra.mxu0 0.0
        %3006 = vmatpush.msra.mxu0 0.0
        %3007 = vmatpush.msra.mxu0 0.0
        %3008 = vmatpush.msra.mxu0 0.0
        %3009 = vmatpush.msra.mxu0 0.0
        %3010 = vmatpush.msra.mxu0 0.0
        %3011 = vmatpush.msra.mxu0 0.0
        %3012 = vmatpush.msra.mxu0 %v2964
        %3013 = vmatmul.bf16.gmra.mxu0 %v2960
        %v3014 = vpop.f32.mrf.mxu0
        %v3015 = vadd.f32 0.0, %v3014
        %v3016 = vpop.f32.mrf.mxu0
        %v3017 = vadd.f32 0.0, %v3016
        %3018 = vdwg.mxu0
        %3019 = vmatpush.msra.mxu0 0.0
        %3020 = vmatpush.msra.mxu0 0.0
        %3021 = vmatpush.msra.mxu0 0.0
        %3022 = vmatpush.msra.mxu0 0.0
        %3023 = vmatpush.msra.mxu0 0.0
        %3024 = vmatpush.msra.mxu0 0.0
        %3025 = vmatpush.msra.mxu0 0.0
        %3026 = vmatpush.msra.mxu0 0.0
        %3027 = vmatpush.msra.mxu0 0.0
        %3028 = vmatpush.msra.mxu0 0.0
        %3029 = vmatpush.msra.mxu0 0.0
        %3030 = vmatpush.msra.mxu0 0.0
        %3031 = vmatpush.msra.mxu0 0.0
        %3032 = vmatpush.msra.mxu0 0.0
        %3033 = vmatpush.msra.mxu0 0.0
        %3034 = vmatpush.msra.mxu0 %v2966
        %3035 = vmatmul.bf16.gmra.mxu0 %v2960
        %v3036 = vpop.f32.mrf.mxu0
        %v3037 = vadd.f32 0.0, %v3036
        %v3038 = vpop.f32.mrf.mxu0
        %v3039 = vadd.f32 0.0, %v3038
        %3040 = vdwg.mxu0
        %3041 = vmatpush.msra.mxu0 0.0
        %3042 = vmatpush.msra.mxu0 0.0
        %3043 = vmatpush.msra.mxu0 0.0
        %3044 = vmatpush.msra.mxu0 0.0
        %3045 = vmatpush.msra.mxu0 0.0
        %3046 = vmatpush.msra.mxu0 0.0
        %3047 = vmatpush.msra.mxu0 0.0
        %3048 = vmatpush.msra.mxu0 0.0
        %3049 = vmatpush.msra.mxu0 0.0
        %3050 = vmatpush.msra.mxu0 0.0
        %3051 = vmatpush.msra.mxu0 0.0
        %3052 = vmatpush.msra.mxu0 0.0
        %3053 = vmatpush.msra.mxu0 0.0
        %3054 = vmatpush.msra.mxu0 0.0
        %3055 = vmatpush.msra.mxu0 0.0
        %3056 = vmatpush.msra.mxu0 %v2968
        %3057 = vmatmul.bf16.gmra.mxu0 %v2960
        %v3058 = vpop.f32.mrf.mxu0
        %v3059 = vadd.f32 0.0, %v3058
        %v3060 = vpop.f32.mrf.mxu0
        %v3061 = vadd.f32 0.0, %v3060
        %3062 = vdwg.mxu0
        %3063 = vmatpush.msra.mxu0 0.0
        %3064 = vmatpush.msra.mxu0 0.0
        %3065 = vmatpush.msra.mxu0 0.0
        %3066 = vmatpush.msra.mxu0 0.0
        %3067 = vmatpush.msra.mxu0 0.0
        %3068 = vmatpush.msra.mxu0 0.0
        %3069 = vmatpush.msra.mxu0 0.0
        %3070 = vmatpush.msra.mxu0 0.0
        %3071 = vmatpush.msra.mxu0 0.0
        %3072 = vmatpush.msra.mxu0 0.0
        %3073 = vmatpush.msra.mxu0 0.0
        %3074 = vmatpush.msra.mxu0 0.0
        %3075 = vmatpush.msra.mxu0 0.0
        %3076 = vmatpush.msra.mxu0 0.0
        %3077 = vmatpush.msra.mxu0 0.0
        %3078 = vmatpush.msra.mxu0 %v2970
        %3079 = vmatmul.bf16.gmra.mxu0 %v2960
        %v3080 = vpop.f32.mrf.mxu0
        %v3081 = vadd.f32 0.0, %v3080
        %v3082 = vpop.f32.mrf.mxu0
        %v3083 = vadd.f32 0.0, %v3082
        %3084 = vdwg.mxu0
        %3085 = vmatpush.msra.mxu0 0.0
        %3086 = vmatpush.msra.mxu0 0.0
        %3087 = vmatpush.msra.mxu0 0.0
        %3088 = vmatpush.msra.mxu0 0.0
        %3089 = vmatpush.msra.mxu0 0.0
        %3090 = vmatpush.msra.mxu0 0.0
        %3091 = vmatpush.msra.mxu0 0.0
        %3092 = vmatpush.msra.mxu0 0.0
        %3093 = vmatpush.msra.mxu0 0.0
        %3094 = vmatpush.msra.mxu0 0.0
        %3095 = vmatpush.msra.mxu0 0.0
        %3096 = vmatpush.msra.mxu0 0.0
        %3097 = vmatpush.msra.mxu0 0.0
        %3098 = vmatpush.msra.mxu0 0.0
        %3099 = vmatpush.msra.mxu0 0.0
        %3100 = vmatpush.msra.mxu0 %v2973
        %3101 = vmatmul.bf16.gmra.mxu0 %v2960
        %v3102 = vpop.f32.mrf.mxu0
        %v3103 = vadd.f32 0.0, %v3102
        %v3104 = vpop.f32.mrf.mxu0
        %v3105 = vadd.f32 0.0, %v3104
        %3106 = vdwg.mxu0
        %v3107 = vadd.f32 %v2918, %v2993
        %v3108 = vadd.f32 %v2919, %v3015
        %v3109 = vadd.f32 %v2920, %v3037
        %v3110 = vadd.f32 %v2921, %v3059
        %v3111 = vadd.f32 %v2922, %v3081
        %v3112 = vadd.f32 %v2923, %v3103
        %v3113 = vadd.f32 %v2924, %v2995
        %v3114 = vadd.f32 %v2925, %v3017
        %v3115 = vadd.f32 %v2926, %v3039
        %v3116 = vadd.f32 %v2927, %v3061
        %v3117 = vadd.f32 %v2928, %v3083
        %v3118 = vadd.f32 %v2929, %v3105
        %s3119 = scalar_lea.vmem %s5, 64
        %v3120 = vld [vmem:[%s3119] sm:$0xf]
        %v3121 = vld [vmem:[%s3119 + $0x4] sm:$0xf]
        %3122 = vrot.lane.b32.xlu0 %v1641, 74
        %v3123 = vpop.permute.xlu0 %3122
        %3124 = vrot.lane.b32.xlu0 %v1642, 74
        %v3125 = vpop.permute.xlu0 %3124
        %3126 = vrot.lane.b32.xlu0 %v1643, 74
        %v3127 = vpop.permute.xlu0 %3126
        %3128 = vrot.lane.b32.xlu0 %v1644, 74
        %v3129 = vpop.permute.xlu0 %3128
        %3130 = vrot.lane.b32.xlu0 %v1645, 74
        %v3131 = vpop.permute.xlu0 %3130
        %3132 = vrot.lane.b32.xlu0 %v1646, 74
        %v3133 = vpop.permute.xlu0 %3132
        %vm3134 = vcmask 605184
        %v3135 = vsel %vm3134, %v3123, %v3125
        %v3136 = vsel %vm3134, %v3125, %v3127
        %v3137 = vsel %vm3134, %v3127, %v3129
        %v3138 = vsel %vm3134, %v3129, %v3131
        %v3139 = vsel %vm3134, %v3131, %v3133
        %v3142 = vsel %vm3134, %v3133, %v3123
        %v3145 = vunpack.c.l.b16 %v3120
        %v3146 = vunpack.c.l.b16 %v3121
        %v3147 = vpack.c.b16 %v3146, %v3145
        %v3149 = vsel %vm393, %v3147, 0
        %v3151 = vsel %vm1687, %v3135, 0
        %v3153 = vsel %vm1687, %v3136, 0
        %v3155 = vsel %vm1687, %v3137, 0
        %v3157 = vsel %vm1687, %v3138, 0
        %v3159 = vsel %vm1687, %v3139, 0
        %v3162 = vsel %vm1687, %v3142, 0
        %3164 = vmatpush.msra.mxu0 0.0
        %3165 = vmatpush.msra.mxu0 0.0
        %3166 = vmatpush.msra.mxu0 0.0
        %3167 = vmatpush.msra.mxu0 0.0
        %3168 = vmatpush.msra.mxu0 0.0
        %3169 = vmatpush.msra.mxu0 0.0
        %3170 = vmatpush.msra.mxu0 0.0
        %3171 = vmatpush.msra.mxu0 0.0
        %3172 = vmatpush.msra.mxu0 0.0
        %3173 = vmatpush.msra.mxu0 0.0
        %3174 = vmatpush.msra.mxu0 0.0
        %3175 = vmatpush.msra.mxu0 0.0
        %3176 = vmatpush.msra.mxu0 0.0
        %3177 = vmatpush.msra.mxu0 0.0
        %3178 = vmatpush.msra.mxu0 0.0
        %3179 = vmatpush.msra.mxu0 %v3151
        %3180 = vmatmul.bf16.gmra.mxu0 %v3149
        %v3181 = vpop.f32.mrf.mxu0
        %v3182 = vadd.f32 0.0, %v3181
        %v3183 = vpop.f32.mrf.mxu0
        %v3184 = vadd.f32 0.0, %v3183
        %3185 = vdwg.mxu0
        %3186 = vmatpush.msra.mxu0 0.0
        %3187 = vmatpush.msra.mxu0 0.0
        %3188 = vmatpush.msra.mxu0 0.0
        %3189 = vmatpush.msra.mxu0 0.0
        %3190 = vmatpush.msra.mxu0 0.0
        %3191 = vmatpush.msra.mxu0 0.0
        %3192 = vmatpush.msra.mxu0 0.0
        %3193 = vmatpush.msra.mxu0 0.0
        %3194 = vmatpush.msra.mxu0 0.0
        %3195 = vmatpush.msra.mxu0 0.0
        %3196 = vmatpush.msra.mxu0 0.0
        %3197 = vmatpush.msra.mxu0 0.0
        %3198 = vmatpush.msra.mxu0 0.0
        %3199 = vmatpush.msra.mxu0 0.0
        %3200 = vmatpush.msra.mxu0 0.0
        %3201 = vmatpush.msra.mxu0 %v3153
        %3202 = vmatmul.bf16.gmra.mxu0 %v3149
        %v3203 = vpop.f32.mrf.mxu0
        %v3204 = vadd.f32 0.0, %v3203
        %v3205 = vpop.f32.mrf.mxu0
        %v3206 = vadd.f32 0.0, %v3205
        %3207 = vdwg.mxu0
        %3208 = vmatpush.msra.mxu0 0.0
        %3209 = vmatpush.msra.mxu0 0.0
        %3210 = vmatpush.msra.mxu0 0.0
        %3211 = vmatpush.msra.mxu0 0.0
        %3212 = vmatpush.msra.mxu0 0.0
        %3213 = vmatpush.msra.mxu0 0.0
        %3214 = vmatpush.msra.mxu0 0.0
        %3215 = vmatpush.msra.mxu0 0.0
        %3216 = vmatpush.msra.mxu0 0.0
        %3217 = vmatpush.msra.mxu0 0.0
        %3218 = vmatpush.msra.mxu0 0.0
        %3219 = vmatpush.msra.mxu0 0.0
        %3220 = vmatpush.msra.mxu0 0.0
        %3221 = vmatpush.msra.mxu0 0.0
        %3222 = vmatpush.msra.mxu0 0.0
        %3223 = vmatpush.msra.mxu0 %v3155
        %3224 = vmatmul.bf16.gmra.mxu0 %v3149
        %v3225 = vpop.f32.mrf.mxu0
        %v3226 = vadd.f32 0.0, %v3225
        %v3227 = vpop.f32.mrf.mxu0
        %v3228 = vadd.f32 0.0, %v3227
        %3229 = vdwg.mxu0
        %3230 = vmatpush.msra.mxu0 0.0
        %3231 = vmatpush.msra.mxu0 0.0
        %3232 = vmatpush.msra.mxu0 0.0
        %3233 = vmatpush.msra.mxu0 0.0
        %3234 = vmatpush.msra.mxu0 0.0
        %3235 = vmatpush.msra.mxu0 0.0
        %3236 = vmatpush.msra.mxu0 0.0
        %3237 = vmatpush.msra.mxu0 0.0
        %3238 = vmatpush.msra.mxu0 0.0
        %3239 = vmatpush.msra.mxu0 0.0
        %3240 = vmatpush.msra.mxu0 0.0
        %3241 = vmatpush.msra.mxu0 0.0
        %3242 = vmatpush.msra.mxu0 0.0
        %3243 = vmatpush.msra.mxu0 0.0
        %3244 = vmatpush.msra.mxu0 0.0
        %3245 = vmatpush.msra.mxu0 %v3157
        %3246 = vmatmul.bf16.gmra.mxu0 %v3149
        %v3247 = vpop.f32.mrf.mxu0
        %v3248 = vadd.f32 0.0, %v3247
        %v3249 = vpop.f32.mrf.mxu0
        %v3250 = vadd.f32 0.0, %v3249
        %3251 = vdwg.mxu0
        %3252 = vmatpush.msra.mxu0 0.0
        %3253 = vmatpush.msra.mxu0 0.0
        %3254 = vmatpush.msra.mxu0 0.0
        %3255 = vmatpush.msra.mxu0 0.0
        %3256 = vmatpush.msra.mxu0 0.0
        %3257 = vmatpush.msra.mxu0 0.0
        %3258 = vmatpush.msra.mxu0 0.0
        %3259 = vmatpush.msra.mxu0 0.0
        %3260 = vmatpush.msra.mxu0 0.0
        %3261 = vmatpush.msra.mxu0 0.0
        %3262 = vmatpush.msra.mxu0 0.0
        %3263 = vmatpush.msra.mxu0 0.0
        %3264 = vmatpush.msra.mxu0 0.0
        %3265 = vmatpush.msra.mxu0 0.0
        %3266 = vmatpush.msra.mxu0 0.0
        %3267 = vmatpush.msra.mxu0 %v3159
        %3268 = vmatmul.bf16.gmra.mxu0 %v3149
        %v3269 = vpop.f32.mrf.mxu0
        %v3270 = vadd.f32 0.0, %v3269
        %v3271 = vpop.f32.mrf.mxu0
        %v3272 = vadd.f32 0.0, %v3271
        %3273 = vdwg.mxu0
        %3274 = vmatpush.msra.mxu0 0.0
        %3275 = vmatpush.msra.mxu0 0.0
        %3276 = vmatpush.msra.mxu0 0.0
        %3277 = vmatpush.msra.mxu0 0.0
        %3278 = vmatpush.msra.mxu0 0.0
        %3279 = vmatpush.msra.mxu0 0.0
        %3280 = vmatpush.msra.mxu0 0.0
        %3281 = vmatpush.msra.mxu0 0.0
        %3282 = vmatpush.msra.mxu0 0.0
        %3283 = vmatpush.msra.mxu0 0.0
        %3284 = vmatpush.msra.mxu0 0.0
        %3285 = vmatpush.msra.mxu0 0.0
        %3286 = vmatpush.msra.mxu0 0.0
        %3287 = vmatpush.msra.mxu0 0.0
        %3288 = vmatpush.msra.mxu0 0.0
        %3289 = vmatpush.msra.mxu0 %v3162
        %3290 = vmatmul.bf16.gmra.mxu0 %v3149
        %v3291 = vpop.f32.mrf.mxu0
        %v3292 = vadd.f32 0.0, %v3291
        %v3293 = vpop.f32.mrf.mxu0
        %v3294 = vadd.f32 0.0, %v3293
        %3295 = vdwg.mxu0
        %v3296 = vadd.f32 %v3107, %v3182
        %v3297 = vadd.f32 %v3108, %v3204
        %v3298 = vadd.f32 %v3109, %v3226
        %v3299 = vadd.f32 %v3110, %v3248
        %v3300 = vadd.f32 %v3111, %v3270
        %v3301 = vadd.f32 %v3112, %v3292
        %v3302 = vadd.f32 %v3113, %v3184
        %v3303 = vadd.f32 %v3114, %v3206
        %v3304 = vadd.f32 %v3115, %v3228
        %v3305 = vadd.f32 %v3116, %v3250
        %v3306 = vadd.f32 %v3117, %v3272
        %v3307 = vadd.f32 %v3118, %v3294
        %3308 = vst [vmem:[%s289] sm:$0xff] %v3296
        %3309 = vst [vmem:[%s289 + $0x8] sm:$0xff] %v3297
        %3310 = vst [vmem:[%s289 + $0x10] sm:$0xff] %v3298
        %3311 = vst [vmem:[%s289 + $0x18] sm:$0xff] %v3299
        %3312 = vst [vmem:[%s289 + $0x20] sm:$0xff] %v3300
        %3313 = vst [vmem:[%s289 + $0x28] sm:$0xff] %v3301
        %3314 = vst [vmem:[%s289 + $0x30] sm:$0xff] %v3302
        %3315 = vst [vmem:[%s289 + $0x38] sm:$0xff] %v3303
        %3316 = vst [vmem:[%s289 + $0x40] sm:$0xff] %v3304
        %3317 = vst [vmem:[%s289 + $0x48] sm:$0xff] %v3305
        %3318 = vst [vmem:[%s289 + $0x50] sm:$0xff] %v3306
        %3319 = vst [vmem:[%s289 + $0x58] sm:$0xff] %v3307
        %s3320 = sand.u32 %s156, 1
        %s3321 = sand.u32 %s156, 1
        %s3322 = smul.addr %s3321, 96
        %s3323 = scalar_lea.vmem [#allocation3], %s3322
        // Predicated region
        $region71: #{_lambda_.4} parent=65 // pred_check
          %p3324 = pneg %p166
        $region72: #{_lambda_.4} parent=65 // pred_check_branch
          %3326 = sbr.rel (%p3324) target = $region74
        $region73: #{_lambda_.4} parent=65 // pred_region
          %s3327 = smul.u32 6, %s17
          %s3328 = smul.addr %s3327, 8
          %s3329 = scalar_lea.vmem %s6, %s3328
          // Predicated region
          $region75: #{_lambda_.4} parent=73 // pred_check
            _
          $region76: #{_lambda_.4} parent=73 // pred_check_branch
            %3331 = sbr.rel (0) target = $region78
          $region77: #{_lambda_.4} parent=73 // pred_region
            // Predicated region
            $region79: #{_lambda_.4} parent=77 // pred_check
              _
            $region80: #{_lambda_.4} parent=77 // pred_check_branch
              %3333 = sbr.rel (0) target = $region82
            $region81: #{_lambda_.4} parent=77 // pred_region
              loop: start=0, step=1, limit=1
              $region83: #{_lambda_.4} parent=81 // loop_pre_header
                _
              $region84: #{_lambda_.4} parent=81 // loop_header
                %s3335 = sphi 0, %s3339
                %p3336 = scmp.ge.s32.totalorder %s3335, 1
                %s3340 = sphi %s3323, %s3323
                %s3341 = sphi %s3329, %s3329
              $region85: #{_lambda_.4} parent=81 // loop_header_branch
                %3338 = sbr.rel (%p3336) target = $region89
              $region86: #{_lambda_.4} parent=81 // loop_body
                %v3342 = vld [vmem:[%s3340] sm:$0xff]
                %3343 = vst [vmem:[%s3341] sm:$0xff] %v3342
                %v3344 = vld [vmem:[%s3340 + $0x8] sm:$0xff]
                %3345 = vst [vmem:[%s3341 + $0x8] sm:$0xff] %v3344
                %v3346 = vld [vmem:[%s3340 + $0x10] sm:$0xff]
                %3347 = vst [vmem:[%s3341 + $0x10] sm:$0xff] %v3346
                %v3348 = vld [vmem:[%s3340 + $0x18] sm:$0xff]
                %3349 = vst [vmem:[%s3341 + $0x18] sm:$0xff] %v3348
                %v3350 = vld [vmem:[%s3340 + $0x20] sm:$0xff]
                %3351 = vst [vmem:[%s3341 + $0x20] sm:$0xff] %v3350
                %v3352 = vld [vmem:[%s3340 + $0x28] sm:$0xff]
                %3353 = vst [vmem:[%s3341 + $0x28] sm:$0xff] %v3352
                %v3354 = vld [vmem:[%s3340 + $0x30] sm:$0xff]
                %3355 = vst [vmem:[%s3341 + $0x60] sm:$0xff] %v3354
                %v3356 = vld [vmem:[%s3340 + $0x38] sm:$0xff]
                %3357 = vst [vmem:[%s3341 + $0x68] sm:$0xff] %v3356
                %v3358 = vld [vmem:[%s3340 + $0x40] sm:$0xff]
                %3359 = vst [vmem:[%s3341 + $0x70] sm:$0xff] %v3358
                %v3360 = vld [vmem:[%s3340 + $0x48] sm:$0xff]
                %3361 = vst [vmem:[%s3341 + $0x78] sm:$0xff] %v3360
                %v3362 = vld [vmem:[%s3340 + $0x50] sm:$0xff]
                %3363 = vst [vmem:[%s3341 + $0x80] sm:$0xff] %v3362
                %v3364 = vld [vmem:[%s3340 + $0x58] sm:$0xff]
                %3365 = vst [vmem:[%s3341 + $0x88] sm:$0xff] %v3364
              $region87: #{_lambda_.4} parent=81 // loop_footer
                %s3339 = sadd.s32 1, %s3335
              $region88: #{_lambda_.4} parent=81 // loop_footer_branch
                %3334 = sbr.rel target = $region84
              $region89: #{_lambda_.4} parent=81 // loop_exit
                _
            $region82: #{_lambda_.4} parent=77 // pred_fallthru
              _
            // Predicated region
            $region90: #{_lambda_.4} parent=77 // pred_check
              _
            $region91: #{_lambda_.4} parent=77 // pred_check_branch
              %3367 = sbr.rel target = $region93
            $region92: #{_lambda_.4} parent=77 // pred_region
              _
            $region93: #{_lambda_.4} parent=77 // pred_fallthru
              _
          $region78: #{_lambda_.4} parent=73 // pred_fallthru
            _
          %3368 = vnop
        $region74: #{_lambda_.4} parent=65 // pred_fallthru
          _
      $region66: #{_lambda_.4} parent=5 // pred_fallthru
        _
      %p3369 = scmp.le.s32.totalorder 2, %s12
      // Predicated region
      $region94: #{_lambda_.4} parent=5 // pred_check
        %p3370 = pneg %p3369
      $region95: #{_lambda_.4} parent=5 // pred_check_branch
        %3372 = sbr.rel (%p3370) target = $region97
      $region96: #{_lambda_.4} parent=5 // pred_region
        %s3373 = ssub.s32 %s12, 2
        // Predicated region
        $region98: #{_lambda_.4} parent=96 // pred_check
          %p3374 = pneg %p172
        $region99: #{_lambda_.4} parent=96 // pred_check_branch
          %3376 = sbr.rel (%p3374) target = $region101
        $region100: #{_lambda_.4} parent=96 // pred_region
          %s3377 = sand.u32 %s157, 1
          %s3378 = sand.u32 %s157, 1
          %s3379 = smul.addr %s3378, 96
          %s3380 = scalar_lea.vmem [#allocation3], %s3379
        $region101: #{_lambda_.4} parent=96 // pred_fallthru
          _
      $region97: #{_lambda_.4} parent=5 // pred_fallthru
        _
    $region6: #{_lambda_.4} parent=1 // loop_footer
      %s16 = sadd.s32 1, %s12
    $region7: #{_lambda_.4} parent=1 // loop_footer_branch
      %11 = sbr.rel target = $region3
    $region8: #{_lambda_.4} parent=1 // loop_exit
      _

// kernel: _lambda_.5
$region0: #{_lambda_.5}
  #allocation0 [shape = 'u32[]', space=smem, size = 0x4, offset = 0x4, fixed_abs, tag = 'smem constant byte address 0x4 - core index']
  #allocation1 [shape = 'u32[72,128]{1,0:T(1,128)}', space=vmem, size = 0x9000, scoped, tag = 'internal scratch']
  %s0 = inlined_call_operand.vmem [shape: f32[2,2,32,169], index: 0, kind: input, shape index: {}]
  %s1 = inlined_call_operand.vmem [shape: f32[2,2,32,196], index: 1, kind: input, shape index: {}]
  %s2 = inlined_call_operand.vmem [shape: f32[32,169], index: 2, kind: output, shape index: {0}]
  %s3 = inlined_call_operand.vmem [shape: f32[32,196], index: 3, kind: output, shape index: {1}]
  %4 = xla_tuple %s2, %s3
  %s5 = sld [smem:[#allocation0]]
  $region95: #{_lambda_.5} parent=0
    _
  %s7 = ssub.s32 1, %s5
  %s8 = scalar_select 0, %s7, %s5
  $region1: #{_lambda_.5} parent=0
    #allocation2 [shape = 'u8[131072]{0}', space=vmem, size = 0x20000, scoped, tag = 'input window, operand 0']
    #allocation3 [shape = 'u8[131072]{0}', space=vmem, size = 0x20000, scoped, tag = 'input window, operand 1']
    loop: start=0, step=1, limit=4
    $region2: #{_lambda_.5} parent=1 // loop_pre_header
      _
    $region3: #{_lambda_.5} parent=1 // loop_header
      %s10 = sphi 0, %s14
      %p11 = scmp.ge.s32.totalorder %s10, 4
      %s20 = sphi 0, %s22
      %s23 = sphi 0, %s20
      %s24 = sphi 0, %s23
      %s40 = sphi 0, %s24
      %s46 = sphi 0, %s48
      %s49 = sphi 0, %s46
      %s50 = sphi 0, %s49
      %s66 = sphi 0, %s50
      %s72 = sphi 0, %s74
      %s75 = sphi 0, %s72
      %s76 = sphi 0, %s75
      %s92 = sphi 0, %s76
      %s98 = sphi 0, %s100
      %s101 = sphi 0, %s98
      %s102 = sphi 0, %s101
      %s118 = sphi 0, %s102
    $region4: #{_lambda_.5} parent=1 // loop_header_branch
      %13 = sbr.rel (%p11) target = $region8
    $region5: #{_lambda_.5} parent=1 // loop_body
      %s15 = ssub.s32 %s10, 1
      %s16 = ssub.s32 %s10, 2
      %s17 = sadd.s32 %s10, 1
      %s18 = ssub.s32 %s10, %s17
      %p19 = scmp.eq.s32.totalorder %s18, 0
      %s21 = sadd.s32 %s20, 1
      %s22 = scalar_select %p19, %s20, %s21
      %p25 = pneg %p19
      %p26 = scmp.eq.s32.totalorder %s10, 1
      %p27 = por %p25, %p26
      %p28 = scmp.ne.s32.totalorder %s20, %s23
      %p29 = scmp.eq.s32.totalorder %s10, 0
      %p30 = por %p28, %p29
      %p31 = scmp.ne.s32.totalorder %s20, %s23
      %p32 = scmp.eq.s32.totalorder %s15, 1
      %p33 = por %p31, %p32
      %p34 = scmp.ne.s32.totalorder %s23, %s24
      %p35 = scmp.eq.s32.totalorder %s15, 0
      %p36 = por %p34, %p35
      %p37 = scmp.ne.s32.totalorder %s23, %s24
      %p38 = scmp.eq.s32.totalorder %s16, 1
      %p39 = por %p37, %p38
      %p41 = scmp.ne.s32.totalorder %s24, %s40
      %p42 = scmp.eq.s32.totalorder %s16, 0
      %p43 = por %p41, %p42
      %s44 = ssub.s32 %s10, %s17
      %p45 = scmp.eq.s32.totalorder %s44, 0
      %s47 = sadd.s32 %s46, 1
      %s48 = scalar_select %p45, %s46, %s47
      %p51 = pneg %p45
      %p52 = scmp.eq.s32.totalorder %s10, 1
      %p53 = por %p51, %p52
      %p54 = scmp.ne.s32.totalorder %s46, %s49
      %p55 = scmp.eq.s32.totalorder %s10, 0
      %p56 = por %p54, %p55
      %p57 = scmp.ne.s32.totalorder %s46, %s49
      %p58 = scmp.eq.s32.totalorder %s15, 1
      %p59 = por %p57, %p58
      %p60 = scmp.ne.s32.totalorder %s49, %s50
      %p61 = scmp.eq.s32.totalorder %s15, 0
      %p62 = por %p60, %p61
      %p63 = scmp.ne.s32.totalorder %s49, %s50
      %p64 = scmp.eq.s32.totalorder %s16, 1
      %p65 = por %p63, %p64
      %p67 = scmp.ne.s32.totalorder %s50, %s66
      %p68 = scmp.eq.s32.totalorder %s16, 0
      %p69 = por %p67, %p68
      %s70 = ssub.s32 %s10, %s17
      %p71 = scmp.eq.s32.totalorder %s70, 0
      %s73 = sadd.s32 %s72, 1
      %s74 = scalar_select %p71, %s72, %s73
      %p77 = pneg %p71
      %p78 = scmp.eq.s32.totalorder %s10, 1
      %p79 = por %p77, %p78
      %p80 = scmp.ne.s32.totalorder %s72, %s75
      %p81 = scmp.eq.s32.totalorder %s10, 0
      %p82 = por %p80, %p81
      %p83 = scmp.ne.s32.totalorder %s72, %s75
      %p84 = scmp.eq.s32.totalorder %s15, 1
      %p85 = por %p83, %p84
      %p86 = scmp.ne.s32.totalorder %s75, %s76
      %p87 = scmp.eq.s32.totalorder %s15, 0
      %p88 = por %p86, %p87
      %p89 = scmp.ne.s32.totalorder %s75, %s76
      %p90 = scmp.eq.s32.totalorder %s16, 1
      %p91 = por %p89, %p90
      %p93 = scmp.ne.s32.totalorder %s76, %s92
      %p94 = scmp.eq.s32.totalorder %s16, 0
      %p95 = por %p93, %p94
      %s96 = ssub.s32 %s10, %s17
      %p97 = scmp.eq.s32.totalorder %s96, 0
      %s99 = sadd.s32 %s98, 1
      %s100 = scalar_select %p97, %s98, %s99
      %p103 = pneg %p97
      %p104 = scmp.eq.s32.totalorder %s10, 1
      %p105 = por %p103, %p104
      %p106 = scmp.ne.s32.totalorder %s98, %s101
      %p107 = scmp.eq.s32.totalorder %s10, 0
      %p108 = por %p106, %p107
      %p109 = scmp.ne.s32.totalorder %s98, %s101
      %p110 = scmp.eq.s32.totalorder %s15, 1
      %p111 = por %p109, %p110
      %p112 = scmp.ne.s32.totalorder %s101, %s102
      %p113 = scmp.eq.s32.totalorder %s15, 0
      %p114 = por %p112, %p113
      %p115 = scmp.ne.s32.totalorder %s101, %s102
      %p116 = scmp.eq.s32.totalorder %s16, 1
      %p117 = por %p115, %p116
      %p119 = scmp.ne.s32.totalorder %s102, %s118
      %p120 = scmp.eq.s32.totalorder %s16, 0
      %p121 = por %p119, %p120
      %p122 = scmp.le.s32.totalorder 1, %s10
      %p123 = scmp.lt.s32.totalorder %s10, 3
      %p124 = pnand %p122, %p123
      %p125 = pneg %p124
      // Predicated region
      $region9: #{_lambda_.5} parent=5 // pred_check
        _
      $region10: #{_lambda_.5} parent=5 // pred_check_branch
        %127 = sbr.rel (%p124) target = $region12
      $region11: #{_lambda_.5} parent=5 // pred_region
        %s128 = ssub.s32 %s10, 1
      $region12: #{_lambda_.5} parent=5 // pred_fallthru
        _
      %p129 = scmp.lt.s32.totalorder %s10, 2
      // Predicated region
      $region13: #{_lambda_.5} parent=5 // pred_check
        %p130 = pneg %p129
      $region14: #{_lambda_.5} parent=5 // pred_check_branch
        %132 = sbr.rel (%p130) target = $region16
      $region15: #{_lambda_.5} parent=5 // pred_region
        // Predicated region
        $region17: #{_lambda_.5} parent=15 // pred_check
          %p133 = pneg %p30
        $region18: #{_lambda_.5} parent=15 // pred_check_branch
          %135 = sbr.rel (%p133) target = $region20
        $region19: #{_lambda_.5} parent=15 // pred_region
          %s136 = sand.u32 %s20, 1
          %s137 = sand.u32 %s20, 1
          %s138 = smul.addr %s137, 128
          %s139 = scalar_lea.vmem [#allocation2], %s138
          %s140 = smul.u32 2, %s10
          %s141 = smul.addr %s140, 2
          %s142 = smul.addr %s141, 8
          %s143 = scalar_lea.vmem %s0, %s142
          // Predicated region
          $region21: #{_lambda_.5} parent=19 // pred_check
            _
          $region22: #{_lambda_.5} parent=19 // pred_check_branch
            %145 = sbr.rel (0) target = $region24
          $region23: #{_lambda_.5} parent=19 // pred_region
            // Predicated region
            $region25: #{_lambda_.5} parent=23 // pred_check
              _
            $region26: #{_lambda_.5} parent=23 // pred_check_branch
              %147 = sbr.rel (0) target = $region28
            $region27: #{_lambda_.5} parent=23 // pred_region
              loop: start=0, step=1, limit=1
              $region29: #{_lambda_.5} parent=27 // loop_pre_header
                _
              $region30: #{_lambda_.5} parent=27 // loop_header
                %s149 = sphi 0, %s153
                %p150 = scmp.ge.s32.totalorder %s149, 1
                %s154 = sphi %s143, %s143
                %s155 = sphi %s139, %s139
              $region31: #{_lambda_.5} parent=27 // loop_header_branch
                %152 = sbr.rel (%p150) target = $region35
              $region32: #{_lambda_.5} parent=27 // loop_body
                %v156 = vld [vmem:[%s154] sm:$0xff]
                %157 = vst [vmem:[%s155] sm:$0xff] %v156
                %v158 = vld [vmem:[%s154 + $0x8] sm:$0xff]
                %159 = vst [vmem:[%s155 + $0x8] sm:$0xff] %v158
                %v160 = vld [vmem:[%s154 + $0x10] sm:$0xff]
                %161 = vst [vmem:[%s155 + $0x10] sm:$0xff] %v160
                %v162 = vld [vmem:[%s154 + $0x18] sm:$0xff]
                %163 = vst [vmem:[%s155 + $0x18] sm:$0xff] %v162
                %v164 = vld [vmem:[%s154 + $0x40] sm:$0xff]
                %165 = vst [vmem:[%s155 + $0x20] sm:$0xff] %v164
                %v166 = vld [vmem:[%s154 + $0x48] sm:$0xff]
                %167 = vst [vmem:[%s155 + $0x28] sm:$0xff] %v166
                %v168 = vld [vmem:[%s154 + $0x50] sm:$0xff]
                %169 = vst [vmem:[%s155 + $0x30] sm:$0xff] %v168
                %v170 = vld [vmem:[%s154 + $0x58] sm:$0xff]
                %171 = vst [vmem:[%s155 + $0x38] sm:$0xff] %v170
                %v172 = vld [vmem:[%s154 + $0x80] sm:$0xff]
                %173 = vst [vmem:[%s155 + $0x40] sm:$0xff] %v172
                %v174 = vld [vmem:[%s154 + $0x88] sm:$0xff]
                %175 = vst [vmem:[%s155 + $0x48] sm:$0xff] %v174
                %v176 = vld [vmem:[%s154 + $0x90] sm:$0xff]
                %177 = vst [vmem:[%s155 + $0x50] sm:$0xff] %v176
                %v178 = vld [vmem:[%s154 + $0x98] sm:$0xff]
                %179 = vst [vmem:[%s155 + $0x58] sm:$0xff] %v178
                %v180 = vld [vmem:[%s154 + $0xc0] sm:$0xff]
                %181 = vst [vmem:[%s155 + $0x60] sm:$0xff] %v180
                %v182 = vld [vmem:[%s154 + $0xc8] sm:$0xff]
                %183 = vst [vmem:[%s155 + $0x68] sm:$0xff] %v182
                %v184 = vld [vmem:[%s154 + $0xd0] sm:$0xff]
                %185 = vst [vmem:[%s155 + $0x70] sm:$0xff] %v184
                %v186 = vld [vmem:[%s154 + $0xd8] sm:$0xff]
                %187 = vst [vmem:[%s155 + $0x78] sm:$0xff] %v186
              $region33: #{_lambda_.5} parent=27 // loop_footer
                %s153 = sadd.s32 1, %s149
              $region34: #{_lambda_.5} parent=27 // loop_footer_branch
                %148 = sbr.rel target = $region30
              $region35: #{_lambda_.5} parent=27 // loop_exit
                _
            $region28: #{_lambda_.5} parent=23 // pred_fallthru
              _
            // Predicated region
            $region36: #{_lambda_.5} parent=23 // pred_check
              _
            $region37: #{_lambda_.5} parent=23 // pred_check_branch
              %189 = sbr.rel target = $region39
            $region38: #{_lambda_.5} parent=23 // pred_region
              _
            $region39: #{_lambda_.5} parent=23 // pred_fallthru
              _
          $region24: #{_lambda_.5} parent=19 // pred_fallthru
            _
          %190 = vnop
        $region20: #{_lambda_.5} parent=15 // pred_fallthru
          _
        // Predicated region
        $region40: #{_lambda_.5} parent=15 // pred_check
          %p191 = pneg %p56
        $region41: #{_lambda_.5} parent=15 // pred_check_branch
          %193 = sbr.rel (%p191) target = $region43
        $region42: #{_lambda_.5} parent=15 // pred_region
          %s194 = sand.u32 %s46, 1
          %s195 = sand.u32 %s46, 1
          %s196 = smul.addr %s195, 128
          %s197 = scalar_lea.vmem [#allocation3], %s196
          %s198 = smul.u32 2, %s10
          %s199 = smul.addr %s198, 2
          %s200 = smul.addr %s199, 8
          %s201 = scalar_lea.vmem %s1, %s200
          // Predicated region
          $region44: #{_lambda_.5} parent=42 // pred_check
            _
          $region45: #{_lambda_.5} parent=42 // pred_check_branch
            %203 = sbr.rel (0) target = $region47
          $region46: #{_lambda_.5} parent=42 // pred_region
            // Predicated region
            $region48: #{_lambda_.5} parent=46 // pred_check
              _
            $region49: #{_lambda_.5} parent=46 // pred_check_branch
              %205 = sbr.rel (0) target = $region51
            $region50: #{_lambda_.5} parent=46 // pred_region
              loop: start=0, step=1, limit=1
              $region52: #{_lambda_.5} parent=50 // loop_pre_header
                _
              $region53: #{_lambda_.5} parent=50 // loop_header
                %s207 = sphi 0, %s211
                %p208 = scmp.ge.s32.totalorder %s207, 1
                %s212 = sphi %s201, %s201
                %s213 = sphi %s197, %s197
              $region54: #{_lambda_.5} parent=50 // loop_header_branch
                %210 = sbr.rel (%p208) target = $region58
              $region55: #{_lambda_.5} parent=50 // loop_body
                %v214 = vld [vmem:[%s212] sm:$0xff]
                %215 = vst [vmem:[%s213] sm:$0xff] %v214
                %v216 = vld [vmem:[%s212 + $0x8] sm:$0xff]
                %217 = vst [vmem:[%s213 + $0x8] sm:$0xff] %v216
                %v218 = vld [vmem:[%s212 + $0x10] sm:$0xff]
                %219 = vst [vmem:[%s213 + $0x10] sm:$0xff] %v218
                %v220 = vld [vmem:[%s212 + $0x18] sm:$0xff]
                %221 = vst [vmem:[%s213 + $0x18] sm:$0xff] %v220
                %v222 = vld [vmem:[%s212 + $0x40] sm:$0xff]
                %223 = vst [vmem:[%s213 + $0x20] sm:$0xff] %v222
                %v224 = vld [vmem:[%s212 + $0x48] sm:$0xff]
                %225 = vst [vmem:[%s213 + $0x28] sm:$0xff] %v224
                %v226 = vld [vmem:[%s212 + $0x50] sm:$0xff]
                %227 = vst [vmem:[%s213 + $0x30] sm:$0xff] %v226
                %v228 = vld [vmem:[%s212 + $0x58] sm:$0xff]
                %229 = vst [vmem:[%s213 + $0x38] sm:$0xff] %v228
                %v230 = vld [vmem:[%s212 + $0x80] sm:$0xff]
                %231 = vst [vmem:[%s213 + $0x40] sm:$0xff] %v230
                %v232 = vld [vmem:[%s212 + $0x88] sm:$0xff]
                %233 = vst [vmem:[%s213 + $0x48] sm:$0xff] %v232
                %v234 = vld [vmem:[%s212 + $0x90] sm:$0xff]
                %235 = vst [vmem:[%s213 + $0x50] sm:$0xff] %v234
                %v236 = vld [vmem:[%s212 + $0x98] sm:$0xff]
                %237 = vst [vmem:[%s213 + $0x58] sm:$0xff] %v236
                %v238 = vld [vmem:[%s212 + $0xc0] sm:$0xff]
                %239 = vst [vmem:[%s213 + $0x60] sm:$0xff] %v238
                %v240 = vld [vmem:[%s212 + $0xc8] sm:$0xff]
                %241 = vst [vmem:[%s213 + $0x68] sm:$0xff] %v240
                %v242 = vld [vmem:[%s212 + $0xd0] sm:$0xff]
                %243 = vst [vmem:[%s213 + $0x70] sm:$0xff] %v242
                %v244 = vld [vmem:[%s212 + $0xd8] sm:$0xff]
                %245 = vst [vmem:[%s213 + $0x78] sm:$0xff] %v244
              $region56: #{_lambda_.5} parent=50 // loop_footer
                %s211 = sadd.s32 1, %s207
              $region57: #{_lambda_.5} parent=50 // loop_footer_branch
                %206 = sbr.rel target = $region53
              $region58: #{_lambda_.5} parent=50 // loop_exit
                _
            $region51: #{_lambda_.5} parent=46 // pred_fallthru
              _
            // Predicated region
            $region59: #{_lambda_.5} parent=46 // pred_check
              _
            $region60: #{_lambda_.5} parent=46 // pred_check_branch
              %247 = sbr.rel target = $region62
            $region61: #{_lambda_.5} parent=46 // pred_region
              _
            $region62: #{_lambda_.5} parent=46 // pred_fallthru
              _
          $region47: #{_lambda_.5} parent=42 // pred_fallthru
            _
          %248 = vnop
        $region43: #{_lambda_.5} parent=15 // pred_fallthru
          _
      $region16: #{_lambda_.5} parent=5 // pred_fallthru
        _
      %p249 = scmp.le.s32.totalorder 1, %s10
      %p250 = scmp.lt.s32.totalorder %s10, 3
      %p251 = pnand %p249, %p250
      %p252 = pneg %p251
      // Predicated region
      $region63: #{_lambda_.5} parent=5 // pred_check
        _
      $region64: #{_lambda_.5} parent=5 // pred_check_branch
        %254 = sbr.rel (%p251) target = $region66
      $region65: #{_lambda_.5} parent=5 // pred_region
        %s255 = ssub.s32 %s10, 1
        %s256 = sand.u32 %s23, 1
        %s257 = sand.u32 %s23, 1
        %s258 = smul.addr %s257, 128
        %s259 = scalar_lea.vmem [#allocation2], %s258
        // Predicated region
        $region67: #{_lambda_.5} parent=65 // pred_check
          %p260 = pneg %p36
        $region68: #{_lambda_.5} parent=65 // pred_check_branch
          %262 = sbr.rel (%p260) target = $region70
        $region69: #{_lambda_.5} parent=65 // pred_region
          _
        $region70: #{_lambda_.5} parent=65 // pred_fallthru
          _
        %s263 = sand.u32 %s49, 1
        %s264 = sand.u32 %s49, 1
        %s265 = smul.addr %s264, 128
        %s266 = scalar_lea.vmem [#allocation3], %s265
        // Predicated region
        $region71: #{_lambda_.5} parent=65 // pred_check
          %p267 = pneg %p62
        $region72: #{_lambda_.5} parent=65 // pred_check_branch
          %269 = sbr.rel (%p267) target = $region74
        $region73: #{_lambda_.5} parent=65 // pred_region
          _
        $region74: #{_lambda_.5} parent=65 // pred_fallthru
          _
        %s270 = sand.u32 %s23, 1
        %s271 = sand.u32 %s23, 1
        %s272 = smul.addr %s271, 128
        %s273 = scalar_lea.vmem [#allocation2], %s272
        %p274 = pneg %p36
        %p275 = pneg %p33
        %s276 = sand.u32 %s49, 1
        %s277 = sand.u32 %s49, 1
        %s278 = smul.addr %s277, 128
        %s279 = scalar_lea.vmem [#allocation3], %s278
        %p280 = pneg %p62
        %p281 = pneg %p59
        %p282 = pneg %p88
        %p283 = pneg %p85
        %s284 = smul.u32 2, %s15
        %p285 = scmp.lt.s32.totalorder %s284, 3
        %s286 = scalar_select %p285, %s284, 3
        %s287 = smul.addr %s286, 2
        %s288 = smul.addr %s287, 8
        %s289 = scalar_lea.vmem %s2, %s288
        %p290 = pneg %p114
        %p291 = pneg %p111
        %s292 = smul.u32 2, %s15
        %p293 = scmp.lt.s32.totalorder %s292, 3
        %s294 = scalar_select %p293, %s292, 3
        %s295 = smul.addr %s294, 2
        %s296 = smul.addr %s295, 8
        %s297 = scalar_lea.vmem %s3, %s296
        %s298 = smul.u32 2, %s15
        %s299 = smul.u32 2, %s15
        %s300 = smul.u32 2, %s15
        %p301 = scmp.lt.s32.totalorder %s300, 3
        %s302 = scalar_select %p301, %s300, 3
        %s303 = smul.addr %s302, 2
        %s304 = smul.addr %s303, 8
        %s305 = scalar_lea.vmem %s2, %s304
        %s306 = smul.u32 2, %s15
        %s307 = smul.u32 2, %s15
        %p308 = scmp.lt.s32.totalorder %s307, 3
        %s309 = scalar_select %p308, %s307, 3
        %s310 = smul.addr %s309, 2
        %s311 = smul.addr %s310, 8
        %s312 = scalar_lea.vmem %s3, %s311
        %s313 = smul.u32 2, %s15
        %v314 = vld [vmem:[%s259] sm:$0xff]
        %v315 = vld [vmem:[%s259 + $0x8] sm:$0xff]
        %v316 = vld [vmem:[%s259 + $0x10] sm:$0xff]
        %v317 = vld [vmem:[%s259 + $0x18] sm:$0xff]
        %s318 = scalar_lea.vmem %s259, 32 [#allocation2]
        %v319 = vld [vmem:[%s318] sm:$0xff]
        %v320 = vld [vmem:[%s318 + $0x8] sm:$0xff]
        %v321 = vld [vmem:[%s318 + $0x10] sm:$0xff]
        %v322 = vld [vmem:[%s318 + $0x18] sm:$0xff]
        %s323 = scalar_lea.vmem %s259, 64 [#allocation2]
        %v324 = vld [vmem:[%s323] sm:$0xff]
        %v325 = vld [vmem:[%s323 + $0x8] sm:$0xff]
        %v326 = vld [vmem:[%s323 + $0x10] sm:$0xff]
        %v327 = vld [vmem:[%s323 + $0x18] sm:$0xff]
        %s328 = scalar_lea.vmem %s259, 96 [#allocation2]
        %v329 = vld [vmem:[%s328] sm:$0xff]
        %v330 = vld [vmem:[%s328 + $0x8] sm:$0xff]
        %v331 = vld [vmem:[%s328 + $0x10] sm:$0xff]
        %v332 = vld [vmem:[%s328 + $0x18] sm:$0xff]
        %337 = vrot.lane.b32.xlu0 %v314, 127
        %v338 = vpop.permute.xlu0 %337
        %339 = vrot.lane.b32.xlu0 %v315, 127
        %v340 = vpop.permute.xlu0 %339
        %341 = vrot.lane.b32.xlu0 %v316, 127
        %v342 = vpop.permute.xlu0 %341
        %343 = vrot.lane.b32.xlu0 %v317, 127
        %v344 = vpop.permute.xlu0 %343
        %vm345 = vcmask 1039360
        %v346 = vsel %vm345, %v338, %v340
        %v347 = vsel %vm345, %v342, %v344
        %352 = vrot.lane.b32.xlu0 %v314, 40
        %v353 = vpop.permute.xlu0 %352
        %354 = vrot.lane.b32.xlu0 %v316, 40
        %v355 = vpop.permute.xlu0 %354
        %vm358 = vcmask 326656
        %v359 = vsel %vm358, %v340, %v353
        %v360 = vsel %vm358, %v344, %v355
        %365 = vrot.lane.b32.xlu0 %v324, 127
        %v366 = vpop.permute.xlu0 %365
        %367 = vrot.lane.b32.xlu0 %v325, 127
        %v368 = vpop.permute.xlu0 %367
        %369 = vrot.lane.b32.xlu0 %v326, 127
        %v370 = vpop.permute.xlu0 %369
        %371 = vrot.lane.b32.xlu0 %v327, 127
        %v372 = vpop.permute.xlu0 %371
        %v373 = vsel %vm345, %v366, %v368
        %v374 = vsel %vm345, %v370, %v372
        %379 = vrot.lane.b32.xlu0 %v324, 40
        %v380 = vpop.permute.xlu0 %379
        %381 = vrot.lane.b32.xlu0 %v326, 40
        %v382 = vpop.permute.xlu0 %381
        %v385 = vsel %vm358, %v368, %v380
        %v386 = vsel %vm358, %v372, %v382
        %387 = vrot.lane.b32.xlu0 %v314, 115
        %v388 = vpop.permute.xlu0 %387
        %389 = vrot.lane.b32.xlu0 %v315, 115
        %v390 = vpop.permute.xlu0 %389
        %391 = vrot.lane.b32.xlu0 %v316, 115
        %v392 = vpop.permute.xlu0 %391
        %393 = vrot.lane.b32.xlu0 %v317, 115
        %v394 = vpop.permute.xlu0 %393
        %vm395 = vcmask 941056
        %v396 = vsel %vm395, %v388, %v390
        %v397 = vsel %vm395, %v392, %v394
        %402 = vrot.lane.b32.xlu0 %v314, 28
        %v403 = vpop.permute.xlu0 %402
        %404 = vrot.lane.b32.xlu0 %v316, 28
        %v405 = vpop.permute.xlu0 %404
        %vm408 = vcmask 228352
        %v409 = vsel %vm408, %v390, %v403
        %v410 = vsel %vm408, %v394, %v405
        %415 = vrot.lane.b32.xlu0 %v319, 115
        %v416 = vpop.permute.xlu0 %415
        %417 = vrot.lane.b32.xlu0 %v320, 115
        %v418 = vpop.permute.xlu0 %417
        %419 = vrot.lane.b32.xlu0 %v321, 115
        %v420 = vpop.permute.xlu0 %419
        %421 = vrot.lane.b32.xlu0 %v322, 115
        %v422 = vpop.permute.xlu0 %421
        %v423 = vsel %vm395, %v416, %v418
        %v424 = vsel %vm395, %v420, %v422
        %429 = vrot.lane.b32.xlu0 %v319, 28
        %v430 = vpop.permute.xlu0 %429
        %431 = vrot.lane.b32.xlu0 %v321, 28
        %v432 = vpop.permute.xlu0 %431
        %v435 = vsel %vm408, %v418, %v430
        %v436 = vsel %vm408, %v422, %v432
        %437 = vrot.lane.b32.xlu0 %v314, 114
        %v438 = vpop.permute.xlu0 %437
        %439 = vrot.lane.b32.xlu0 %v315, 114
        %v440 = vpop.permute.xlu0 %439
        %441 = vrot.lane.b32.xlu0 %v316, 114
        %v442 = vpop.permute.xlu0 %441
        %443 = vrot.lane.b32.xlu0 %v317, 114
        %v444 = vpop.permute.xlu0 %443
        %vm445 = vcmask 932864
        %v446 = vsel %vm445, %v438, %v440
        %v447 = vsel %vm445, %v442, %v444
        %452 = vrot.lane.b32.xlu0 %v314, 27
        %v453 = vpop.permute.xlu0 %452
        %454 = vrot.lane.b32.xlu0 %v316, 27
        %v455 = vpop.permute.xlu0 %454
        %vm458 = vcmask 220160
        %v459 = vsel %vm458, %v440, %v453
        %v460 = vsel %vm458, %v444, %v455
        %v461 = vmax.f32 %v314, %v319
        %v462 = vmax.f32 %v315, %v320
        %v463 = vmax.f32 %v316, %v321
        %v464 = vmax.f32 %v317, %v322
        %v465 = vmax.f32 %v346, %v324
        %v466 = vmax.f32 %v359, %v325
        %v467 = vmax.f32 %v347, %v326
        %v468 = vmax.f32 %v360, %v327
        %v469 = vmax.f32 %v329, %v373
        %v470 = vmax.f32 %v330, %v385
        %v471 = vmax.f32 %v331, %v374
        %v472 = vmax.f32 %v332, %v386
        %v473 = vmax.f32 %v396, %v423
        %v474 = vmax.f32 %v409, %v435
        %v475 = vmax.f32 %v397, %v424
        %v476 = vmax.f32 %v410, %v436
        %v477 = vmax.f32 %v461, %v465
        %v478 = vmax.f32 %v462, %v466
        %v479 = vmax.f32 %v463, %v467
        %v480 = vmax.f32 %v464, %v468
        %v481 = vmax.f32 %v469, %v473
        %v482 = vmax.f32 %v470, %v474
        %v483 = vmax.f32 %v471, %v475
        %v484 = vmax.f32 %v472, %v476
        %v485 = vmax.f32 %v477, %v481
        %v486 = vmax.f32 %v478, %v482
        %v487 = vmax.f32 %v479, %v483
        %v488 = vmax.f32 %v480, %v484
        %v489 = vmax.f32 %v485, %v446
        %v490 = vmax.f32 %v486, %v459
        %v491 = vmax.f32 %v487, %v447
        %v492 = vmax.f32 %v488, %v460
        %vm493 = vcmp.gt.f32.partialorder %v489, 0.0
        %vm494 = vcmp.gt.f32.partialorder %v490, 0.0
        %vm495 = vcmp.gt.f32.partialorder %v491, 0.0
        %vm496 = vcmp.gt.f32.partialorder %v492, 0.0
        %v497 = vmul.f32 %v489, 0.01
        %v498 = vmul.f32 %v490, 0.01
        %v499 = vmul.f32 %v491, 0.01
        %v500 = vmul.f32 %v492, 0.01
        %v501 = vsel %vm493, %v489, %v497
        %v502 = vsel %vm494, %v490, %v498
        %v503 = vsel %vm495, %v491, %v499
        %v504 = vsel %vm496, %v492, %v500
        %505 = vst [vmem:[%s305] sm:$0xff] %v501
        %vm506 = vcmask 334848
        %507 = vst.msk [vmem:[%s305 + $0x8] sm:$0xff] %vm506, %v502
        %508 = vst [vmem:[%s305 + $0x10] sm:$0xff] %v503
        %509 = vst.msk [vmem:[%s305 + $0x18] sm:$0xff] %vm506, %v504
        %v510 = vld [vmem:[%s266] sm:$0xff]
        %v511 = vld [vmem:[%s266 + $0x8] sm:$0xff]
        %v512 = vld [vmem:[%s266 + $0x10] sm:$0xff]
        %v513 = vld [vmem:[%s266 + $0x18] sm:$0xff]
        %s514 = scalar_lea.vmem %s266, 32 [#allocation3]
        %v515 = vld [vmem:[%s514] sm:$0xff]
        %v516 = vld [vmem:[%s514 + $0x8] sm:$0xff]
        %v517 = vld [vmem:[%s514 + $0x10] sm:$0xff]
        %v518 = vld [vmem:[%s514 + $0x18] sm:$0xff]
        %s519 = scalar_lea.vmem %s266, 64 [#allocation3]
        %v520 = vld [vmem:[%s519] sm:$0xff]
        %v521 = vld [vmem:[%s519 + $0x8] sm:$0xff]
        %v522 = vld [vmem:[%s519 + $0x10] sm:$0xff]
        %v523 = vld [vmem:[%s519 + $0x18] sm:$0xff]
        %s524 = scalar_lea.vmem %s266, 96 [#allocation3]
        %v525 = vld [vmem:[%s524] sm:$0xff]
        %v526 = vld [vmem:[%s524 + $0x8] sm:$0xff]
        %v527 = vld [vmem:[%s524 + $0x10] sm:$0xff]
        %v528 = vld [vmem:[%s524 + $0x18] sm:$0xff]
        %533 = vrot.lane.b32.xlu0 %v510, 127
        %v534 = vpop.permute.xlu0 %533
        %535 = vrot.lane.b32.xlu0 %v511, 127
        %v536 = vpop.permute.xlu0 %535
        %537 = vrot.lane.b32.xlu0 %v512, 127
        %v538 = vpop.permute.xlu0 %537
        %539 = vrot.lane.b32.xlu0 %v513, 127
        %v540 = vpop.permute.xlu0 %539
        %v541 = vsel %vm345, %v534, %v536
        %v542 = vsel %vm345, %v538, %v540
        %547 = vrot.lane.b32.xlu0 %v510, 67
        %v548 = vpop.permute.xlu0 %547
        %549 = vrot.lane.b32.xlu0 %v512, 67
        %v550 = vpop.permute.xlu0 %549
        %vm553 = vcmask 547840
        %v554 = vsel %vm553, %v536, %v548
        %v555 = vsel %vm553, %v540, %v550
        %560 = vrot.lane.b32.xlu0 %v515, 127
        %v561 = vpop.permute.xlu0 %560
        %562 = vrot.lane.b32.xlu0 %v516, 127
        %v563 = vpop.permute.xlu0 %562
        %564 = vrot.lane.b32.xlu0 %v517, 127
        %v565 = vpop.permute.xlu0 %564
        %566 = vrot.lane.b32.xlu0 %v518, 127
        %v567 = vpop.permute.xlu0 %566
        %v568 = vsel %vm345, %v561, %v563
        %v569 = vsel %vm345, %v565, %v567
        %574 = vrot.lane.b32.xlu0 %v515, 67
        %v575 = vpop.permute.xlu0 %574
        %576 = vrot.lane.b32.xlu0 %v517, 67
        %v577 = vpop.permute.xlu0 %576
        %v580 = vsel %vm553, %v563, %v575
        %v581 = vsel %vm553, %v567, %v577
        %582 = vrot.lane.b32.xlu0 %v510, 126
        %v583 = vpop.permute.xlu0 %582
        %584 = vrot.lane.b32.xlu0 %v511, 126
        %v585 = vpop.permute.xlu0 %584
        %586 = vrot.lane.b32.xlu0 %v512, 126
        %v587 = vpop.permute.xlu0 %586
        %588 = vrot.lane.b32.xlu0 %v513, 126
        %v589 = vpop.permute.xlu0 %588
        %vm590 = vcmask 1031168
        %v591 = vsel %vm590, %v583, %v585
        %v592 = vsel %vm590, %v587, %v589
        %597 = vrot.lane.b32.xlu0 %v510, 66
        %v598 = vpop.permute.xlu0 %597
        %599 = vrot.lane.b32.xlu0 %v512, 66
        %v600 = vpop.permute.xlu0 %599
        %vm603 = vcmask 539648
        %v604 = vsel %vm603, %v585, %v598
        %v605 = vsel %vm603, %v589, %v600
        %610 = vrot.lane.b32.xlu0 %v520, 127
        %v611 = vpop.permute.xlu0 %610
        %612 = vrot.lane.b32.xlu0 %v521, 127
        %v613 = vpop.permute.xlu0 %612
        %614 = vrot.lane.b32.xlu0 %v522, 127
        %v615 = vpop.permute.xlu0 %614
        %616 = vrot.lane.b32.xlu0 %v523, 127
        %v617 = vpop.permute.xlu0 %616
        %v618 = vsel %vm345, %v611, %v613
        %v619 = vsel %vm345, %v615, %v617
        %624 = vrot.lane.b32.xlu0 %v520, 67
        %v625 = vpop.permute.xlu0 %624
        %626 = vrot.lane.b32.xlu0 %v522, 67
        %v627 = vpop.permute.xlu0 %626
        %v630 = vsel %vm553, %v613, %v625
        %v631 = vsel %vm553, %v617, %v627
        %636 = vrot.lane.b32.xlu0 %v525, 127
        %v637 = vpop.permute.xlu0 %636
        %638 = vrot.lane.b32.xlu0 %v526, 127
        %v639 = vpop.permute.xlu0 %638
        %640 = vrot.lane.b32.xlu0 %v527, 127
        %v641 = vpop.permute.xlu0 %640
        %642 = vrot.lane.b32.xlu0 %v528, 127
        %v643 = vpop.permute.xlu0 %642
        %v644 = vsel %vm345, %v637, %v639
        %v645 = vsel %vm345, %v641, %v643
        %650 = vrot.lane.b32.xlu0 %v525, 67
        %v651 = vpop.permute.xlu0 %650
        %652 = vrot.lane.b32.xlu0 %v527, 67
        %v653 = vpop.permute.xlu0 %652
        %v656 = vsel %vm553, %v639, %v651
        %v657 = vsel %vm553, %v643, %v653
        %658 = vrot.lane.b32.xlu0 %v520, 126
        %v659 = vpop.permute.xlu0 %658
        %660 = vrot.lane.b32.xlu0 %v521, 126
        %v661 = vpop.permute.xlu0 %660
        %662 = vrot.lane.b32.xlu0 %v522, 126
        %v663 = vpop.permute.xlu0 %662
        %664 = vrot.lane.b32.xlu0 %v523, 126
        %v665 = vpop.permute.xlu0 %664
        %v666 = vsel %vm590, %v659, %v661
        %v667 = vsel %vm590, %v663, %v665
        %672 = vrot.lane.b32.xlu0 %v520, 66
        %v673 = vpop.permute.xlu0 %672
        %674 = vrot.lane.b32.xlu0 %v522, 66
        %v675 = vpop.permute.xlu0 %674
        %v678 = vsel %vm603, %v661, %v673
        %v679 = vsel %vm603, %v665, %v675
        %680 = vrot.lane.b32.xlu0 %v510, 114
        %v681 = vpop.permute.xlu0 %680
        %682 = vrot.lane.b32.xlu0 %v511, 114
        %v683 = vpop.permute.xlu0 %682
        %684 = vrot.lane.b32.xlu0 %v512, 114
        %v685 = vpop.permute.xlu0 %684
        %686 = vrot.lane.b32.xlu0 %v513, 114
        %v687 = vpop.permute.xlu0 %686
        %v688 = vsel %vm445, %v681, %v683
        %v689 = vsel %vm445, %v685, %v687
        %694 = vrot.lane.b32.xlu0 %v510, 54
        %v695 = vpop.permute.xlu0 %694
        %696 = vrot.lane.b32.xlu0 %v512, 54
        %v697 = vpop.permute.xlu0 %696
        %vm700 = vcmask 441344
        %v701 = vsel %vm700, %v683, %v695
        %v702 = vsel %vm700, %v687, %v697
        %703 = vrot.lane.b32.xlu0 %v515, 114
        %v704 = vpop.permute.xlu0 %703
        %705 = vrot.lane.b32.xlu0 %v516, 114
        %v706 = vpop.permute.xlu0 %705
        %707 = vrot.lane.b32.xlu0 %v517, 114
        %v708 = vpop.permute.xlu0 %707
        %709 = vrot.lane.b32.xlu0 %v518, 114
        %v710 = vpop.permute.xlu0 %709
        %v711 = vsel %vm445, %v704, %v706
        %v712 = vsel %vm445, %v708, %v710
        %717 = vrot.lane.b32.xlu0 %v515, 54
        %v718 = vpop.permute.xlu0 %717
        %719 = vrot.lane.b32.xlu0 %v517, 54
        %v720 = vpop.permute.xlu0 %719
        %v723 = vsel %vm700, %v706, %v718
        %v724 = vsel %vm700, %v710, %v720
        %725 = vrot.lane.b32.xlu0 %v510, 113
        %v726 = vpop.permute.xlu0 %725
        %727 = vrot.lane.b32.xlu0 %v511, 113
        %v728 = vpop.permute.xlu0 %727
        %729 = vrot.lane.b32.xlu0 %v512, 113
        %v730 = vpop.permute.xlu0 %729
        %731 = vrot.lane.b32.xlu0 %v513, 113
        %v732 = vpop.permute.xlu0 %731
        %vm733 = vcmask 924672
        %v734 = vsel %vm733, %v726, %v728
        %v735 = vsel %vm733, %v730, %v732
        %740 = vrot.lane.b32.xlu0 %v510, 53
        %v741 = vpop.permute.xlu0 %740
        %742 = vrot.lane.b32.xlu0 %v512, 53
        %v743 = vpop.permute.xlu0 %742
        %vm746 = vcmask 433152
        %v747 = vsel %vm746, %v728, %v741
        %v748 = vsel %vm746, %v732, %v743
        %749 = vrot.lane.b32.xlu0 %v515, 113
        %v750 = vpop.permute.xlu0 %749
        %751 = vrot.lane.b32.xlu0 %v516, 113
        %v752 = vpop.permute.xlu0 %751
        %753 = vrot.lane.b32.xlu0 %v517, 113
        %v754 = vpop.permute.xlu0 %753
        %755 = vrot.lane.b32.xlu0 %v518, 113
        %v756 = vpop.permute.xlu0 %755
        %v757 = vsel %vm733, %v750, %v752
        %v758 = vsel %vm733, %v754, %v756
        %763 = vrot.lane.b32.xlu0 %v515, 53
        %v764 = vpop.permute.xlu0 %763
        %765 = vrot.lane.b32.xlu0 %v517, 53
        %v766 = vpop.permute.xlu0 %765
        %v769 = vsel %vm746, %v752, %v764
        %v770 = vsel %vm746, %v756, %v766
        %771 = vrot.lane.b32.xlu0 %v510, 112
        %v772 = vpop.permute.xlu0 %771
        %773 = vrot.lane.b32.xlu0 %v511, 112
        %v774 = vpop.permute.xlu0 %773
        %775 = vrot.lane.b32.xlu0 %v512, 112
        %v776 = vpop.permute.xlu0 %775
        %777 = vrot.lane.b32.xlu0 %v513, 112
        %v778 = vpop.permute.xlu0 %777
        %vm779 = vcmask 916480
        %v780 = vsel %vm779, %v772, %v774
        %v781 = vsel %vm779, %v776, %v778
        %786 = vrot.lane.b32.xlu0 %v510, 52
        %v787 = vpop.permute.xlu0 %786
        %788 = vrot.lane.b32.xlu0 %v512, 52
        %v789 = vpop.permute.xlu0 %788
        %vm792 = vcmask 424960
        %v793 = vsel %vm792, %v774, %v787
        %v794 = vsel %vm792, %v778, %v789
        %795 = vrot.lane.b32.xlu0 %v520, 114
        %v796 = vpop.permute.xlu0 %795
        %797 = vrot.lane.b32.xlu0 %v521, 114
        %v798 = vpop.permute.xlu0 %797
        %799 = vrot.lane.b32.xlu0 %v522, 114
        %v800 = vpop.permute.xlu0 %799
        %801 = vrot.lane.b32.xlu0 %v523, 114
        %v802 = vpop.permute.xlu0 %801
        %v803 = vsel %vm445, %v796, %v798
        %v804 = vsel %vm445, %v800, %v802
        %809 = vrot.lane.b32.xlu0 %v520, 54
        %v810 = vpop.permute.xlu0 %809
        %811 = vrot.lane.b32.xlu0 %v522, 54
        %v812 = vpop.permute.xlu0 %811
        %v815 = vsel %vm700, %v798, %v810
        %v816 = vsel %vm700, %v802, %v812
        %817 = vrot.lane.b32.xlu0 %v525, 114
        %v818 = vpop.permute.xlu0 %817
        %819 = vrot.lane.b32.xlu0 %v526, 114
        %v820 = vpop.permute.xlu0 %819
        %821 = vrot.lane.b32.xlu0 %v527, 114
        %v822 = vpop.permute.xlu0 %821
        %823 = vrot.lane.b32.xlu0 %v528, 114
        %v824 = vpop.permute.xlu0 %823
        %v825 = vsel %vm445, %v818, %v820
        %v826 = vsel %vm445, %v822, %v824
        %831 = vrot.lane.b32.xlu0 %v525, 54
        %v832 = vpop.permute.xlu0 %831
        %833 = vrot.lane.b32.xlu0 %v527, 54
        %v834 = vpop.permute.xlu0 %833
        %v837 = vsel %vm700, %v820, %v832
        %v838 = vsel %vm700, %v824, %v834
        %839 = vrot.lane.b32.xlu0 %v520, 113
        %v840 = vpop.permute.xlu0 %839
        %841 = vrot.lane.b32.xlu0 %v521, 113
        %v842 = vpop.permute.xlu0 %841
        %843 = vrot.lane.b32.xlu0 %v522, 113
        %v844 = vpop.permute.xlu0 %843
        %845 = vrot.lane.b32.xlu0 %v523, 113
        %v846 = vpop.permute.xlu0 %845
        %v847 = vsel %vm733, %v840, %v842
        %v848 = vsel %vm733, %v844, %v846
        %853 = vrot.lane.b32.xlu0 %v520, 53
        %v854 = vpop.permute.xlu0 %853
        %855 = vrot.lane.b32.xlu0 %v522, 53
        %v856 = vpop.permute.xlu0 %855
        %v859 = vsel %vm746, %v842, %v854
        %v860 = vsel %vm746, %v846, %v856
        %861 = vrot.lane.b32.xlu0 %v525, 113
        %v862 = vpop.permute.xlu0 %861
        %863 = vrot.lane.b32.xlu0 %v526, 113
        %v864 = vpop.permute.xlu0 %863
        %865 = vrot.lane.b32.xlu0 %v527, 113
        %v866 = vpop.permute.xlu0 %865
        %867 = vrot.lane.b32.xlu0 %v528, 113
        %v868 = vpop.permute.xlu0 %867
        %v869 = vsel %vm733, %v862, %v864
        %v870 = vsel %vm733, %v866, %v868
        %875 = vrot.lane.b32.xlu0 %v525, 53
        %v876 = vpop.permute.xlu0 %875
        %877 = vrot.lane.b32.xlu0 %v527, 53
        %v878 = vpop.permute.xlu0 %877
        %v881 = vsel %vm746, %v864, %v876
        %v882 = vsel %vm746, %v868, %v878
        %883 = vrot.lane.b32.xlu0 %v520, 112
        %v884 = vpop.permute.xlu0 %883
        %885 = vrot.lane.b32.xlu0 %v521, 112
        %v886 = vpop.permute.xlu0 %885
        %887 = vrot.lane.b32.xlu0 %v522, 112
        %v888 = vpop.permute.xlu0 %887
        %889 = vrot.lane.b32.xlu0 %v523, 112
        %v890 = vpop.permute.xlu0 %889
        %v891 = vsel %vm779, %v884, %v886
        %v892 = vsel %vm779, %v888, %v890
        %897 = vrot.lane.b32.xlu0 %v520, 52
        %v898 = vpop.permute.xlu0 %897
        %899 = vrot.lane.b32.xlu0 %v522, 52
        %v900 = vpop.permute.xlu0 %899
        %v903 = vsel %vm792, %v886, %v898
        %v904 = vsel %vm792, %v890, %v900
        %905 = vrot.lane.b32.xlu0 %v510, 100
        %v906 = vpop.permute.xlu0 %905
        %907 = vrot.lane.b32.xlu0 %v511, 100
        %v908 = vpop.permute.xlu0 %907
        %909 = vrot.lane.b32.xlu0 %v512, 100
        %v910 = vpop.permute.xlu0 %909
        %911 = vrot.lane.b32.xlu0 %v513, 100
        %v912 = vpop.permute.xlu0 %911
        %vm913 = vcmask 818176
        %v914 = vsel %vm913, %v906, %v908
        %v915 = vsel %vm913, %v910, %v912
        %920 = vrot.lane.b32.xlu0 %v510, 40
        %v921 = vpop.permute.xlu0 %920
        %922 = vrot.lane.b32.xlu0 %v512, 40
        %v923 = vpop.permute.xlu0 %922
        %v926 = vsel %vm358, %v908, %v921
        %v927 = vsel %vm358, %v912, %v923
        %928 = vrot.lane.b32.xlu0 %v515, 100
        %v929 = vpop.permute.xlu0 %928
        %930 = vrot.lane.b32.xlu0 %v516, 100
        %v931 = vpop.permute.xlu0 %930
        %932 = vrot.lane.b32.xlu0 %v517, 100
        %v933 = vpop.permute.xlu0 %932
        %934 = vrot.lane.b32.xlu0 %v518, 100
        %v935 = vpop.permute.xlu0 %934
        %v936 = vsel %vm913, %v929, %v931
        %v937 = vsel %vm913, %v933, %v935
        %942 = vrot.lane.b32.xlu0 %v515, 40
        %v943 = vpop.permute.xlu0 %942
        %944 = vrot.lane.b32.xlu0 %v517, 40
        %v945 = vpop.permute.xlu0 %944
        %v948 = vsel %vm358, %v931, %v943
        %v949 = vsel %vm358, %v935, %v945
        %950 = vrot.lane.b32.xlu0 %v510, 99
        %v951 = vpop.permute.xlu0 %950
        %952 = vrot.lane.b32.xlu0 %v511, 99
        %v953 = vpop.permute.xlu0 %952
        %954 = vrot.lane.b32.xlu0 %v512, 99
        %v955 = vpop.permute.xlu0 %954
        %956 = vrot.lane.b32.xlu0 %v513, 99
        %v957 = vpop.permute.xlu0 %956
        %vm958 = vcmask 809984
        %v959 = vsel %vm958, %v951, %v953
        %v960 = vsel %vm958, %v955, %v957
        %965 = vrot.lane.b32.xlu0 %v510, 39
        %v966 = vpop.permute.xlu0 %965
        %967 = vrot.lane.b32.xlu0 %v512, 39
        %v968 = vpop.permute.xlu0 %967
        %vm971 = vcmask 318464
        %v972 = vsel %vm971, %v953, %v966
        %v973 = vsel %vm971, %v957, %v968
        %974 = vrot.lane.b32.xlu0 %v515, 99
        %v975 = vpop.permute.xlu0 %974
        %976 = vrot.lane.b32.xlu0 %v516, 99
        %v977 = vpop.permute.xlu0 %976
        %978 = vrot.lane.b32.xlu0 %v517, 99
        %v979 = vpop.permute.xlu0 %978
        %980 = vrot.lane.b32.xlu0 %v518, 99
        %v981 = vpop.permute.xlu0 %980
        %v982 = vsel %vm958, %v975, %v977
        %v983 = vsel %vm958, %v979, %v981
        %988 = vrot.lane.b32.xlu0 %v515, 39
        %v989 = vpop.permute.xlu0 %988
        %990 = vrot.lane.b32.xlu0 %v517, 39
        %v991 = vpop.permute.xlu0 %990
        %v994 = vsel %vm971, %v977, %v989
        %v995 = vsel %vm971, %v981, %v991
        %996 = vrot.lane.b32.xlu0 %v510, 98
        %v997 = vpop.permute.xlu0 %996
        %998 = vrot.lane.b32.xlu0 %v511, 98
        %v999 = vpop.permute.xlu0 %998
        %1000 = vrot.lane.b32.xlu0 %v512, 98
        %v1001 = vpop.permute.xlu0 %1000
        %1002 = vrot.lane.b32.xlu0 %v513, 98
        %v1003 = vpop.permute.xlu0 %1002
        %vm1004 = vcmask 801792
        %v1005 = vsel %vm1004, %v997, %v999
        %v1006 = vsel %vm1004, %v1001, %v1003
        %1011 = vrot.lane.b32.xlu0 %v510, 38
        %v1012 = vpop.permute.xlu0 %1011
        %1013 = vrot.lane.b32.xlu0 %v512, 38
        %v1014 = vpop.permute.xlu0 %1013
        %vm1017 = vcmask 310272
        %v1018 = vsel %vm1017, %v999, %v1012
        %v1019 = vsel %vm1017, %v1003, %v1014
        %v1020 = vmax.f32 %v510, %v515
        %v1021 = vmax.f32 %v511, %v516
        %v1022 = vmax.f32 %v512, %v517
        %v1023 = vmax.f32 %v513, %v518
        %v1024 = vmax.f32 %v541, %v568
        %v1025 = vmax.f32 %v554, %v580
        %v1026 = vmax.f32 %v542, %v569
        %v1027 = vmax.f32 %v555, %v581
        %v1028 = vmax.f32 %v591, %v520
        %v1029 = vmax.f32 %v604, %v521
        %v1030 = vmax.f32 %v592, %v522
        %v1031 = vmax.f32 %v605, %v523
        %v1032 = vmax.f32 %v525, %v618
        %v1033 = vmax.f32 %v526, %v630
        %v1034 = vmax.f32 %v527, %v619
        %v1035 = vmax.f32 %v528, %v631
        %v1036 = vmax.f32 %v644, %v666
        %v1037 = vmax.f32 %v656, %v678
        %v1038 = vmax.f32 %v645, %v667
        %v1039 = vmax.f32 %v657, %v679
        %v1040 = vmax.f32 %v688, %v711
        %v1041 = vmax.f32 %v701, %v723
        %v1042 = vmax.f32 %v689, %v712
        %v1043 = vmax.f32 %v702, %v724
        %v1044 = vmax.f32 %v734, %v757
        %v1045 = vmax.f32 %v747, %v769
        %v1046 = vmax.f32 %v735, %v758
        %v1047 = vmax.f32 %v748, %v770
        %v1048 = vmax.f32 %v780, %v803
        %v1049 = vmax.f32 %v793, %v815
        %v1050 = vmax.f32 %v781, %v804
        %v1051 = vmax.f32 %v794, %v816
        %v1052 = vmax.f32 %v825, %v847
        %v1053 = vmax.f32 %v837, %v859
        %v1054 = vmax.f32 %v826, %v848
        %v1055 = vmax.f32 %v838, %v860
        %v1056 = vmax.f32 %v869, %v891
        %v1057 = vmax.f32 %v881, %v903
        %v1058 = vmax.f32 %v870, %v892
        %v1059 = vmax.f32 %v882, %v904
        %v1060 = vmax.f32 %v914, %v936
        %v1061 = vmax.f32 %v926, %v948
        %v1062 = vmax.f32 %v915, %v937
        %v1063 = vmax.f32 %v927, %v949
        %v1064 = vmax.f32 %v959, %v982
        %v1065 = vmax.f32 %v972, %v994
        %v1066 = vmax.f32 %v960, %v983
        %v1067 = vmax.f32 %v973, %v995
        %v1068 = vmax.f32 %v1020, %v1024
        %v1069 = vmax.f32 %v1021, %v1025
        %v1070 = vmax.f32 %v1022, %v1026
        %v1071 = vmax.f32 %v1023, %v1027
        %v1072 = vmax.f32 %v1028, %v1032
        %v1073 = vmax.f32 %v1029, %v1033
        %v1074 = vmax.f32 %v1030, %v1034
        %v1075 = vmax.f32 %v1031, %v1035
        %v1076 = vmax.f32 %v1036, %v1040
        %v1077 = vmax.f32 %v1037, %v1041
        %v1078 = vmax.f32 %v1038, %v1042
        %v1079 = vmax.f32 %v1039, %v1043
        %v1080 = vmax.f32 %v1044, %v1048
        %v1081 = vmax.f32 %v1045, %v1049
        %v1082 = vmax.f32 %v1046, %v1050
        %v1083 = vmax.f32 %v1047, %v1051
        %v1084 = vmax.f32 %v1052, %v1056
        %v1085 = vmax.f32 %v1053, %v1057
        %v1086 = vmax.f32 %v1054, %v1058
        %v1087 = vmax.f32 %v1055, %v1059
        %v1088 = vmax.f32 %v1060, %v1064
        %v1089 = vmax.f32 %v1061, %v1065
        %v1090 = vmax.f32 %v1062, %v1066
        %v1091 = vmax.f32 %v1063, %v1067
        %v1092 = vmax.f32 %v1068, %v1072
        %v1093 = vmax.f32 %v1069, %v1073
        %v1094 = vmax.f32 %v1070, %v1074
        %v1095 = vmax.f32 %v1071, %v1075
        %v1096 = vmax.f32 %v1076, %v1080
        %v1097 = vmax.f32 %v1077, %v1081
        %v1098 = vmax.f32 %v1078, %v1082
        %v1099 = vmax.f32 %v1079, %v1083
        %v1100 = vmax.f32 %v1084, %v1088
        %v1101 = vmax.f32 %v1085, %v1089
        %v1102 = vmax.f32 %v1086, %v1090
        %v1103 = vmax.f32 %v1087, %v1091
        %v1104 = vmax.f32 %v1092, %v1096
        %v1105 = vmax.f32 %v1093, %v1097
        %v1106 = vmax.f32 %v1094, %v1098
        %v1107 = vmax.f32 %v1095, %v1099
        %v1108 = vmax.f32 %v1100, %v1005
        %v1109 = vmax.f32 %v1101, %v1018
        %v1110 = vmax.f32 %v1102, %v1006
        %v1111 = vmax.f32 %v1103, %v1019
        %v1112 = vmax.f32 %v1104, %v1108
        %v1113 = vmax.f32 %v1105, %v1109
        %v1114 = vmax.f32 %v1106, %v1110
        %v1115 = vmax.f32 %v1107, %v1111
        %vm1116 = vcmp.gt.f32.partialorder %v1112, 0.0
        %vm1117 = vcmp.gt.f32.partialorder %v1113, 0.0
        %vm1118 = vcmp.gt.f32.partialorder %v1114, 0.0
        %vm1119 = vcmp.gt.f32.partialorder %v1115, 0.0
        %v1120 = vmul.f32 %v1112, 0.01
        %v1121 = vmul.f32 %v1113, 0.01
        %v1122 = vmul.f32 %v1114, 0.01
        %v1123 = vmul.f32 %v1115, 0.01
        %v1124 = vsel %vm1116, %v1112, %v1120
        %v1125 = vsel %vm1117, %v1113, %v1121
        %v1126 = vsel %vm1118, %v1114, %v1122
        %v1127 = vsel %vm1119, %v1115, %v1123
        %1128 = vst [vmem:[%s312] sm:$0xff] %v1124
        %vm1129 = vcmask 556032
        %1130 = vst.msk [vmem:[%s312 + $0x8] sm:$0xff] %vm1129, %v1125
        %1131 = vst [vmem:[%s312 + $0x10] sm:$0xff] %v1126
        %1132 = vst.msk [vmem:[%s312 + $0x18] sm:$0xff] %vm1129, %v1127
        %s1133 = smul.u32 2, %s15
        %p1134 = scmp.lt.s32.totalorder %s1133, 3
        %s1135 = scalar_select %p1134, %s1133, 3
        %s1136 = smul.addr %s1135, 2
        %s1137 = smul.addr %s1136, 8
        %s1138 = scalar_lea.vmem %s2, %s1137
        %s1139 = smul.u32 2, %s15
        %p1140 = scmp.lt.s32.totalorder %s1139, 3
        %s1141 = scalar_select %p1140, %s1139, 3
        %s1142 = smul.addr %s1141, 2
        %s1143 = smul.addr %s1142, 8
        %s1144 = scalar_lea.vmem %s3, %s1143
        // Predicated region
        $region75: #{_lambda_.5} parent=65 // pred_check
          %p1145 = pneg %p85
        $region76: #{_lambda_.5} parent=65 // pred_check_branch
          %1147 = sbr.rel (%p1145) target = $region78
        $region77: #{_lambda_.5} parent=65 // pred_region
          %s1148 = smul.u32 2, %s15
        $region78: #{_lambda_.5} parent=65 // pred_fallthru
          _
        // Predicated region
        $region79: #{_lambda_.5} parent=65 // pred_check
          %p1149 = pneg %p111
        $region80: #{_lambda_.5} parent=65 // pred_check_branch
          %1151 = sbr.rel (%p1149) target = $region82
        $region81: #{_lambda_.5} parent=65 // pred_region
          %s1152 = smul.u32 2, %s15
        $region82: #{_lambda_.5} parent=65 // pred_fallthru
          _
      $region66: #{_lambda_.5} parent=5 // pred_fallthru
        _
      %p1153 = scmp.le.s32.totalorder 2, %s10
      // Predicated region
      $region83: #{_lambda_.5} parent=5 // pred_check
        %p1154 = pneg %p1153
      $region84: #{_lambda_.5} parent=5 // pred_check_branch
        %1156 = sbr.rel (%p1154) target = $region86
      $region85: #{_lambda_.5} parent=5 // pred_region
        %s1157 = ssub.s32 %s10, 2
        // Predicated region
        $region87: #{_lambda_.5} parent=85 // pred_check
          %p1158 = pneg %p91
        $region88: #{_lambda_.5} parent=85 // pred_check_branch
          %1160 = sbr.rel (%p1158) target = $region90
        $region89: #{_lambda_.5} parent=85 // pred_region
          %s1161 = smul.u32 2, %s16
          %p1162 = scmp.lt.s32.totalorder %s1161, 3
          %s1163 = scalar_select %p1162, %s1161, 3
          %s1164 = smul.addr %s1163, 2
          %s1165 = smul.addr %s1164, 8
          %s1166 = scalar_lea.vmem %s2, %s1165
        $region90: #{_lambda_.5} parent=85 // pred_fallthru
          _
        // Predicated region
        $region91: #{_lambda_.5} parent=85 // pred_check
          %p1167 = pneg %p117
        $region92: #{_lambda_.5} parent=85 // pred_check_branch
          %1169 = sbr.rel (%p1167) target = $region94
        $region93: #{_lambda_.5} parent=85 // pred_region
          %s1170 = smul.u32 2, %s16
          %p1171 = scmp.lt.s32.totalorder %s1170, 3
          %s1172 = scalar_select %p1171, %s1170, 3
          %s1173 = smul.addr %s1172, 2
          %s1174 = smul.addr %s1173, 8
          %s1175 = scalar_lea.vmem %s3, %s1174
        $region94: #{_lambda_.5} parent=85 // pred_fallthru
          _
      $region86: #{_lambda_.5} parent=5 // pred_fallthru
        _
    $region6: #{_lambda_.5} parent=1 // loop_footer
      %s14 = sadd.s32 1, %s10
    $region7: #{_lambda_.5} parent=1 // loop_footer_branch
      %9 = sbr.rel target = $region3
    $region8: #{_lambda_.5} parent=1 // loop_exit
      _

// kernel: _lambda_.7
$region0: #{_lambda_.7}
  #allocation0 [shape = 'u32[]', space=smem, size = 0x4, offset = 0x4, fixed_abs, tag = 'smem constant byte address 0x4 - core index']
  #allocation1 [shape = 'u32[72,128]{1,0:T(1,128)}', space=vmem, size = 0x9000, scoped, tag = 'internal scratch']
  %s0 = inlined_call_operand.vmem [shape: bf16[64,484], index: 0, kind: input, shape index: {}]
  %s1 = inlined_call_operand.vmem [shape: bf16[484,32], index: 1, kind: input, shape index: {}]
  %s2 = inlined_call_operand.vmem [shape: f32[64,1], index: 2, kind: input, shape index: {}]
  %s3 = inlined_call_operand.vmem [shape: f32[64,1], index: 3, kind: input, shape index: {}]
  %s4 = inlined_call_operand.vmem [shape: f32[64,32], index: 4, kind: output, shape index: {}]
  %s5 = sld [smem:[#allocation0]]
  $region26: #{_lambda_.7} parent=0
    _
  %s7 = ssub.s32 1, %s5
  %s8 = scalar_select 0, %s7, %s5
  // Predicated region
  $region2: #{_lambda_.7} parent=0 // pred_check
    _
  $region3: #{_lambda_.7} parent=0 // pred_check_branch
    %10 = sbr.rel (0) target = $region5
  $region4: #{_lambda_.7} parent=0 // pred_region
    _
  $region5: #{_lambda_.7} parent=0 // pred_fallthru
    _
  // Predicated region
  $region6: #{_lambda_.7} parent=0 // pred_check
    _
  $region7: #{_lambda_.7} parent=0 // pred_check_branch
    %12 = sbr.rel (0) target = $region9
  $region8: #{_lambda_.7} parent=0 // pred_region
    _
  $region9: #{_lambda_.7} parent=0 // pred_fallthru
    _
  // Predicated region
  $region10: #{_lambda_.7} parent=0 // pred_check
    _
  $region11: #{_lambda_.7} parent=0 // pred_check_branch
    %14 = sbr.rel (0) target = $region13
  $region12: #{_lambda_.7} parent=0 // pred_region
    _
  $region13: #{_lambda_.7} parent=0 // pred_fallthru
    _
  // Predicated region
  $region14: #{_lambda_.7} parent=0 // pred_check
    _
  $region15: #{_lambda_.7} parent=0 // pred_check_branch
    %16 = sbr.rel (0) target = $region17
  $region16: #{_lambda_.7} parent=0 // pred_region
    _
  $region17: #{_lambda_.7} parent=0 // pred_fallthru
    _
  %v18 = vld [vmem:[%s0] sm:$0xff]
  %v19 = vld [vmem:[%s0 + $0x8] sm:$0xff]
  %v20 = vld [vmem:[%s0 + $0x10] sm:$0xff]
  %v21 = vld [vmem:[%s0 + $0x18] sm:$0xff]
  %v22 = vld [vmem:[%s0 + $0x20] sm:$0xff]
  %v23 = vld [vmem:[%s0 + $0x28] sm:$0xff]
  %v24 = vld [vmem:[%s0 + $0x30] sm:$0xff]
  %v25 = vld [vmem:[%s0 + $0x38] sm:$0xff]
  %v26 = vld [vmem:[%s0 + $0x40] sm:$0xff]
  %v27 = vld [vmem:[%s0 + $0x48] sm:$0xff]
  %v28 = vld [vmem:[%s0 + $0x50] sm:$0xff]
  %v29 = vld [vmem:[%s0 + $0x58] sm:$0xff]
  %v30 = vld [vmem:[%s0 + $0x60] sm:$0xff]
  %v31 = vld [vmem:[%s0 + $0x68] sm:$0xff]
  %v32 = vld [vmem:[%s0 + $0x70] sm:$0xff]
  %v33 = vld [vmem:[%s0 + $0x78] sm:$0xff]
  %v34 = vld [vmem:[%s1] sm:$0xf]
  %v35 = vld [vmem:[%s1 + $0x4] sm:$0xf]
  %v36 = vld [vmem:[%s1 + $0x8] sm:$0xf]
  %v37 = vld [vmem:[%s1 + $0xc] sm:$0xf]
  %v38 = vld [vmem:[%s1 + $0x10] sm:$0xf]
  %v39 = vld [vmem:[%s1 + $0x14] sm:$0xf]
  %v40 = vld [vmem:[%s1 + $0x18] sm:$0xf]
  %v41 = vld [vmem:[%s1 + $0x1c] sm:$0xf]
  %v42 = vld [vmem:[%s1 + $0x20] sm:$0xf]
  %v43 = vld [vmem:[%s1 + $0x24] sm:$0xf]
  %v44 = vld [vmem:[%s1 + $0x28] sm:$0xf]
  %v45 = vld [vmem:[%s1 + $0x2c] sm:$0xf]
  %v46 = vld [vmem:[%s1 + $0x30] sm:$0xf]
  %v47 = vld [vmem:[%s1 + $0x34] sm:$0xf]
  %v48 = vld [vmem:[%s1 + $0x38] sm:$0xf]
  %v49 = vld [vmem:[%s1 + $0x3c] sm:$0xf]
  %v50 = vld [vmem:[%s1 + $0x40] sm:$0xf]
  %v51 = vld [vmem:[%s1 + $0x44] sm:$0xf]
  %v52 = vld [vmem:[%s1 + $0x48] sm:$0xf]
  %v53 = vld [vmem:[%s1 + $0x4c] sm:$0xf]
  %v54 = vld [vmem:[%s1 + $0x50] sm:$0xf]
  %v55 = vld [vmem:[%s1 + $0x54] sm:$0xf]
  %v56 = vld [vmem:[%s1 + $0x58] sm:$0xf]
  %v57 = vld [vmem:[%s1 + $0x5c] sm:$0xf]
  %v58 = vld [vmem:[%s1 + $0x60] sm:$0xf]
  %v59 = vld [vmem:[%s1 + $0x64] sm:$0xf]
  %v60 = vld [vmem:[%s1 + $0x68] sm:$0xf]
  %v61 = vld [vmem:[%s1 + $0x6c] sm:$0xf]
  %v62 = vld [vmem:[%s1 + $0x70] sm:$0xf]
  %v63 = vld [vmem:[%s1 + $0x74] sm:$0xf]
  %v64 = vld [vmem:[%s1 + $0x78] sm:$0xf]
  %v65 = vld [vmem:[%s1 + $0x7c] sm:$0xf]
  %v66 = vld [vmem:[%s1 + $0x80] sm:$0xf]
  %v67 = vld [vmem:[%s1 + $0x84] sm:$0xf]
  %v68 = vld [vmem:[%s1 + $0x88] sm:$0xf]
  %v69 = vld [vmem:[%s1 + $0x8c] sm:$0xf]
  %v70 = vld [vmem:[%s1 + $0x90] sm:$0xf]
  %v71 = vld [vmem:[%s1 + $0x94] sm:$0xf]
  %v72 = vld [vmem:[%s1 + $0x98] sm:$0xf]
  %v73 = vld [vmem:[%s1 + $0x9c] sm:$0xf]
  %v74 = vld [vmem:[%s1 + $0xa0] sm:$0xf]
  %v75 = vld [vmem:[%s1 + $0xa4] sm:$0xf]
  %v76 = vld [vmem:[%s1 + $0xa8] sm:$0xf]
  %v77 = vld [vmem:[%s1 + $0xac] sm:$0xf]
  %v78 = vld [vmem:[%s1 + $0xb0] sm:$0xf]
  %v79 = vld [vmem:[%s1 + $0xb4] sm:$0xf]
  %v80 = vld [vmem:[%s1 + $0xb8] sm:$0xf]
  %v81 = vld [vmem:[%s1 + $0xbc] sm:$0xf]
  %v82 = vld [vmem:[%s1 + $0xc0] sm:$0xf]
  %v83 = vld [vmem:[%s1 + $0xc4] sm:$0xf]
  %v84 = vld [vmem:[%s1 + $0xc8] sm:$0xf]
  %v85 = vld [vmem:[%s1 + $0xcc] sm:$0xf]
  %v86 = vld [vmem:[%s1 + $0xd0] sm:$0xf]
  %v87 = vld [vmem:[%s1 + $0xd4] sm:$0xf]
  %v88 = vld [vmem:[%s1 + $0xd8] sm:$0xf]
  %v89 = vld [vmem:[%s1 + $0xdc] sm:$0xf]
  %v90 = vld [vmem:[%s1 + $0xe0] sm:$0xf]
  %v91 = vld [vmem:[%s1 + $0xe4] sm:$0xf]
  %v92 = vld [vmem:[%s1 + $0xe8] sm:$0xf]
  %v93 = vld [vmem:[%s1 + $0xec] sm:$0xf]
  %v94 = vld [vmem:[%s1 + $0xf0] sm:$0x3]
  %v111 = vunpack.c.l.b16 %v18
  %v112 = vunpack.c.h.b16 %v18
  %v113 = vunpack.c.l.b16 %v19
  %v114 = vunpack.c.h.b16 %v19
  %v115 = vunpack.c.l.b16 %v20
  %v116 = vunpack.c.h.b16 %v20
  %v117 = vunpack.c.l.b16 %v21
  %v118 = vunpack.c.h.b16 %v21
  %v119 = vunpack.c.l.b16 %v22
  %v120 = vunpack.c.h.b16 %v22
  %v121 = vunpack.c.l.b16 %v23
  %v122 = vunpack.c.h.b16 %v23
  %v123 = vunpack.c.l.b16 %v24
  %v124 = vunpack.c.h.b16 %v24
  %v125 = vunpack.c.l.b16 %v25
  %v126 = vunpack.c.h.b16 %v25
  %v127 = vunpack.c.l.b16 %v26
  %v128 = vunpack.c.h.b16 %v26
  %v129 = vunpack.c.l.b16 %v27
  %v130 = vunpack.c.h.b16 %v27
  %v131 = vunpack.c.l.b16 %v28
  %v132 = vunpack.c.h.b16 %v28
  %v133 = vunpack.c.l.b16 %v29
  %v134 = vunpack.c.h.b16 %v29
  %v135 = vunpack.c.l.b16 %v30
  %v136 = vunpack.c.h.b16 %v30
  %v137 = vunpack.c.l.b16 %v31
  %v138 = vunpack.c.h.b16 %v31
  %v139 = vunpack.c.l.b16 %v32
  %v140 = vunpack.c.h.b16 %v32
  %v141 = vunpack.c.l.b16 %v33
  %v142 = vunpack.c.h.b16 %v33
  %v143 = vpack.c.b16 %v115, %v111
  %v144 = vpack.c.b16 %v116, %v112
  %v145 = vpack.c.b16 %v117, %v113
  %v146 = vpack.c.b16 %v118, %v114
  %v147 = vpack.c.b16 %v123, %v119
  %v148 = vpack.c.b16 %v124, %v120
  %v149 = vpack.c.b16 %v125, %v121
  %v150 = vpack.c.b16 %v126, %v122
  %v151 = vpack.c.b16 %v131, %v127
  %v152 = vpack.c.b16 %v132, %v128
  %v153 = vpack.c.b16 %v133, %v129
  %v154 = vpack.c.b16 %v134, %v130
  %v155 = vpack.c.b16 %v139, %v135
  %v156 = vpack.c.b16 %v140, %v136
  %v157 = vpack.c.b16 %v141, %v137
  %v158 = vpack.c.b16 %v142, %v138
  %v232 = vunpack.c.l.b16 %v34
  %v233 = vunpack.c.l.b16 %v35
  %v234 = vunpack.c.l.b16 %v36
  %v235 = vunpack.c.l.b16 %v37
  %v236 = vunpack.c.l.b16 %v38
  %v237 = vunpack.c.l.b16 %v39
  %v238 = vunpack.c.l.b16 %v40
  %v239 = vunpack.c.l.b16 %v41
  %v240 = vunpack.c.l.b16 %v42
  %v241 = vunpack.c.l.b16 %v43
  %v242 = vunpack.c.l.b16 %v44
  %v243 = vunpack.c.l.b16 %v45
  %v244 = vunpack.c.l.b16 %v46
  %v245 = vunpack.c.l.b16 %v47
  %v246 = vunpack.c.l.b16 %v48
  %v247 = vunpack.c.l.b16 %v49
  %v248 = vunpack.c.l.b16 %v50
  %v249 = vunpack.c.l.b16 %v51
  %v250 = vunpack.c.l.b16 %v52
  %v251 = vunpack.c.l.b16 %v53
  %v252 = vunpack.c.l.b16 %v54
  %v253 = vunpack.c.l.b16 %v55
  %v254 = vunpack.c.l.b16 %v56
  %v255 = vunpack.c.l.b16 %v57
  %v256 = vunpack.c.l.b16 %v58
  %v257 = vunpack.c.l.b16 %v59
  %v258 = vunpack.c.l.b16 %v60
  %v259 = vunpack.c.l.b16 %v61
  %v260 = vunpack.c.l.b16 %v62
  %v261 = vunpack.c.l.b16 %v63
  %v262 = vunpack.c.l.b16 %v64
  %v263 = vunpack.c.l.b16 %v65
  %v264 = vunpack.c.l.b16 %v66
  %v265 = vunpack.c.l.b16 %v67
  %v266 = vunpack.c.l.b16 %v68
  %v267 = vunpack.c.l.b16 %v69
  %v268 = vunpack.c.l.b16 %v70
  %v269 = vunpack.c.l.b16 %v71
  %v270 = vunpack.c.l.b16 %v72
  %v271 = vunpack.c.l.b16 %v73
  %v272 = vunpack.c.l.b16 %v74
  %v273 = vunpack.c.l.b16 %v75
  %v274 = vunpack.c.l.b16 %v76
  %v275 = vunpack.c.l.b16 %v77
  %v276 = vunpack.c.l.b16 %v78
  %v277 = vunpack.c.l.b16 %v79
  %v278 = vunpack.c.l.b16 %v80
  %v279 = vunpack.c.l.b16 %v81
  %v280 = vunpack.c.l.b16 %v82
  %v281 = vunpack.c.l.b16 %v83
  %v282 = vunpack.c.l.b16 %v84
  %v283 = vunpack.c.l.b16 %v85
  %v284 = vunpack.c.l.b16 %v86
  %v285 = vunpack.c.l.b16 %v87
  %v286 = vunpack.c.l.b16 %v88
  %v287 = vunpack.c.l.b16 %v89
  %v288 = vunpack.c.l.b16 %v90
  %v289 = vunpack.c.l.b16 %v91
  %v290 = vunpack.c.l.b16 %v92
  %v291 = vunpack.c.l.b16 %v93
  %v292 = vunpack.c.l.b16 %v94
  %v293 = vpack.c.b16 %v233, %v232
  %v294 = vpack.c.b16 %v235, %v234
  %v295 = vpack.c.b16 %v237, %v236
  %v296 = vpack.c.b16 %v239, %v238
  %v297 = vpack.c.b16 %v241, %v240
  %v298 = vpack.c.b16 %v243, %v242
  %v299 = vpack.c.b16 %v245, %v244
  %v300 = vpack.c.b16 %v247, %v246
  %v301 = vpack.c.b16 %v249, %v248
  %v302 = vpack.c.b16 %v251, %v250
  %v303 = vpack.c.b16 %v253, %v252
  %v304 = vpack.c.b16 %v255, %v254
  %v305 = vpack.c.b16 %v257, %v256
  %v306 = vpack.c.b16 %v259, %v258
  %v307 = vpack.c.b16 %v261, %v260
  %v308 = vpack.c.b16 %v263, %v262
  %v309 = vpack.c.b16 %v265, %v264
  %v310 = vpack.c.b16 %v267, %v266
  %v311 = vpack.c.b16 %v269, %v268
  %v312 = vpack.c.b16 %v271, %v270
  %v313 = vpack.c.b16 %v273, %v272
  %v314 = vpack.c.b16 %v275, %v274
  %v315 = vpack.c.b16 %v277, %v276
  %v316 = vpack.c.b16 %v279, %v278
  %v317 = vpack.c.b16 %v281, %v280
  %v318 = vpack.c.b16 %v283, %v282
  %v319 = vpack.c.b16 %v285, %v284
  %v320 = vpack.c.b16 %v287, %v286
  %v321 = vpack.c.b16 %v289, %v288
  %v322 = vpack.c.b16 %v291, %v290
  %v323 = vpack.c.b16 %v292, %v292
  %vm354 = vcmask 818176
  %v356 = vsel %vm354, %v146, 0
  %v359 = vsel %vm354, %v150, 0
  %v362 = vsel %vm354, %v154, 0
  %v365 = vsel %vm354, %v158, 0
  %vm367 = vcmask 1041408
  %v369 = vsel %vm367, %v323, 0
  %371 = vmatpush.bf16.msra.mxu0 %v300
  %372 = vmatpush.bf16.msra.mxu0 %v299
  %373 = vmatpush.bf16.msra.mxu0 %v298
  %374 = vmatpush.bf16.msra.mxu0 %v297
  %375 = vmatpush.bf16.msra.mxu0 %v296
  %376 = vmatpush.bf16.msra.mxu0 %v295
  %377 = vmatpush.bf16.msra.mxu0 %v294
  %378 = vmatpush.bf16.msra.mxu0 %v293
  %379 = vmatmul.bf16.gmra.mxu0 %v143
  %v380 = vpop.f32.mrf.mxu0
  %v381 = vadd.f32 0.0, %v380
  %v382 = vpop.f32.mrf.mxu0
  %v383 = vadd.f32 0.0, %v382
  %384 = vmatmul.bf16.gmra.mxu0 %v147
  %v385 = vpop.f32.mrf.mxu0
  %v386 = vadd.f32 0.0, %v385
  %v387 = vpop.f32.mrf.mxu0
  %v388 = vadd.f32 0.0, %v387
  %389 = vmatmul.bf16.gmra.mxu0 %v151
  %v390 = vpop.f32.mrf.mxu0
  %v391 = vadd.f32 0.0, %v390
  %v392 = vpop.f32.mrf.mxu0
  %v393 = vadd.f32 0.0, %v392
  %394 = vmatmul.bf16.gmra.mxu0 %v155
  %v395 = vpop.f32.mrf.mxu0
  %v396 = vadd.f32 0.0, %v395
  %v397 = vpop.f32.mrf.mxu0
  %v398 = vadd.f32 0.0, %v397
  %399 = vdwg.mxu0
  %400 = vmatpush.bf16.msra.mxu0 %v308
  %401 = vmatpush.bf16.msra.mxu0 %v307
  %402 = vmatpush.bf16.msra.mxu0 %v306
  %403 = vmatpush.bf16.msra.mxu0 %v305
  %404 = vmatpush.bf16.msra.mxu0 %v304
  %405 = vmatpush.bf16.msra.mxu0 %v303
  %406 = vmatpush.bf16.msra.mxu0 %v302
  %407 = vmatpush.bf16.msra.mxu0 %v301
  %408 = vmatmul.bf16.gmra.mxu0 %v144
  %v409 = vpop.f32.mrf.mxu0
  %v410 = vadd.f32 %v381, %v409
  %v411 = vpop.f32.mrf.mxu0
  %v412 = vadd.f32 %v383, %v411
  %413 = vmatmul.bf16.gmra.mxu0 %v148
  %v414 = vpop.f32.mrf.mxu0
  %v415 = vadd.f32 %v386, %v414
  %v416 = vpop.f32.mrf.mxu0
  %v417 = vadd.f32 %v388, %v416
  %418 = vmatmul.bf16.gmra.mxu0 %v152
  %v419 = vpop.f32.mrf.mxu0
  %v420 = vadd.f32 %v391, %v419
  %v421 = vpop.f32.mrf.mxu0
  %v422 = vadd.f32 %v393, %v421
  %423 = vmatmul.bf16.gmra.mxu0 %v156
  %v424 = vpop.f32.mrf.mxu0
  %v425 = vadd.f32 %v396, %v424
  %v426 = vpop.f32.mrf.mxu0
  %v427 = vadd.f32 %v398, %v426
  %428 = vdwg.mxu0
  %429 = vmatpush.bf16.msra.mxu0 %v316
  %430 = vmatpush.bf16.msra.mxu0 %v315
  %431 = vmatpush.bf16.msra.mxu0 %v314
  %432 = vmatpush.bf16.msra.mxu0 %v313
  %433 = vmatpush.bf16.msra.mxu0 %v312
  %434 = vmatpush.bf16.msra.mxu0 %v311
  %435 = vmatpush.bf16.msra.mxu0 %v310
  %436 = vmatpush.bf16.msra.mxu0 %v309
  %437 = vmatmul.bf16.gmra.mxu0 %v145
  %v438 = vpop.f32.mrf.mxu0
  %v439 = vadd.f32 %v410, %v438
  %v440 = vpop.f32.mrf.mxu0
  %v441 = vadd.f32 %v412, %v440
  %442 = vmatmul.bf16.gmra.mxu0 %v149
  %v443 = vpop.f32.mrf.mxu0
  %v444 = vadd.f32 %v415, %v443
  %v445 = vpop.f32.mrf.mxu0
  %v446 = vadd.f32 %v417, %v445
  %447 = vmatmul.bf16.gmra.mxu0 %v153
  %v448 = vpop.f32.mrf.mxu0
  %v449 = vadd.f32 %v420, %v448
  %v450 = vpop.f32.mrf.mxu0
  %v451 = vadd.f32 %v422, %v450
  %452 = vmatmul.bf16.gmra.mxu0 %v157
  %v453 = vpop.f32.mrf.mxu0
  %v454 = vadd.f32 %v425, %v453
  %v455 = vpop.f32.mrf.mxu0
  %v456 = vadd.f32 %v427, %v455
  %457 = vdwg.mxu0
  %458 = vmatpush.bf16.msra.mxu0 0
  %459 = vmatpush.bf16.msra.mxu0 %v369
  %460 = vmatpush.bf16.msra.mxu0 %v322
  %461 = vmatpush.bf16.msra.mxu0 %v321
  %462 = vmatpush.bf16.msra.mxu0 %v320
  %463 = vmatpush.bf16.msra.mxu0 %v319
  %464 = vmatpush.bf16.msra.mxu0 %v318
  %465 = vmatpush.bf16.msra.mxu0 %v317
  %466 = vmatmul.bf16.gmra.mxu0 %v356
  %v467 = vpop.f32.mrf.mxu0
  %v468 = vadd.f32 %v439, %v467
  %v469 = vpop.f32.mrf.mxu0
  %v470 = vadd.f32 %v441, %v469
  %471 = vmatmul.bf16.gmra.mxu0 %v359
  %v472 = vpop.f32.mrf.mxu0
  %v473 = vadd.f32 %v444, %v472
  %v474 = vpop.f32.mrf.mxu0
  %v475 = vadd.f32 %v446, %v474
  %476 = vmatmul.bf16.gmra.mxu0 %v362
  %v477 = vpop.f32.mrf.mxu0
  %v478 = vadd.f32 %v449, %v477
  %v479 = vpop.f32.mrf.mxu0
  %v480 = vadd.f32 %v451, %v479
  %481 = vmatmul.bf16.gmra.mxu0 %v365
  %v482 = vpop.f32.mrf.mxu0
  %v483 = vadd.f32 %v454, %v482
  %v484 = vpop.f32.mrf.mxu0
  %v485 = vadd.f32 %v456, %v484
  %486 = vdwg.mxu0
  %v487 = vld [vmem:[%s2] sm:$0xff]
  %v488 = vld [vmem:[%s2 + $0x8] sm:$0xff]
  %v489 = vld [vmem:[%s2 + $0x10] sm:$0xff]
  %v490 = vld [vmem:[%s2 + $0x18] sm:$0xff]
  %v491 = vld [vmem:[%s2 + $0x20] sm:$0xff]
  %v492 = vld [vmem:[%s2 + $0x28] sm:$0xff]
  %v493 = vld [vmem:[%s2 + $0x30] sm:$0xff]
  %v494 = vld [vmem:[%s2 + $0x38] sm:$0xff]
  %496 = vset.pattern.permute.xlu0 0
  %497 = vperm.xlu0 %496, %v487
  %v498 = vpop.permute.xlu0 %497
  %501 = vset.pattern.permute.xlu0 0
  %502 = vperm.xlu0 %501, %v488
  %v503 = vpop.permute.xlu0 %502
  %506 = vset.pattern.permute.xlu0 0
  %507 = vperm.xlu0 %506, %v489
  %v508 = vpop.permute.xlu0 %507
  %511 = vset.pattern.permute.xlu0 0
  %512 = vperm.xlu0 %511, %v490
  %v513 = vpop.permute.xlu0 %512
  %516 = vset.pattern.permute.xlu0 0
  %517 = vperm.xlu0 %516, %v491
  %v518 = vpop.permute.xlu0 %517
  %521 = vset.pattern.permute.xlu0 0
  %522 = vperm.xlu0 %521, %v492
  %v523 = vpop.permute.xlu0 %522
  %526 = vset.pattern.permute.xlu0 0
  %527 = vperm.xlu0 %526, %v493
  %v528 = vpop.permute.xlu0 %527
  %531 = vset.pattern.permute.xlu0 0
  %532 = vperm.xlu0 %531, %v494
  %v533 = vpop.permute.xlu0 %532
  %v535 = vmul.f32 %v468, %v498
  %v536 = vmul.f32 %v470, %v503
  %v537 = vmul.f32 %v473, %v508
  %v538 = vmul.f32 %v475, %v513
  %v539 = vmul.f32 %v478, %v518
  %v540 = vmul.f32 %v480, %v523
  %v541 = vmul.f32 %v483, %v528
  %v542 = vmul.f32 %v485, %v533
  %v543 = vld [vmem:[%s3] sm:$0xff]
  %v544 = vld [vmem:[%s3 + $0x8] sm:$0xff]
  %v545 = vld [vmem:[%s3 + $0x10] sm:$0xff]
  %v546 = vld [vmem:[%s3 + $0x18] sm:$0xff]
  %v547 = vld [vmem:[%s3 + $0x20] sm:$0xff]
  %v548 = vld [vmem:[%s3 + $0x28] sm:$0xff]
  %v549 = vld [vmem:[%s3 + $0x30] sm:$0xff]
  %v550 = vld [vmem:[%s3 + $0x38] sm:$0xff]
  %552 = vset.pattern.permute.xlu0 0
  %553 = vperm.xlu0 %552, %v543
  %v554 = vpop.permute.xlu0 %553
  %557 = vset.pattern.permute.xlu0 0
  %558 = vperm.xlu0 %557, %v544
  %v559 = vpop.permute.xlu0 %558
  %562 = vset.pattern.permute.xlu0 0
  %563 = vperm.xlu0 %562, %v545
  %v564 = vpop.permute.xlu0 %563
  %567 = vset.pattern.permute.xlu0 0
  %568 = vperm.xlu0 %567, %v546
  %v569 = vpop.permute.xlu0 %568
  %572 = vset.pattern.permute.xlu0 0
  %573 = vperm.xlu0 %572, %v547
  %v574 = vpop.permute.xlu0 %573
  %577 = vset.pattern.permute.xlu0 0
  %578 = vperm.xlu0 %577, %v548
  %v579 = vpop.permute.xlu0 %578
  %582 = vset.pattern.permute.xlu0 0
  %583 = vperm.xlu0 %582, %v549
  %v584 = vpop.permute.xlu0 %583
  %587 = vset.pattern.permute.xlu0 0
  %588 = vperm.xlu0 %587, %v550
  %v589 = vpop.permute.xlu0 %588
  %v591 = vadd.f32 %v535, %v554
  %v592 = vadd.f32 %v536, %v559
  %v593 = vadd.f32 %v537, %v564
  %v594 = vadd.f32 %v538, %v569
  %v595 = vadd.f32 %v539, %v574
  %v596 = vadd.f32 %v540, %v579
  %v597 = vadd.f32 %v541, %v584
  %v598 = vadd.f32 %v542, %v589
  %vm599 = vcmp.gt.f32.partialorder %v591, 0.0
  %vm600 = vcmp.gt.f32.partialorder %v592, 0.0
  %vm601 = vcmp.gt.f32.partialorder %v593, 0.0
  %vm602 = vcmp.gt.f32.partialorder %v594, 0.0
  %vm603 = vcmp.gt.f32.partialorder %v595, 0.0
  %vm604 = vcmp.gt.f32.partialorder %v596, 0.0
  %vm605 = vcmp.gt.f32.partialorder %v597, 0.0
  %vm606 = vcmp.gt.f32.partialorder %v598, 0.0
  %v607 = vmul.f32 %v591, 0.01
  %v608 = vmul.f32 %v592, 0.01
  %v609 = vmul.f32 %v593, 0.01
  %v610 = vmul.f32 %v594, 0.01
  %v611 = vmul.f32 %v595, 0.01
  %v612 = vmul.f32 %v596, 0.01
  %v613 = vmul.f32 %v597, 0.01
  %v614 = vmul.f32 %v598, 0.01
  %v615 = vsel %vm599, %v591, %v607
  %v616 = vsel %vm600, %v592, %v608
  %v617 = vsel %vm601, %v593, %v609
  %v618 = vsel %vm602, %v594, %v610
  %v619 = vsel %vm603, %v595, %v611
  %v620 = vsel %vm604, %v596, %v612
  %v621 = vsel %vm605, %v597, %v613
  %v622 = vsel %vm606, %v598, %v614
  %vm623 = vcmask 261120
  %624 = vst.msk [vmem:[%s4] sm:$0xff] %vm623, %v615
  %625 = vst.msk [vmem:[%s4 + $0x8] sm:$0xff] %vm623, %v616
  %626 = vst.msk [vmem:[%s4 + $0x10] sm:$0xff] %vm623, %v617
  %627 = vst.msk [vmem:[%s4 + $0x18] sm:$0xff] %vm623, %v618
  %628 = vst.msk [vmem:[%s4 + $0x20] sm:$0xff] %vm623, %v619
  %629 = vst.msk [vmem:[%s4 + $0x28] sm:$0xff] %vm623, %v620
  %630 = vst.msk [vmem:[%s4 + $0x30] sm:$0xff] %vm623, %v621
  %631 = vst.msk [vmem:[%s4 + $0x38] sm:$0xff] %vm623, %v622
  // Predicated region
  $region18: #{_lambda_.7} parent=0 // pred_check
    _
  $region19: #{_lambda_.7} parent=0 // pred_check_branch
    %633 = sbr.rel (0) target = $region21
  $region20: #{_lambda_.7} parent=0 // pred_region
    _
  $region21: #{_lambda_.7} parent=0 // pred_fallthru
    _
  // Predicated region
  $region22: #{_lambda_.7} parent=0 // pred_check
    _
  $region23: #{_lambda_.7} parent=0 // pred_check_branch
    %635 = sbr.rel (0) target = $region25
  $region24: #{_lambda_.7} parent=0 // pred_region
    _
  $region25: #{_lambda_.7} parent=0 // pred_fallthru
    _

</llo_original>
